<compile_context>
chip_gen: v7x
topology: tpu7x:2x2x1
jax: 0.10.0
libtpu: 0.0.40
codegen_flags: <defaults>
</compile_context>

<pallas_src>
import jax
import jax.numpy as jnp
from jax.experimental import pallas as pl
from jax.experimental.pallas import tpu as pltpu

FEA_DIM = 512   # fea_dim in the PyTorch module
N_OUT   = 6     # out_linear final width
CONV_C  = 128   # stand-in backbone stem channels (lane-dense: 128 lanes)
KS      = 3     # 3x3 conv stem


def init_params(key, in_chans=3):
    """f32 master parameters (original, unfused module structure)."""
    ks = jax.random.split(key, 8)
    kc = KS * KS * in_chans

    def lin(k, fan_in, shape):
        return jax.random.normal(k, shape, jnp.float32) / jnp.sqrt(float(fan_in))

    return {
        "wconv": lin(ks[0], kc, (kc, CONV_C)),
        "bconv": lin(ks[1], kc, (1, CONV_C)),
        "wfc":   lin(ks[2], CONV_C, (CONV_C, FEA_DIM)),
        "bfc":   lin(ks[3], CONV_C, (1, FEA_DIM)),
        "w1":    lin(ks[4], FEA_DIM, (FEA_DIM, FEA_DIM)),
        "b1":    lin(ks[5], FEA_DIM, (1, FEA_DIM)),
        "w2":    lin(ks[6], FEA_DIM, (FEA_DIM, N_OUT)),
        "b2":    lin(ks[7], FEA_DIM, (1, N_OUT)),
    }


def prepare_kernel_params(p):
    """One-time inference weight prep: cast 2-D weights to bf16 and fold
    wfc @ w1 (classifier Linear -> first out_linear Linear; only Dropout in
    between, identity at inference).  Product and fused bias are computed in
    f32 and rounded to bf16 exactly once (no double rounding)."""
    wfused = jnp.dot(p["wfc"], p["w1"]).astype(jnp.bfloat16)        # (CONV_C, FEA_DIM)
    bfused = jnp.dot(p["bfc"], p["w1"]) + p["b1"]                   # (1, FEA_DIM) f32
    return {
        "wconv":  p["wconv"].astype(jnp.bfloat16),
        "bconv":  p["bconv"],
        "wfused": wfused,
        "bfused": bfused,
        "w2":     p["w2"].astype(jnp.bfloat16),
        "b2":     p["b2"],
    }


def _im2col(x):
    """(b,k,d,h,w) NCHW-per-image -> bf16 (N*H*W, 9*d) patches (3x3, pad=1)."""
    b, k, d, h, w = x.shape
    N = b * k
    xi = x.reshape(N, d, h, w).transpose(0, 2, 3, 1).astype(jnp.bfloat16)
    xpad = jnp.pad(xi, ((0, 0), (1, 1), (1, 1), (0, 0)))
    cols = [xpad[:, kh:kh + h, kw:kw + w, :]
            for kh in range(KS) for kw in range(KS)]
    patches = jnp.concatenate(cols, axis=-1)                        # (N, H, W, 9*Cin)
    return patches.reshape(N * h * w, KS * KS * d)


def axial_model_25d_forward(x, kp):
    """x: (b, k, d, h, w) float32; kp: prepare_kernel_params() output."""
    b, k, d, h, w = x.shape
    N, P, KC = b * k, h * w, KS * KS * d

    # Grid over whole images: 2 steps -> both TensorCores on v7x ("parallel"),
    # patch-DMA/compute pipelining on 1-TC chips.  Each step owns whole
    # images, so GAP needs no cross-step accumulator.
    G = 2 if N % 2 == 0 else 1
    Nt = N // G

    patches = _im2col(x)                                            # (N*P, KC) bf16

    def kernel(patch_ref, wconv_ref, bconv_ref, wfuse_ref, bfuse_ref,
               w2_ref, b2_ref, out_ref):
        # conv stem: ONE matmul over this step's Nt*P pixel rows.
        conv = jnp.dot(patch_ref[...], wconv_ref[...],
                       preferred_element_type=jnp.float32)          # (Nt*P, Cc) f32
        conv = jnp.maximum(conv + bconv_ref[...], 0.0)               # ReLU, f32

        # per-image GAP: free leading-dim split + f32 sublane (XLU) mean.
        gap = jnp.mean(conv.reshape(Nt, P, CONV_C), axis=1)          # (Nt, Cc) f32

        # classifier Linear + first out_linear Linear, folded into one matmul.
        # Dropout(0.1) between them is identity at inference.
        h_pre = jnp.dot(gap.astype(wfuse_ref.dtype), wfuse_ref[...],
                        preferred_element_type=jnp.float32) + bfuse_ref[...]
        h_act = jnp.where(h_pre > 0, h_pre, 0.01 * h_pre)            # LeakyReLU(0.01)

        out_ref[...] = jnp.dot(h_act.astype(w2_ref.dtype), w2_ref[...],
                               preferred_element_type=jnp.float32) + b2_ref[...]

    out = pl.pallas_call(
        kernel,
        out_shape=jax.ShapeDtypeStruct((G, Nt, N_OUT), jnp.float32),
        grid_spec=pltpu.PrefetchScalarGridSpec(
            num_scalar_prefetch=0,
            grid=(G,),
            in_specs=[
                pl.BlockSpec((Nt * P, KC), lambda i: (i, 0)),          # patches (per step)
                pl.BlockSpec((KC, CONV_C), lambda i: (0, 0)),          # wconv   (constant)
                pl.BlockSpec((1, CONV_C), lambda i: (0, 0)),           # bconv
                pl.BlockSpec((CONV_C, FEA_DIM), lambda i: (0, 0)),     # wfused
                pl.BlockSpec((1, FEA_DIM), lambda i: (0, 0)),          # bfused
                pl.BlockSpec((FEA_DIM, N_OUT), lambda i: (0, 0)),      # w2
                pl.BlockSpec((1, N_OUT), lambda i: (0, 0)),            # b2
            ],
            # (G, Nt, 6) output; leading grid dim squeezed so each step does
            # one consolidated (Nt, 6) writeback of whole images.
            out_specs=pl.BlockSpec((None, Nt, N_OUT), lambda i: (i, 0, 0)),
        ),
        compiler_params=pltpu.CompilerParams(
            dimension_semantics=("parallel",)),
    )(patches, kp["wconv"], kp["bconv"], kp["wfused"], kp["bfused"],
      kp["w2"], kp["b2"])

    # glue: left/right split exactly as in the PyTorch forward.
    x6 = out.reshape(b, k, N_OUT)
    left_x = x6[:, :k // 2, :3]
    right_x = x6[:, k // 2:, 3:]
    x_cat = jnp.concatenate([left_x, right_x], axis=1)               # (b, k, 3)
    return x_cat.reshape(b, -1)                                      # (b, 3*k)


def _reference_forward(x, p):
    """Pure-JAX reference: same stand-in backbone, original UNFUSED head
    structure (Linear -> Dropout(id) -> Linear -> LeakyReLU -> Linear),
    bf16 weights / f32 accumulation mirroring the kernel."""
    b, k, d, h, w = x.shape
    N, P = b * k, h * w
    patches = _im2col(x)
    conv = jnp.maximum(
        jnp.dot(patches, p["wconv"].astype(jnp.bfloat16),
                preferred_element_type=jnp.float32) + p["bconv"], 0.0)
    gap = jnp.mean(conv.reshape(N, P, CONV_C), axis=1)
    feat = jnp.dot(gap.astype(jnp.bfloat16), p["wfc"].astype(jnp.bfloat16),
                   preferred_element_type=jnp.float32) + p["bfc"]
    # Dropout(0.1): identity at inference.
    hh = jnp.dot(feat.astype(jnp.bfloat16), p["w1"].astype(jnp.bfloat16),
                 preferred_element_type=jnp.float32) + p["b1"]
    hh = jnp.where(hh > 0, hh, 0.01 * hh)
    o = jnp.dot(hh.astype(jnp.bfloat16), p["w2"].astype(jnp.bfloat16),
                preferred_element_type=jnp.float32) + p["b2"]
    o = o.reshape(b, k, N_OUT)
    left_x, right_x = o[:, :k // 2, :3], o[:, k // 2:, 3:]
    return jnp.concatenate([left_x, right_x], axis=1).reshape(b, -1)


if __name__ == "__main__":
    key = jax.random.PRNGKey(0)
    k_param, k_in = jax.random.split(key)

    b, k, d, h, w = 2, 10, 3, 16, 16          # k = 5 * n_conds, in_chans = 3
    x = jax.random.normal(k_in, (b, k, d, h, w), jnp.float32)
    params = init_params(k_param, in_chans=d)
    kparams = prepare_kernel_params(params)    # one-time inference weight prep

    fwd = jax.jit(axial_model_25d_forward)
    y = jax.block_until_ready(fwd(x, kparams))

    assert y.shape == (b, 3 * k), y.shape
    assert bool(jnp.all(jnp.isfinite(y)))

    y_ref = _reference_forward(x, params)
    err = float(jnp.max(jnp.abs(y - y_ref)))
    assert jnp.allclose(y, y_ref, rtol=2e-2, atol=2e-2), err
    print("KERNEL_OK")
</pallas_src>

<mosaic_0001>
module attributes {stable_mosaic.version = 11 : i64} {
  func.func @kernel(%arg0: i32, %arg1: memref<2560x27xbf16, #tpu.memory_space<vmem>>, %arg2: memref<27x128xbf16, #tpu.memory_space<vmem>>, %arg3: memref<1x128xf32, #tpu.memory_space<vmem>>, %arg4: memref<128x512xbf16, #tpu.memory_space<vmem>>, %arg5: memref<1x512xf32, #tpu.memory_space<vmem>>, %arg6: memref<512x6xbf16, #tpu.memory_space<vmem>>, %arg7: memref<1x6xf32, #tpu.memory_space<vmem>>, %arg8: memref<1x10x6xf32, #tpu.memory_space<vmem>>) attributes {dimension_semantics = [#tpu.dimension_semantics<parallel>], iteration_bounds = array<i64: 2>, scalar_prefetch = 0 : i64, scratch_operands = 0 : i64, tpu.core_type = #tpu.core_type<tc>, window_params = [{transform_indices = @transform_0, window_bounds = array<i64: 2560, 27>}, {pipeline_mode = #tpu.pipeline_mode<synchronous>, transform_indices = @transform_1, window_bounds = array<i64: 27, 128>}, {pipeline_mode = #tpu.pipeline_mode<synchronous>, transform_indices = @transform_2, window_bounds = array<i64: 1, 128>}, {pipeline_mode = #tpu.pipeline_mode<synchronous>, transform_indices = @transform_3, window_bounds = array<i64: 128, 512>}, {pipeline_mode = #tpu.pipeline_mode<synchronous>, transform_indices = @transform_4, window_bounds = array<i64: 1, 512>}, {pipeline_mode = #tpu.pipeline_mode<synchronous>, transform_indices = @transform_5, window_bounds = array<i64: 512, 6>}, {pipeline_mode = #tpu.pipeline_mode<synchronous>, transform_indices = @transform_6, window_bounds = array<i64: 1, 6>}, {transform_indices = @transform_7, window_bounds = array<i64: 1, 10, 6>}]} {
    %c0 = arith.constant 0 : index
    %c0_0 = arith.constant 0 : index
    %0 = vector.load %arg1[%c0, %c0_0] : memref<2560x27xbf16, #tpu.memory_space<vmem>>, vector<2560x27xbf16>
    %c0_1 = arith.constant 0 : index
    %c0_2 = arith.constant 0 : index
    %1 = vector.load %arg2[%c0_1, %c0_2] : memref<27x128xbf16, #tpu.memory_space<vmem>>, vector<27x128xbf16>
    %cst = arith.constant dense<0.000000e+00> : vector<2560x128xf32>
    %2 = tpu.matmul %0, %1, %cst {dimension_numbers = #tpu.dot_dimension_numbers<[1], [0], [0], [1], [0, 0, 1, 1], [], []>} : vector<2560x27xbf16>, vector<27x128xbf16>, vector<2560x128xf32> -> vector<2560x128xf32>
    %c0_3 = arith.constant 0 : index
    %c0_4 = arith.constant 0 : index
    %3 = vector.load %arg3[%c0_3, %c0_4] : memref<1x128xf32, #tpu.memory_space<vmem>>, vector<1x128xf32>
    %4 = vector.broadcast %3 : vector<1x128xf32> to vector<2560x128xf32>
    %5 = arith.addf %2, %4 : vector<2560x128xf32>
    %cst_5 = arith.constant 0.000000e+00 : f32
    %6 = vector.broadcast %cst_5 : f32 to vector<2560x128xf32>
    %7 = arith.maximumf %5, %6 : vector<2560x128xf32>
    %8 = vector.shape_cast %7 : vector<2560x128xf32> to vector<10x256x128xf32>
    %cst_6 = arith.constant dense<0.000000e+00> : vector<10x128xf32>
    %9 = vector.multi_reduction <add>, %8, %cst_6 [1] : vector<10x256x128xf32> to vector<10x128xf32>
    %cst_7 = arith.constant 2.560000e+02 : f32
    %10 = vector.broadcast %cst_7 : f32 to vector<10x128xf32>
    %11 = arith.divf %9, %10 : vector<10x128xf32>
    %12 = arith.truncf %11 : vector<10x128xf32> to vector<10x128xbf16>
    %c0_8 = arith.constant 0 : index
    %c0_9 = arith.constant 0 : index
    %13 = vector.load %arg4[%c0_8, %c0_9] : memref<128x512xbf16, #tpu.memory_space<vmem>>, vector<128x512xbf16>
    %cst_10 = arith.constant dense<0.000000e+00> : vector<10x512xf32>
    %14 = tpu.matmul %12, %13, %cst_10 {dimension_numbers = #tpu.dot_dimension_numbers<[1], [0], [0], [1], [0, 0, 1, 1], [], []>} : vector<10x128xbf16>, vector<128x512xbf16>, vector<10x512xf32> -> vector<10x512xf32>
    %c0_11 = arith.constant 0 : index
    %c0_12 = arith.constant 0 : index
    %15 = vector.load %arg5[%c0_11, %c0_12] : memref<1x512xf32, #tpu.memory_space<vmem>>, vector<1x512xf32>
    %16 = vector.broadcast %15 : vector<1x512xf32> to vector<10x512xf32>
    %17 = arith.addf %14, %16 : vector<10x512xf32>
    %cst_13 = arith.constant 0.000000e+00 : f32
    %18 = vector.broadcast %cst_13 : f32 to vector<10x512xf32>
    %19 = arith.cmpf ogt, %17, %18 : vector<10x512xf32>
    %cst_14 = arith.constant 0.00999999977 : f32
    %20 = vector.broadcast %cst_14 : f32 to vector<10x512xf32>
    %21 = arith.mulf %20, %17 : vector<10x512xf32>
    %22 = arith.select %19, %17, %21 : vector<10x512xi1>, vector<10x512xf32>
    %23 = arith.truncf %22 : vector<10x512xf32> to vector<10x512xbf16>
    %c0_15 = arith.constant 0 : index
    %c0_16 = arith.constant 0 : index
    %24 = vector.load %arg6[%c0_15, %c0_16] : memref<512x6xbf16, #tpu.memory_space<vmem>>, vector<512x6xbf16>
    %cst_17 = arith.constant dense<0.000000e+00> : vector<10x6xf32>
    %25 = tpu.matmul %23, %24, %cst_17 {dimension_numbers = #tpu.dot_dimension_numbers<[1], [0], [0], [1], [0, 0, 1, 1], [], []>} : vector<10x512xbf16>, vector<512x6xbf16>, vector<10x6xf32> -> vector<10x6xf32>
    %c0_18 = arith.constant 0 : index
    %c0_19 = arith.constant 0 : index
    %26 = vector.load %arg7[%c0_18, %c0_19] : memref<1x6xf32, #tpu.memory_space<vmem>>, vector<1x6xf32>
    %27 = vector.broadcast %26 : vector<1x6xf32> to vector<10x6xf32>
    %28 = arith.addf %25, %27 : vector<10x6xf32>
    %c0_20 = arith.constant 0 : index
    %c0_21 = arith.constant 0 : index
    %c0_22 = arith.constant 0 : index
    %29 = vector.load %arg8[%c0_20, %c0_21, %c0_22] : memref<1x10x6xf32, #tpu.memory_space<vmem>>, vector<1x10x6xf32>
    %30 = vector.shape_cast %29 : vector<1x10x6xf32> to vector<10x6xf32>
    %31 = vector.shape_cast %28 : vector<10x6xf32> to vector<1x10x6xf32>
    tpu.vector_store %arg8[%c0_20, %c0_21, %c0_22], %31 {strides = array<i32>} : memref<1x10x6xf32, #tpu.memory_space<vmem>>, vector<1x10x6xf32>,
    return
  }
  func.func @transform_0(%arg0: i32) -> (i32, i32) {
    %c0_i32 = arith.constant 0 : i32
    %c0_i32_0 = arith.constant 0 : i32
    return %arg0, %c0_i32 : i32, i32
  }
  func.func @transform_1(%arg0: i32) -> (i32, i32) {
    %c0_i32 = arith.constant 0 : i32
    %c0_i32_0 = arith.constant 0 : i32
    %c0_i32_1 = arith.constant 0 : i32
    return %c0_i32, %c0_i32_0 : i32, i32
  }
  func.func @transform_2(%arg0: i32) -> (i32, i32) {
    %c0_i32 = arith.constant 0 : i32
    %c0_i32_0 = arith.constant 0 : i32
    %c0_i32_1 = arith.constant 0 : i32
    return %c0_i32, %c0_i32_0 : i32, i32
  }
  func.func @transform_3(%arg0: i32) -> (i32, i32) {
    %c0_i32 = arith.constant 0 : i32
    %c0_i32_0 = arith.constant 0 : i32
    %c0_i32_1 = arith.constant 0 : i32
    return %c0_i32, %c0_i32_0 : i32, i32
  }
  func.func @transform_4(%arg0: i32) -> (i32, i32) {
    %c0_i32 = arith.constant 0 : i32
    %c0_i32_0 = arith.constant 0 : i32
    %c0_i32_1 = arith.constant 0 : i32
    return %c0_i32, %c0_i32_0 : i32, i32
  }
  func.func @transform_5(%arg0: i32) -> (i32, i32) {
    %c0_i32 = arith.constant 0 : i32
    %c0_i32_0 = arith.constant 0 : i32
    %c0_i32_1 = arith.constant 0 : i32
    return %c0_i32, %c0_i32_0 : i32, i32
  }
  func.func @transform_6(%arg0: i32) -> (i32, i32) {
    %c0_i32 = arith.constant 0 : i32
    %c0_i32_0 = arith.constant 0 : i32
    %c0_i32_1 = arith.constant 0 : i32
    return %c0_i32, %c0_i32_0 : i32, i32
  }
  func.func @transform_7(%arg0: i32) -> (i32, i32, i32) {
    %c0_i32 = arith.constant 0 : i32
    %c0_i32_0 = arith.constant 0 : i32
    %c0_i32_1 = arith.constant 0 : i32
    return %arg0, %c0_i32, %c0_i32_0 : i32, i32, i32
  }
}

</mosaic_0001>

<llo_original>
// kernel: axial_model_25d_forward.1
$region0: #{axial_model_25d_forward.1}
  #allocation0 [shape = 'u32[]', space=smem, size = 0x4, offset = 0x4, fixed_abs, tag = 'smem constant byte address 0x4 - core index']
  #allocation1 [shape = 'u32[144,128]{1,0:T(1,128)}', space=vmem, size = 0x12000, scoped, tag = 'internal scratch']
  %s0 = inlined_call_operand.vmem [shape: bf16[5120,27], index: 0, kind: input, shape index: {}]
  %s1 = inlined_call_operand.vmem [shape: bf16[27,128], index: 1, kind: input, shape index: {}]
  %s2 = inlined_call_operand.vmem [shape: f32[1,128], index: 2, kind: input, shape index: {}]
  %s3 = inlined_call_operand.vmem [shape: bf16[128,512], index: 3, kind: input, shape index: {}]
  %s4 = inlined_call_operand.vmem [shape: f32[1,512], index: 4, kind: input, shape index: {}]
  %s5 = inlined_call_operand.vmem [shape: bf16[512,6], index: 5, kind: input, shape index: {}]
  %s6 = inlined_call_operand.vmem [shape: f32[1,6], index: 6, kind: input, shape index: {}]
  %s7 = inlined_call_operand.vmem [shape: f32[2,10,6], index: 7, kind: output, shape index: {}]
  %s8 = sld [smem:[#allocation0]]
  $region61: #{axial_model_25d_forward.1} parent=0
    _
  %s10 = ssub.s32 1, %s8
  %s11 = scalar_select 0, %s10, %s8
  loop: start=0, step=1, limit=4
  $region2: #{axial_model_25d_forward.1} parent=0 // loop_pre_header
    _
  $region3: #{axial_model_25d_forward.1} parent=0 // loop_header
    %s13 = sphi 0, %s17
    %p14 = scmp.ge.s32.totalorder %s13, 4
    %s23 = sphi 0, %s25
    %s26 = sphi 0, %s23
    %s27 = sphi 0, %s26
    %s43 = sphi 0, %s27
    %s47 = sphi 0, %s47
    %s49 = sphi 0, %s47
    %s50 = sphi 0, %s49
    %s64 = sphi 0, %s50
    %s68 = sphi 0, %s68
    %s70 = sphi 0, %s68
    %s71 = sphi 0, %s70
    %s85 = sphi 0, %s71
    %s89 = sphi 0, %s89
    %s91 = sphi 0, %s89
    %s92 = sphi 0, %s91
    %s106 = sphi 0, %s92
    %s110 = sphi 0, %s110
    %s112 = sphi 0, %s110
    %s113 = sphi 0, %s112
    %s127 = sphi 0, %s113
    %s131 = sphi 0, %s131
    %s133 = sphi 0, %s131
    %s134 = sphi 0, %s133
    %s148 = sphi 0, %s134
    %s152 = sphi 0, %s152
    %s154 = sphi 0, %s152
    %s155 = sphi 0, %s154
    %s169 = sphi 0, %s155
    %s175 = sphi 0, %s177
    %s178 = sphi 0, %s175
    %s179 = sphi 0, %s178
    %s195 = sphi 0, %s179
  $region4: #{axial_model_25d_forward.1} parent=0 // loop_header_branch
    %16 = sbr.rel (%p14) target = $region8
  $region5: #{axial_model_25d_forward.1} parent=0 // loop_body
    %s18 = ssub.s32 %s13, 1
    %s19 = ssub.s32 %s13, 2
    %s20 = sadd.s32 %s13, 1
    %s21 = ssub.s32 %s13, %s20
    %p22 = scmp.eq.s32.totalorder %s21, 0
    %s24 = sadd.s32 %s23, 1
    %s25 = scalar_select %p22, %s23, %s24
    %p28 = pneg %p22
    %p29 = scmp.eq.s32.totalorder %s13, 1
    %p30 = por %p28, %p29
    %p31 = scmp.ne.s32.totalorder %s23, %s26
    %p32 = scmp.eq.s32.totalorder %s13, 0
    %p33 = por %p31, %p32
    %p34 = scmp.ne.s32.totalorder %s23, %s26
    %p35 = scmp.eq.s32.totalorder %s18, 1
    %p36 = por %p34, %p35
    %p37 = scmp.ne.s32.totalorder %s26, %s27
    %p38 = scmp.eq.s32.totalorder %s18, 0
    %p39 = por %p37, %p38
    %p40 = scmp.ne.s32.totalorder %s26, %s27
    %p41 = scmp.eq.s32.totalorder %s19, 1
    %p42 = por %p40, %p41
    %p44 = scmp.ne.s32.totalorder %s27, %s43
    %p45 = scmp.eq.s32.totalorder %s19, 0
    %p46 = por %p44, %p45
    %s48 = sadd.s32 %s47, 1
    %p51 = scmp.eq.s32.totalorder %s13, 1
    %p52 = scmp.ne.s32.totalorder %s47, %s49
    %p53 = scmp.eq.s32.totalorder %s13, 0
    %p54 = por %p52, %p53
    %p55 = scmp.ne.s32.totalorder %s47, %s49
    %p56 = scmp.eq.s32.totalorder %s18, 1
    %p57 = por %p55, %p56
    %p58 = scmp.ne.s32.totalorder %s49, %s50
    %p59 = scmp.eq.s32.totalorder %s18, 0
    %p60 = por %p58, %p59
    %p61 = scmp.ne.s32.totalorder %s49, %s50
    %p62 = scmp.eq.s32.totalorder %s19, 1
    %p63 = por %p61, %p62
    %p65 = scmp.ne.s32.totalorder %s50, %s64
    %p66 = scmp.eq.s32.totalorder %s19, 0
    %p67 = por %p65, %p66
    %s69 = sadd.s32 %s68, 1
    %p72 = scmp.eq.s32.totalorder %s13, 1
    %p73 = scmp.ne.s32.totalorder %s68, %s70
    %p74 = scmp.eq.s32.totalorder %s13, 0
    %p75 = por %p73, %p74
    %p76 = scmp.ne.s32.totalorder %s68, %s70
    %p77 = scmp.eq.s32.totalorder %s18, 1
    %p78 = por %p76, %p77
    %p79 = scmp.ne.s32.totalorder %s70, %s71
    %p80 = scmp.eq.s32.totalorder %s18, 0
    %p81 = por %p79, %p80
    %p82 = scmp.ne.s32.totalorder %s70, %s71
    %p83 = scmp.eq.s32.totalorder %s19, 1
    %p84 = por %p82, %p83
    %p86 = scmp.ne.s32.totalorder %s71, %s85
    %p87 = scmp.eq.s32.totalorder %s19, 0
    %p88 = por %p86, %p87
    %s90 = sadd.s32 %s89, 1
    %p93 = scmp.eq.s32.totalorder %s13, 1
    %p94 = scmp.ne.s32.totalorder %s89, %s91
    %p95 = scmp.eq.s32.totalorder %s13, 0
    %p96 = por %p94, %p95
    %p97 = scmp.ne.s32.totalorder %s89, %s91
    %p98 = scmp.eq.s32.totalorder %s18, 1
    %p99 = por %p97, %p98
    %p100 = scmp.ne.s32.totalorder %s91, %s92
    %p101 = scmp.eq.s32.totalorder %s18, 0
    %p102 = por %p100, %p101
    %p103 = scmp.ne.s32.totalorder %s91, %s92
    %p104 = scmp.eq.s32.totalorder %s19, 1
    %p105 = por %p103, %p104
    %p107 = scmp.ne.s32.totalorder %s92, %s106
    %p108 = scmp.eq.s32.totalorder %s19, 0
    %p109 = por %p107, %p108
    %s111 = sadd.s32 %s110, 1
    %p114 = scmp.eq.s32.totalorder %s13, 1
    %p115 = scmp.ne.s32.totalorder %s110, %s112
    %p116 = scmp.eq.s32.totalorder %s13, 0
    %p117 = por %p115, %p116
    %p118 = scmp.ne.s32.totalorder %s110, %s112
    %p119 = scmp.eq.s32.totalorder %s18, 1
    %p120 = por %p118, %p119
    %p121 = scmp.ne.s32.totalorder %s112, %s113
    %p122 = scmp.eq.s32.totalorder %s18, 0
    %p123 = por %p121, %p122
    %p124 = scmp.ne.s32.totalorder %s112, %s113
    %p125 = scmp.eq.s32.totalorder %s19, 1
    %p126 = por %p124, %p125
    %p128 = scmp.ne.s32.totalorder %s113, %s127
    %p129 = scmp.eq.s32.totalorder %s19, 0
    %p130 = por %p128, %p129
    %s132 = sadd.s32 %s131, 1
    %p135 = scmp.eq.s32.totalorder %s13, 1
    %p136 = scmp.ne.s32.totalorder %s131, %s133
    %p137 = scmp.eq.s32.totalorder %s13, 0
    %p138 = por %p136, %p137
    %p139 = scmp.ne.s32.totalorder %s131, %s133
    %p140 = scmp.eq.s32.totalorder %s18, 1
    %p141 = por %p139, %p140
    %p142 = scmp.ne.s32.totalorder %s133, %s134
    %p143 = scmp.eq.s32.totalorder %s18, 0
    %p144 = por %p142, %p143
    %p145 = scmp.ne.s32.totalorder %s133, %s134
    %p146 = scmp.eq.s32.totalorder %s19, 1
    %p147 = por %p145, %p146
    %p149 = scmp.ne.s32.totalorder %s134, %s148
    %p150 = scmp.eq.s32.totalorder %s19, 0
    %p151 = por %p149, %p150
    %s153 = sadd.s32 %s152, 1
    %p156 = scmp.eq.s32.totalorder %s13, 1
    %p157 = scmp.ne.s32.totalorder %s152, %s154
    %p158 = scmp.eq.s32.totalorder %s13, 0
    %p159 = por %p157, %p158
    %p160 = scmp.ne.s32.totalorder %s152, %s154
    %p161 = scmp.eq.s32.totalorder %s18, 1
    %p162 = por %p160, %p161
    %p163 = scmp.ne.s32.totalorder %s154, %s155
    %p164 = scmp.eq.s32.totalorder %s18, 0
    %p165 = por %p163, %p164
    %p166 = scmp.ne.s32.totalorder %s154, %s155
    %p167 = scmp.eq.s32.totalorder %s19, 1
    %p168 = por %p166, %p167
    %p170 = scmp.ne.s32.totalorder %s155, %s169
    %p171 = scmp.eq.s32.totalorder %s19, 0
    %p172 = por %p170, %p171
    %s173 = ssub.s32 %s13, %s20
    %p174 = scmp.eq.s32.totalorder %s173, 0
    %s176 = sadd.s32 %s175, 1
    %s177 = scalar_select %p174, %s175, %s176
    %p180 = pneg %p174
    %p181 = scmp.eq.s32.totalorder %s13, 1
    %p182 = por %p180, %p181
    %p183 = scmp.ne.s32.totalorder %s175, %s178
    %p184 = scmp.eq.s32.totalorder %s13, 0
    %p185 = por %p183, %p184
    %p186 = scmp.ne.s32.totalorder %s175, %s178
    %p187 = scmp.eq.s32.totalorder %s18, 1
    %p188 = por %p186, %p187
    %p189 = scmp.ne.s32.totalorder %s178, %s179
    %p190 = scmp.eq.s32.totalorder %s18, 0
    %p191 = por %p189, %p190
    %p192 = scmp.ne.s32.totalorder %s178, %s179
    %p193 = scmp.eq.s32.totalorder %s19, 1
    %p194 = por %p192, %p193
    %p196 = scmp.ne.s32.totalorder %s179, %s195
    %p197 = scmp.eq.s32.totalorder %s19, 0
    %p198 = por %p196, %p197
    %p199 = scmp.le.s32.totalorder 1, %s13
    %p200 = scmp.lt.s32.totalorder %s13, 3
    %p201 = pnand %p199, %p200
    %p202 = pneg %p201
    // Predicated region
    $region9: #{axial_model_25d_forward.1} parent=5 // pred_check
      _
    $region10: #{axial_model_25d_forward.1} parent=5 // pred_check_branch
      %204 = sbr.rel (%p201) target = $region12
    $region11: #{axial_model_25d_forward.1} parent=5 // pred_region
      %s205 = ssub.s32 %s13, 1
      // Predicated region
      $region13: #{axial_model_25d_forward.1} parent=11 // pred_check
        %p206 = pneg %p60
      $region14: #{axial_model_25d_forward.1} parent=11 // pred_check_branch
        %208 = sbr.rel (%p206) target = $region16
      $region15: #{axial_model_25d_forward.1} parent=11 // pred_region
        _
      $region16: #{axial_model_25d_forward.1} parent=11 // pred_fallthru
        _
      // Predicated region
      $region17: #{axial_model_25d_forward.1} parent=11 // pred_check
        %p209 = pneg %p81
      $region18: #{axial_model_25d_forward.1} parent=11 // pred_check_branch
        %211 = sbr.rel (%p209) target = $region20
      $region19: #{axial_model_25d_forward.1} parent=11 // pred_region
        _
      $region20: #{axial_model_25d_forward.1} parent=11 // pred_fallthru
        _
      // Predicated region
      $region21: #{axial_model_25d_forward.1} parent=11 // pred_check
        %p212 = pneg %p102
      $region22: #{axial_model_25d_forward.1} parent=11 // pred_check_branch
        %214 = sbr.rel (%p212) target = $region24
      $region23: #{axial_model_25d_forward.1} parent=11 // pred_region
        _
      $region24: #{axial_model_25d_forward.1} parent=11 // pred_fallthru
        _
      // Predicated region
      $region25: #{axial_model_25d_forward.1} parent=11 // pred_check
        %p215 = pneg %p123
      $region26: #{axial_model_25d_forward.1} parent=11 // pred_check_branch
        %217 = sbr.rel (%p215) target = $region28
      $region27: #{axial_model_25d_forward.1} parent=11 // pred_region
        _
      $region28: #{axial_model_25d_forward.1} parent=11 // pred_fallthru
        _
      // Predicated region
      $region29: #{axial_model_25d_forward.1} parent=11 // pred_check
        %p218 = pneg %p144
      $region30: #{axial_model_25d_forward.1} parent=11 // pred_check_branch
        %220 = sbr.rel (%p218) target = $region32
      $region31: #{axial_model_25d_forward.1} parent=11 // pred_region
        _
      $region32: #{axial_model_25d_forward.1} parent=11 // pred_fallthru
        _
      // Predicated region
      $region33: #{axial_model_25d_forward.1} parent=11 // pred_check
        %p221 = pneg %p165
      $region34: #{axial_model_25d_forward.1} parent=11 // pred_check_branch
        %223 = sbr.rel (%p221) target = $region36
      $region35: #{axial_model_25d_forward.1} parent=11 // pred_region
        _
      $region36: #{axial_model_25d_forward.1} parent=11 // pred_fallthru
        _
    $region12: #{axial_model_25d_forward.1} parent=5 // pred_fallthru
      _
    %p224 = scmp.lt.s32.totalorder %s13, 2
    // Predicated region
    $region37: #{axial_model_25d_forward.1} parent=5 // pred_check
      %p225 = pneg %p224
    $region38: #{axial_model_25d_forward.1} parent=5 // pred_check_branch
      %227 = sbr.rel (%p225) target = $region40
    $region39: #{axial_model_25d_forward.1} parent=5 // pred_region
      // Predicated region
      $region41: #{axial_model_25d_forward.1} parent=39 // pred_check
        %p228 = pneg %p33
      $region42: #{axial_model_25d_forward.1} parent=39 // pred_check_branch
        %230 = sbr.rel (%p228) target = $region44
      $region43: #{axial_model_25d_forward.1} parent=39 // pred_region
        %s231 = smul.u32 320, %s13
        %p232 = scmp.lt.s32.totalorder %s231, 639
        %s233 = scalar_select %p232, %s231, 639
        %s234 = smul.addr %s233, 4
        %s235 = scalar_lea.vmem %s0, %s234
        %s236 = smul.u32 320, %s13
      $region44: #{axial_model_25d_forward.1} parent=39 // pred_fallthru
        _
    $region40: #{axial_model_25d_forward.1} parent=5 // pred_fallthru
      _
    %p237 = scmp.le.s32.totalorder 1, %s13
    %p238 = scmp.lt.s32.totalorder %s13, 3
    %p239 = pnand %p237, %p238
    %p240 = pneg %p239
    // Predicated region
    $region45: #{axial_model_25d_forward.1} parent=5 // pred_check
      _
    $region46: #{axial_model_25d_forward.1} parent=5 // pred_check_branch
      %242 = sbr.rel (%p239) target = $region48
    $region47: #{axial_model_25d_forward.1} parent=5 // pred_region
      %s243 = ssub.s32 %s13, 1
      %s244 = smul.u32 320, %s18
      %p245 = scmp.lt.s32.totalorder %s244, 639
      %s246 = scalar_select %p245, %s244, 639
      %s247 = smul.addr %s246, 4
      %s248 = scalar_lea.vmem %s0, %s247
      %p249 = pneg %p39
      %p250 = pneg %p36
      %p251 = pneg %p60
      %p252 = pneg %p57
      %p253 = pneg %p81
      %p254 = pneg %p78
      %p255 = pneg %p102
      %p256 = pneg %p99
      %p257 = pneg %p123
      %p258 = pneg %p120
      %p259 = pneg %p144
      %p260 = pneg %p141
      %p261 = pneg %p165
      %p262 = pneg %p162
      %p263 = pneg %p191
      %p264 = pneg %p188
      %p265 = scmp.lt.s32.totalorder %s18, 1
      %s266 = scalar_select %p265, %s18, 1
      %s267 = smul.addr %s266, 2
      %s268 = smul.addr %s267, 8
      %s269 = scalar_lea.vmem %s7, %s268
      %s270 = smul.u32 320, %s18
      %p271 = scmp.lt.s32.totalorder %s270, 639
      %s272 = scalar_select %p271, %s270, 639
      %s273 = smul.addr %s272, 4
      %s274 = scalar_lea.vmem %s0, %s273
      %s275 = smul.u32 320, %s18
      %p276 = scmp.lt.s32.totalorder %s18, 1
      %s277 = scalar_select %p276, %s18, 1
      %s278 = smul.addr %s277, 2
      %s279 = smul.addr %s278, 8
      %s280 = scalar_lea.vmem %s7, %s279
      %v282 = vld [vmem:[%s274] sm:$0xf]
      %v283 = vld [vmem:[%s274 + $0x4] sm:$0xf]
      %v284 = vld [vmem:[%s274 + $0x8] sm:$0xf]
      %v285 = vld [vmem:[%s274 + $0xc] sm:$0xf]
      %v286 = vld [vmem:[%s274 + $0x10] sm:$0xf]
      %v287 = vld [vmem:[%s274 + $0x14] sm:$0xf]
      %v288 = vld [vmem:[%s274 + $0x18] sm:$0xf]
      %v289 = vld [vmem:[%s274 + $0x1c] sm:$0xf]
      %v290 = vld [vmem:[%s274 + $0x20] sm:$0xf]
      %v291 = vld [vmem:[%s274 + $0x24] sm:$0xf]
      %v292 = vld [vmem:[%s274 + $0x28] sm:$0xf]
      %v293 = vld [vmem:[%s274 + $0x2c] sm:$0xf]
      %v294 = vld [vmem:[%s274 + $0x30] sm:$0xf]
      %v295 = vld [vmem:[%s274 + $0x34] sm:$0xf]
      %v296 = vld [vmem:[%s274 + $0x38] sm:$0xf]
      %v297 = vld [vmem:[%s274 + $0x3c] sm:$0xf]
      %v298 = vld [vmem:[%s274 + $0x40] sm:$0xf]
      %v299 = vld [vmem:[%s274 + $0x44] sm:$0xf]
      %v300 = vld [vmem:[%s274 + $0x48] sm:$0xf]
      %v301 = vld [vmem:[%s274 + $0x4c] sm:$0xf]
      %v302 = vld [vmem:[%s274 + $0x50] sm:$0xf]
      %v303 = vld [vmem:[%s274 + $0x54] sm:$0xf]
      %v304 = vld [vmem:[%s274 + $0x58] sm:$0xf]
      %v305 = vld [vmem:[%s274 + $0x5c] sm:$0xf]
      %v306 = vld [vmem:[%s274 + $0x60] sm:$0xf]
      %v307 = vld [vmem:[%s274 + $0x64] sm:$0xf]
      %v308 = vld [vmem:[%s274 + $0x68] sm:$0xf]
      %v309 = vld [vmem:[%s274 + $0x6c] sm:$0xf]
      %v310 = vld [vmem:[%s274 + $0x70] sm:$0xf]
      %v311 = vld [vmem:[%s274 + $0x74] sm:$0xf]
      %v312 = vld [vmem:[%s274 + $0x78] sm:$0xf]
      %v313 = vld [vmem:[%s274 + $0x7c] sm:$0xf]
      %v314 = vld [vmem:[%s274 + $0x80] sm:$0xf]
      %v315 = vld [vmem:[%s274 + $0x84] sm:$0xf]
      %v316 = vld [vmem:[%s274 + $0x88] sm:$0xf]
      %v317 = vld [vmem:[%s274 + $0x8c] sm:$0xf]
      %v318 = vld [vmem:[%s274 + $0x90] sm:$0xf]
      %v319 = vld [vmem:[%s274 + $0x94] sm:$0xf]
      %v320 = vld [vmem:[%s274 + $0x98] sm:$0xf]
      %v321 = vld [vmem:[%s274 + $0x9c] sm:$0xf]
      %v322 = vld [vmem:[%s274 + $0xa0] sm:$0xf]
      %v323 = vld [vmem:[%s274 + $0xa4] sm:$0xf]
      %v324 = vld [vmem:[%s274 + $0xa8] sm:$0xf]
      %v325 = vld [vmem:[%s274 + $0xac] sm:$0xf]
      %v326 = vld [vmem:[%s274 + $0xb0] sm:$0xf]
      %v327 = vld [vmem:[%s274 + $0xb4] sm:$0xf]
      %v328 = vld [vmem:[%s274 + $0xb8] sm:$0xf]
      %v329 = vld [vmem:[%s274 + $0xbc] sm:$0xf]
      %v330 = vld [vmem:[%s274 + $0xc0] sm:$0xf]
      %v331 = vld [vmem:[%s274 + $0xc4] sm:$0xf]
      %v332 = vld [vmem:[%s274 + $0xc8] sm:$0xf]
      %v333 = vld [vmem:[%s274 + $0xcc] sm:$0xf]
      %v334 = vld [vmem:[%s274 + $0xd0] sm:$0xf]
      %v335 = vld [vmem:[%s274 + $0xd4] sm:$0xf]
      %v336 = vld [vmem:[%s274 + $0xd8] sm:$0xf]
      %v337 = vld [vmem:[%s274 + $0xdc] sm:$0xf]
      %v338 = vld [vmem:[%s274 + $0xe0] sm:$0xf]
      %v339 = vld [vmem:[%s274 + $0xe4] sm:$0xf]
      %v340 = vld [vmem:[%s274 + $0xe8] sm:$0xf]
      %v341 = vld [vmem:[%s274 + $0xec] sm:$0xf]
      %v342 = vld [vmem:[%s274 + $0xf0] sm:$0xf]
      %v343 = vld [vmem:[%s274 + $0xf4] sm:$0xf]
      %v344 = vld [vmem:[%s274 + $0xf8] sm:$0xf]
      %v345 = vld [vmem:[%s274 + $0xfc] sm:$0xf]
      %v346 = vld [vmem:[%s274 + $0x100] sm:$0xf]
      %v347 = vld [vmem:[%s274 + $0x104] sm:$0xf]
      %v348 = vld [vmem:[%s274 + $0x108] sm:$0xf]
      %v349 = vld [vmem:[%s274 + $0x10c] sm:$0xf]
      %v350 = vld [vmem:[%s274 + $0x110] sm:$0xf]
      %v351 = vld [vmem:[%s274 + $0x114] sm:$0xf]
      %v352 = vld [vmem:[%s274 + $0x118] sm:$0xf]
      %v353 = vld [vmem:[%s274 + $0x11c] sm:$0xf]
      %v354 = vld [vmem:[%s274 + $0x120] sm:$0xf]
      %v355 = vld [vmem:[%s274 + $0x124] sm:$0xf]
      %v356 = vld [vmem:[%s274 + $0x128] sm:$0xf]
      %v357 = vld [vmem:[%s274 + $0x12c] sm:$0xf]
      %v358 = vld [vmem:[%s274 + $0x130] sm:$0xf]
      %v359 = vld [vmem:[%s274 + $0x134] sm:$0xf]
      %v360 = vld [vmem:[%s274 + $0x138] sm:$0xf]
      %v361 = vld [vmem:[%s274 + $0x13c] sm:$0xf]
      %v362 = vld [vmem:[%s274 + $0x140] sm:$0xf]
      %v363 = vld [vmem:[%s274 + $0x144] sm:$0xf]
      %v364 = vld [vmem:[%s274 + $0x148] sm:$0xf]
      %v365 = vld [vmem:[%s274 + $0x14c] sm:$0xf]
      %v366 = vld [vmem:[%s274 + $0x150] sm:$0xf]
      %v367 = vld [vmem:[%s274 + $0x154] sm:$0xf]
      %v368 = vld [vmem:[%s274 + $0x158] sm:$0xf]
      %v369 = vld [vmem:[%s274 + $0x15c] sm:$0xf]
      %v370 = vld [vmem:[%s274 + $0x160] sm:$0xf]
      %v371 = vld [vmem:[%s274 + $0x164] sm:$0xf]
      %v372 = vld [vmem:[%s274 + $0x168] sm:$0xf]
      %v373 = vld [vmem:[%s274 + $0x16c] sm:$0xf]
      %v374 = vld [vmem:[%s274 + $0x170] sm:$0xf]
      %v375 = vld [vmem:[%s274 + $0x174] sm:$0xf]
      %v376 = vld [vmem:[%s274 + $0x178] sm:$0xf]
      %v377 = vld [vmem:[%s274 + $0x17c] sm:$0xf]
      %v378 = vld [vmem:[%s274 + $0x180] sm:$0xf]
      %v379 = vld [vmem:[%s274 + $0x184] sm:$0xf]
      %v380 = vld [vmem:[%s274 + $0x188] sm:$0xf]
      %v381 = vld [vmem:[%s274 + $0x18c] sm:$0xf]
      %v382 = vld [vmem:[%s274 + $0x190] sm:$0xf]
      %v383 = vld [vmem:[%s274 + $0x194] sm:$0xf]
      %v384 = vld [vmem:[%s274 + $0x198] sm:$0xf]
      %v385 = vld [vmem:[%s274 + $0x19c] sm:$0xf]
      %v386 = vld [vmem:[%s274 + $0x1a0] sm:$0xf]
      %v387 = vld [vmem:[%s274 + $0x1a4] sm:$0xf]
      %v388 = vld [vmem:[%s274 + $0x1a8] sm:$0xf]
      %v389 = vld [vmem:[%s274 + $0x1ac] sm:$0xf]
      %v390 = vld [vmem:[%s274 + $0x1b0] sm:$0xf]
      %v391 = vld [vmem:[%s274 + $0x1b4] sm:$0xf]
      %v392 = vld [vmem:[%s274 + $0x1b8] sm:$0xf]
      %v393 = vld [vmem:[%s274 + $0x1bc] sm:$0xf]
      %v394 = vld [vmem:[%s274 + $0x1c0] sm:$0xf]
      %v395 = vld [vmem:[%s274 + $0x1c4] sm:$0xf]
      %v396 = vld [vmem:[%s274 + $0x1c8] sm:$0xf]
      %v397 = vld [vmem:[%s274 + $0x1cc] sm:$0xf]
      %v398 = vld [vmem:[%s274 + $0x1d0] sm:$0xf]
      %v399 = vld [vmem:[%s274 + $0x1d4] sm:$0xf]
      %v400 = vld [vmem:[%s274 + $0x1d8] sm:$0xf]
      %v401 = vld [vmem:[%s274 + $0x1dc] sm:$0xf]
      %v402 = vld [vmem:[%s274 + $0x1e0] sm:$0xf]
      %v403 = vld [vmem:[%s274 + $0x1e4] sm:$0xf]
      %v404 = vld [vmem:[%s274 + $0x1e8] sm:$0xf]
      %v405 = vld [vmem:[%s274 + $0x1ec] sm:$0xf]
      %v406 = vld [vmem:[%s274 + $0x1f0] sm:$0xf]
      %v407 = vld [vmem:[%s274 + $0x1f4] sm:$0xf]
      %v408 = vld [vmem:[%s274 + $0x1f8] sm:$0xf]
      %v409 = vld [vmem:[%s274 + $0x1fc] sm:$0xf]
      %v410 = vld [vmem:[%s274 + $0x200] sm:$0xf]
      %v411 = vld [vmem:[%s274 + $0x204] sm:$0xf]
      %v412 = vld [vmem:[%s274 + $0x208] sm:$0xf]
      %v413 = vld [vmem:[%s274 + $0x20c] sm:$0xf]
      %v414 = vld [vmem:[%s274 + $0x210] sm:$0xf]
      %v415 = vld [vmem:[%s274 + $0x214] sm:$0xf]
      %v416 = vld [vmem:[%s274 + $0x218] sm:$0xf]
      %v417 = vld [vmem:[%s274 + $0x21c] sm:$0xf]
      %v418 = vld [vmem:[%s274 + $0x220] sm:$0xf]
      %v419 = vld [vmem:[%s274 + $0x224] sm:$0xf]
      %v420 = vld [vmem:[%s274 + $0x228] sm:$0xf]
      %v421 = vld [vmem:[%s274 + $0x22c] sm:$0xf]
      %v422 = vld [vmem:[%s274 + $0x230] sm:$0xf]
      %v423 = vld [vmem:[%s274 + $0x234] sm:$0xf]
      %v424 = vld [vmem:[%s274 + $0x238] sm:$0xf]
      %v425 = vld [vmem:[%s274 + $0x23c] sm:$0xf]
      %v426 = vld [vmem:[%s274 + $0x240] sm:$0xf]
      %v427 = vld [vmem:[%s274 + $0x244] sm:$0xf]
      %v428 = vld [vmem:[%s274 + $0x248] sm:$0xf]
      %v429 = vld [vmem:[%s274 + $0x24c] sm:$0xf]
      %v430 = vld [vmem:[%s274 + $0x250] sm:$0xf]
      %v431 = vld [vmem:[%s274 + $0x254] sm:$0xf]
      %v432 = vld [vmem:[%s274 + $0x258] sm:$0xf]
      %v433 = vld [vmem:[%s274 + $0x25c] sm:$0xf]
      %v434 = vld [vmem:[%s274 + $0x260] sm:$0xf]
      %v435 = vld [vmem:[%s274 + $0x264] sm:$0xf]
      %v436 = vld [vmem:[%s274 + $0x268] sm:$0xf]
      %v437 = vld [vmem:[%s274 + $0x26c] sm:$0xf]
      %v438 = vld [vmem:[%s274 + $0x270] sm:$0xf]
      %v439 = vld [vmem:[%s274 + $0x274] sm:$0xf]
      %v440 = vld [vmem:[%s274 + $0x278] sm:$0xf]
      %v441 = vld [vmem:[%s274 + $0x27c] sm:$0xf]
      %v442 = vld [vmem:[%s274 + $0x280] sm:$0xf]
      %v443 = vld [vmem:[%s274 + $0x284] sm:$0xf]
      %v444 = vld [vmem:[%s274 + $0x288] sm:$0xf]
      %v445 = vld [vmem:[%s274 + $0x28c] sm:$0xf]
      %v446 = vld [vmem:[%s274 + $0x290] sm:$0xf]
      %v447 = vld [vmem:[%s274 + $0x294] sm:$0xf]
      %v448 = vld [vmem:[%s274 + $0x298] sm:$0xf]
      %v449 = vld [vmem:[%s274 + $0x29c] sm:$0xf]
      %v450 = vld [vmem:[%s274 + $0x2a0] sm:$0xf]
      %v451 = vld [vmem:[%s274 + $0x2a4] sm:$0xf]
      %v452 = vld [vmem:[%s274 + $0x2a8] sm:$0xf]
      %v453 = vld [vmem:[%s274 + $0x2ac] sm:$0xf]
      %v454 = vld [vmem:[%s274 + $0x2b0] sm:$0xf]
      %v455 = vld [vmem:[%s274 + $0x2b4] sm:$0xf]
      %v456 = vld [vmem:[%s274 + $0x2b8] sm:$0xf]
      %v457 = vld [vmem:[%s274 + $0x2bc] sm:$0xf]
      %v458 = vld [vmem:[%s274 + $0x2c0] sm:$0xf]
      %v459 = vld [vmem:[%s274 + $0x2c4] sm:$0xf]
      %v460 = vld [vmem:[%s274 + $0x2c8] sm:$0xf]
      %v461 = vld [vmem:[%s274 + $0x2cc] sm:$0xf]
      %v462 = vld [vmem:[%s274 + $0x2d0] sm:$0xf]
      %v463 = vld [vmem:[%s274 + $0x2d4] sm:$0xf]
      %v464 = vld [vmem:[%s274 + $0x2d8] sm:$0xf]
      %v465 = vld [vmem:[%s274 + $0x2dc] sm:$0xf]
      %v466 = vld [vmem:[%s274 + $0x2e0] sm:$0xf]
      %v467 = vld [vmem:[%s274 + $0x2e4] sm:$0xf]
      %v468 = vld [vmem:[%s274 + $0x2e8] sm:$0xf]
      %v469 = vld [vmem:[%s274 + $0x2ec] sm:$0xf]
      %v470 = vld [vmem:[%s274 + $0x2f0] sm:$0xf]
      %v471 = vld [vmem:[%s274 + $0x2f4] sm:$0xf]
      %v472 = vld [vmem:[%s274 + $0x2f8] sm:$0xf]
      %v473 = vld [vmem:[%s274 + $0x2fc] sm:$0xf]
      %v474 = vld [vmem:[%s274 + $0x300] sm:$0xf]
      %v475 = vld [vmem:[%s274 + $0x304] sm:$0xf]
      %v476 = vld [vmem:[%s274 + $0x308] sm:$0xf]
      %v477 = vld [vmem:[%s274 + $0x30c] sm:$0xf]
      %v478 = vld [vmem:[%s274 + $0x310] sm:$0xf]
      %v479 = vld [vmem:[%s274 + $0x314] sm:$0xf]
      %v480 = vld [vmem:[%s274 + $0x318] sm:$0xf]
      %v481 = vld [vmem:[%s274 + $0x31c] sm:$0xf]
      %v482 = vld [vmem:[%s274 + $0x320] sm:$0xf]
      %v483 = vld [vmem:[%s274 + $0x324] sm:$0xf]
      %v484 = vld [vmem:[%s274 + $0x328] sm:$0xf]
      %v485 = vld [vmem:[%s274 + $0x32c] sm:$0xf]
      %v486 = vld [vmem:[%s274 + $0x330] sm:$0xf]
      %v487 = vld [vmem:[%s274 + $0x334] sm:$0xf]
      %v488 = vld [vmem:[%s274 + $0x338] sm:$0xf]
      %v489 = vld [vmem:[%s274 + $0x33c] sm:$0xf]
      %v490 = vld [vmem:[%s274 + $0x340] sm:$0xf]
      %v491 = vld [vmem:[%s274 + $0x344] sm:$0xf]
      %v492 = vld [vmem:[%s274 + $0x348] sm:$0xf]
      %v493 = vld [vmem:[%s274 + $0x34c] sm:$0xf]
      %v494 = vld [vmem:[%s274 + $0x350] sm:$0xf]
      %v495 = vld [vmem:[%s274 + $0x354] sm:$0xf]
      %v496 = vld [vmem:[%s274 + $0x358] sm:$0xf]
      %v497 = vld [vmem:[%s274 + $0x35c] sm:$0xf]
      %v498 = vld [vmem:[%s274 + $0x360] sm:$0xf]
      %v499 = vld [vmem:[%s274 + $0x364] sm:$0xf]
      %v500 = vld [vmem:[%s274 + $0x368] sm:$0xf]
      %v501 = vld [vmem:[%s274 + $0x36c] sm:$0xf]
      %v502 = vld [vmem:[%s274 + $0x370] sm:$0xf]
      %v503 = vld [vmem:[%s274 + $0x374] sm:$0xf]
      %v504 = vld [vmem:[%s274 + $0x378] sm:$0xf]
      %v505 = vld [vmem:[%s274 + $0x37c] sm:$0xf]
      %v506 = vld [vmem:[%s274 + $0x380] sm:$0xf]
      %v507 = vld [vmem:[%s274 + $0x384] sm:$0xf]
      %v508 = vld [vmem:[%s274 + $0x388] sm:$0xf]
      %v509 = vld [vmem:[%s274 + $0x38c] sm:$0xf]
      %v510 = vld [vmem:[%s274 + $0x390] sm:$0xf]
      %v511 = vld [vmem:[%s274 + $0x394] sm:$0xf]
      %v512 = vld [vmem:[%s274 + $0x398] sm:$0xf]
      %v513 = vld [vmem:[%s274 + $0x39c] sm:$0xf]
      %v514 = vld [vmem:[%s274 + $0x3a0] sm:$0xf]
      %v515 = vld [vmem:[%s274 + $0x3a4] sm:$0xf]
      %v516 = vld [vmem:[%s274 + $0x3a8] sm:$0xf]
      %v517 = vld [vmem:[%s274 + $0x3ac] sm:$0xf]
      %v518 = vld [vmem:[%s274 + $0x3b0] sm:$0xf]
      %v519 = vld [vmem:[%s274 + $0x3b4] sm:$0xf]
      %v520 = vld [vmem:[%s274 + $0x3b8] sm:$0xf]
      %v521 = vld [vmem:[%s274 + $0x3bc] sm:$0xf]
      %v522 = vld [vmem:[%s274 + $0x3c0] sm:$0xf]
      %v523 = vld [vmem:[%s274 + $0x3c4] sm:$0xf]
      %v524 = vld [vmem:[%s274 + $0x3c8] sm:$0xf]
      %v525 = vld [vmem:[%s274 + $0x3cc] sm:$0xf]
      %v526 = vld [vmem:[%s274 + $0x3d0] sm:$0xf]
      %v527 = vld [vmem:[%s274 + $0x3d4] sm:$0xf]
      %v528 = vld [vmem:[%s274 + $0x3d8] sm:$0xf]
      %v529 = vld [vmem:[%s274 + $0x3dc] sm:$0xf]
      %v530 = vld [vmem:[%s274 + $0x3e0] sm:$0xf]
      %v531 = vld [vmem:[%s274 + $0x3e4] sm:$0xf]
      %v532 = vld [vmem:[%s274 + $0x3e8] sm:$0xf]
      %v533 = vld [vmem:[%s274 + $0x3ec] sm:$0xf]
      %v534 = vld [vmem:[%s274 + $0x3f0] sm:$0xf]
      %v535 = vld [vmem:[%s274 + $0x3f4] sm:$0xf]
      %v536 = vld [vmem:[%s274 + $0x3f8] sm:$0xf]
      %v537 = vld [vmem:[%s274 + $0x3fc] sm:$0xf]
      %v538 = vld [vmem:[%s274 + $0x400] sm:$0xf]
      %v539 = vld [vmem:[%s274 + $0x404] sm:$0xf]
      %v540 = vld [vmem:[%s274 + $0x408] sm:$0xf]
      %v541 = vld [vmem:[%s274 + $0x40c] sm:$0xf]
      %v542 = vld [vmem:[%s274 + $0x410] sm:$0xf]
      %v543 = vld [vmem:[%s274 + $0x414] sm:$0xf]
      %v544 = vld [vmem:[%s274 + $0x418] sm:$0xf]
      %v545 = vld [vmem:[%s274 + $0x41c] sm:$0xf]
      %v546 = vld [vmem:[%s274 + $0x420] sm:$0xf]
      %v547 = vld [vmem:[%s274 + $0x424] sm:$0xf]
      %v548 = vld [vmem:[%s274 + $0x428] sm:$0xf]
      %v549 = vld [vmem:[%s274 + $0x42c] sm:$0xf]
      %v550 = vld [vmem:[%s274 + $0x430] sm:$0xf]
      %v551 = vld [vmem:[%s274 + $0x434] sm:$0xf]
      %v552 = vld [vmem:[%s274 + $0x438] sm:$0xf]
      %v553 = vld [vmem:[%s274 + $0x43c] sm:$0xf]
      %v554 = vld [vmem:[%s274 + $0x440] sm:$0xf]
      %v555 = vld [vmem:[%s274 + $0x444] sm:$0xf]
      %v556 = vld [vmem:[%s274 + $0x448] sm:$0xf]
      %v557 = vld [vmem:[%s274 + $0x44c] sm:$0xf]
      %v558 = vld [vmem:[%s274 + $0x450] sm:$0xf]
      %v559 = vld [vmem:[%s274 + $0x454] sm:$0xf]
      %v560 = vld [vmem:[%s274 + $0x458] sm:$0xf]
      %v561 = vld [vmem:[%s274 + $0x45c] sm:$0xf]
      %v562 = vld [vmem:[%s274 + $0x460] sm:$0xf]
      %v563 = vld [vmem:[%s274 + $0x464] sm:$0xf]
      %v564 = vld [vmem:[%s274 + $0x468] sm:$0xf]
      %v565 = vld [vmem:[%s274 + $0x46c] sm:$0xf]
      %v566 = vld [vmem:[%s274 + $0x470] sm:$0xf]
      %v567 = vld [vmem:[%s274 + $0x474] sm:$0xf]
      %v568 = vld [vmem:[%s274 + $0x478] sm:$0xf]
      %v569 = vld [vmem:[%s274 + $0x47c] sm:$0xf]
      %v570 = vld [vmem:[%s274 + $0x480] sm:$0xf]
      %v571 = vld [vmem:[%s274 + $0x484] sm:$0xf]
      %v572 = vld [vmem:[%s274 + $0x488] sm:$0xf]
      %v573 = vld [vmem:[%s274 + $0x48c] sm:$0xf]
      %v574 = vld [vmem:[%s274 + $0x490] sm:$0xf]
      %v575 = vld [vmem:[%s274 + $0x494] sm:$0xf]
      %v576 = vld [vmem:[%s274 + $0x498] sm:$0xf]
      %v577 = vld [vmem:[%s274 + $0x49c] sm:$0xf]
      %v578 = vld [vmem:[%s274 + $0x4a0] sm:$0xf]
      %v579 = vld [vmem:[%s274 + $0x4a4] sm:$0xf]
      %v580 = vld [vmem:[%s274 + $0x4a8] sm:$0xf]
      %v581 = vld [vmem:[%s274 + $0x4ac] sm:$0xf]
      %v582 = vld [vmem:[%s274 + $0x4b0] sm:$0xf]
      %v583 = vld [vmem:[%s274 + $0x4b4] sm:$0xf]
      %v584 = vld [vmem:[%s274 + $0x4b8] sm:$0xf]
      %v585 = vld [vmem:[%s274 + $0x4bc] sm:$0xf]
      %v586 = vld [vmem:[%s274 + $0x4c0] sm:$0xf]
      %v587 = vld [vmem:[%s274 + $0x4c4] sm:$0xf]
      %v588 = vld [vmem:[%s274 + $0x4c8] sm:$0xf]
      %v589 = vld [vmem:[%s274 + $0x4cc] sm:$0xf]
      %v590 = vld [vmem:[%s274 + $0x4d0] sm:$0xf]
      %v591 = vld [vmem:[%s274 + $0x4d4] sm:$0xf]
      %v592 = vld [vmem:[%s274 + $0x4d8] sm:$0xf]
      %v593 = vld [vmem:[%s274 + $0x4dc] sm:$0xf]
      %v594 = vld [vmem:[%s274 + $0x4e0] sm:$0xf]
      %v595 = vld [vmem:[%s274 + $0x4e4] sm:$0xf]
      %v596 = vld [vmem:[%s274 + $0x4e8] sm:$0xf]
      %v597 = vld [vmem:[%s274 + $0x4ec] sm:$0xf]
      %v598 = vld [vmem:[%s274 + $0x4f0] sm:$0xf]
      %v599 = vld [vmem:[%s274 + $0x4f4] sm:$0xf]
      %v600 = vld [vmem:[%s274 + $0x4f8] sm:$0xf]
      %v601 = vld [vmem:[%s274 + $0x4fc] sm:$0xf]
      %v602 = vld [vmem:[%s1] sm:$0xf]
      %v603 = vld [vmem:[%s1 + $0x4] sm:$0xf]
      %v604 = vld [vmem:[%s1 + $0x8] sm:$0xf]
      %v605 = vld [vmem:[%s1 + $0xc] sm:$0x3]
      %v606 = vld [vmem:[%s2] sm:$0x1]
      %v608 = vlaneseq
      %v609 = vshrl.u32 %v608, 7
      %v610 = vsub.s32 0, %v609
      %v611 = vrot.slane %v606, %v610
      %v933 = vunpack.c.l.b16 %v282
      %v934 = vunpack.c.l.b16 %v283
      %v935 = vunpack.c.l.b16 %v284
      %v936 = vunpack.c.l.b16 %v285
      %v937 = vunpack.c.l.b16 %v286
      %v938 = vunpack.c.l.b16 %v287
      %v939 = vunpack.c.l.b16 %v288
      %v940 = vunpack.c.l.b16 %v289
      %v941 = vunpack.c.l.b16 %v290
      %v942 = vunpack.c.l.b16 %v291
      %v943 = vunpack.c.l.b16 %v292
      %v944 = vunpack.c.l.b16 %v293
      %v945 = vunpack.c.l.b16 %v294
      %v946 = vunpack.c.l.b16 %v295
      %v947 = vunpack.c.l.b16 %v296
      %v948 = vunpack.c.l.b16 %v297
      %v949 = vunpack.c.l.b16 %v298
      %v950 = vunpack.c.l.b16 %v299
      %v951 = vunpack.c.l.b16 %v300
      %v952 = vunpack.c.l.b16 %v301
      %v953 = vunpack.c.l.b16 %v302
      %v954 = vunpack.c.l.b16 %v303
      %v955 = vunpack.c.l.b16 %v304
      %v956 = vunpack.c.l.b16 %v305
      %v957 = vunpack.c.l.b16 %v306
      %v958 = vunpack.c.l.b16 %v307
      %v959 = vunpack.c.l.b16 %v308
      %v960 = vunpack.c.l.b16 %v309
      %v961 = vunpack.c.l.b16 %v310
      %v962 = vunpack.c.l.b16 %v311
      %v963 = vunpack.c.l.b16 %v312
      %v964 = vunpack.c.l.b16 %v313
      %v965 = vunpack.c.l.b16 %v314
      %v966 = vunpack.c.l.b16 %v315
      %v967 = vunpack.c.l.b16 %v316
      %v968 = vunpack.c.l.b16 %v317
      %v969 = vunpack.c.l.b16 %v318
      %v970 = vunpack.c.l.b16 %v319
      %v971 = vunpack.c.l.b16 %v320
      %v972 = vunpack.c.l.b16 %v321
      %v973 = vunpack.c.l.b16 %v322
      %v974 = vunpack.c.l.b16 %v323
      %v975 = vunpack.c.l.b16 %v324
      %v976 = vunpack.c.l.b16 %v325
      %v977 = vunpack.c.l.b16 %v326
      %v978 = vunpack.c.l.b16 %v327
      %v979 = vunpack.c.l.b16 %v328
      %v980 = vunpack.c.l.b16 %v329
      %v981 = vunpack.c.l.b16 %v330
      %v982 = vunpack.c.l.b16 %v331
      %v983 = vunpack.c.l.b16 %v332
      %v984 = vunpack.c.l.b16 %v333
      %v985 = vunpack.c.l.b16 %v334
      %v986 = vunpack.c.l.b16 %v335
      %v987 = vunpack.c.l.b16 %v336
      %v988 = vunpack.c.l.b16 %v337
      %v989 = vunpack.c.l.b16 %v338
      %v990 = vunpack.c.l.b16 %v339
      %v991 = vunpack.c.l.b16 %v340
      %v992 = vunpack.c.l.b16 %v341
      %v993 = vunpack.c.l.b16 %v342
      %v994 = vunpack.c.l.b16 %v343
      %v995 = vunpack.c.l.b16 %v344
      %v996 = vunpack.c.l.b16 %v345
      %v997 = vunpack.c.l.b16 %v346
      %v998 = vunpack.c.l.b16 %v347
      %v999 = vunpack.c.l.b16 %v348
      %v1000 = vunpack.c.l.b16 %v349
      %v1001 = vunpack.c.l.b16 %v350
      %v1002 = vunpack.c.l.b16 %v351
      %v1003 = vunpack.c.l.b16 %v352
      %v1004 = vunpack.c.l.b16 %v353
      %v1005 = vunpack.c.l.b16 %v354
      %v1006 = vunpack.c.l.b16 %v355
      %v1007 = vunpack.c.l.b16 %v356
      %v1008 = vunpack.c.l.b16 %v357
      %v1009 = vunpack.c.l.b16 %v358
      %v1010 = vunpack.c.l.b16 %v359
      %v1011 = vunpack.c.l.b16 %v360
      %v1012 = vunpack.c.l.b16 %v361
      %v1013 = vunpack.c.l.b16 %v362
      %v1014 = vunpack.c.l.b16 %v363
      %v1015 = vunpack.c.l.b16 %v364
      %v1016 = vunpack.c.l.b16 %v365
      %v1017 = vunpack.c.l.b16 %v366
      %v1018 = vunpack.c.l.b16 %v367
      %v1019 = vunpack.c.l.b16 %v368
      %v1020 = vunpack.c.l.b16 %v369
      %v1021 = vunpack.c.l.b16 %v370
      %v1022 = vunpack.c.l.b16 %v371
      %v1023 = vunpack.c.l.b16 %v372
      %v1024 = vunpack.c.l.b16 %v373
      %v1025 = vunpack.c.l.b16 %v374
      %v1026 = vunpack.c.l.b16 %v375
      %v1027 = vunpack.c.l.b16 %v376
      %v1028 = vunpack.c.l.b16 %v377
      %v1029 = vunpack.c.l.b16 %v378
      %v1030 = vunpack.c.l.b16 %v379
      %v1031 = vunpack.c.l.b16 %v380
      %v1032 = vunpack.c.l.b16 %v381
      %v1033 = vunpack.c.l.b16 %v382
      %v1034 = vunpack.c.l.b16 %v383
      %v1035 = vunpack.c.l.b16 %v384
      %v1036 = vunpack.c.l.b16 %v385
      %v1037 = vunpack.c.l.b16 %v386
      %v1038 = vunpack.c.l.b16 %v387
      %v1039 = vunpack.c.l.b16 %v388
      %v1040 = vunpack.c.l.b16 %v389
      %v1041 = vunpack.c.l.b16 %v390
      %v1042 = vunpack.c.l.b16 %v391
      %v1043 = vunpack.c.l.b16 %v392
      %v1044 = vunpack.c.l.b16 %v393
      %v1045 = vunpack.c.l.b16 %v394
      %v1046 = vunpack.c.l.b16 %v395
      %v1047 = vunpack.c.l.b16 %v396
      %v1048 = vunpack.c.l.b16 %v397
      %v1049 = vunpack.c.l.b16 %v398
      %v1050 = vunpack.c.l.b16 %v399
      %v1051 = vunpack.c.l.b16 %v400
      %v1052 = vunpack.c.l.b16 %v401
      %v1053 = vunpack.c.l.b16 %v402
      %v1054 = vunpack.c.l.b16 %v403
      %v1055 = vunpack.c.l.b16 %v404
      %v1056 = vunpack.c.l.b16 %v405
      %v1057 = vunpack.c.l.b16 %v406
      %v1058 = vunpack.c.l.b16 %v407
      %v1059 = vunpack.c.l.b16 %v408
      %v1060 = vunpack.c.l.b16 %v409
      %v1061 = vunpack.c.l.b16 %v410
      %v1062 = vunpack.c.l.b16 %v411
      %v1063 = vunpack.c.l.b16 %v412
      %v1064 = vunpack.c.l.b16 %v413
      %v1065 = vunpack.c.l.b16 %v414
      %v1066 = vunpack.c.l.b16 %v415
      %v1067 = vunpack.c.l.b16 %v416
      %v1068 = vunpack.c.l.b16 %v417
      %v1069 = vunpack.c.l.b16 %v418
      %v1070 = vunpack.c.l.b16 %v419
      %v1071 = vunpack.c.l.b16 %v420
      %v1072 = vunpack.c.l.b16 %v421
      %v1073 = vunpack.c.l.b16 %v422
      %v1074 = vunpack.c.l.b16 %v423
      %v1075 = vunpack.c.l.b16 %v424
      %v1076 = vunpack.c.l.b16 %v425
      %v1077 = vunpack.c.l.b16 %v426
      %v1078 = vunpack.c.l.b16 %v427
      %v1079 = vunpack.c.l.b16 %v428
      %v1080 = vunpack.c.l.b16 %v429
      %v1081 = vunpack.c.l.b16 %v430
      %v1082 = vunpack.c.l.b16 %v431
      %v1083 = vunpack.c.l.b16 %v432
      %v1084 = vunpack.c.l.b16 %v433
      %v1085 = vunpack.c.l.b16 %v434
      %v1086 = vunpack.c.l.b16 %v435
      %v1087 = vunpack.c.l.b16 %v436
      %v1088 = vunpack.c.l.b16 %v437
      %v1089 = vunpack.c.l.b16 %v438
      %v1090 = vunpack.c.l.b16 %v439
      %v1091 = vunpack.c.l.b16 %v440
      %v1092 = vunpack.c.l.b16 %v441
      %v1093 = vunpack.c.l.b16 %v442
      %v1094 = vunpack.c.l.b16 %v443
      %v1095 = vunpack.c.l.b16 %v444
      %v1096 = vunpack.c.l.b16 %v445
      %v1097 = vunpack.c.l.b16 %v446
      %v1098 = vunpack.c.l.b16 %v447
      %v1099 = vunpack.c.l.b16 %v448
      %v1100 = vunpack.c.l.b16 %v449
      %v1101 = vunpack.c.l.b16 %v450
      %v1102 = vunpack.c.l.b16 %v451
      %v1103 = vunpack.c.l.b16 %v452
      %v1104 = vunpack.c.l.b16 %v453
      %v1105 = vunpack.c.l.b16 %v454
      %v1106 = vunpack.c.l.b16 %v455
      %v1107 = vunpack.c.l.b16 %v456
      %v1108 = vunpack.c.l.b16 %v457
      %v1109 = vunpack.c.l.b16 %v458
      %v1110 = vunpack.c.l.b16 %v459
      %v1111 = vunpack.c.l.b16 %v460
      %v1112 = vunpack.c.l.b16 %v461
      %v1113 = vunpack.c.l.b16 %v462
      %v1114 = vunpack.c.l.b16 %v463
      %v1115 = vunpack.c.l.b16 %v464
      %v1116 = vunpack.c.l.b16 %v465
      %v1117 = vunpack.c.l.b16 %v466
      %v1118 = vunpack.c.l.b16 %v467
      %v1119 = vunpack.c.l.b16 %v468
      %v1120 = vunpack.c.l.b16 %v469
      %v1121 = vunpack.c.l.b16 %v470
      %v1122 = vunpack.c.l.b16 %v471
      %v1123 = vunpack.c.l.b16 %v472
      %v1124 = vunpack.c.l.b16 %v473
      %v1125 = vunpack.c.l.b16 %v474
      %v1126 = vunpack.c.l.b16 %v475
      %v1127 = vunpack.c.l.b16 %v476
      %v1128 = vunpack.c.l.b16 %v477
      %v1129 = vunpack.c.l.b16 %v478
      %v1130 = vunpack.c.l.b16 %v479
      %v1131 = vunpack.c.l.b16 %v480
      %v1132 = vunpack.c.l.b16 %v481
      %v1133 = vunpack.c.l.b16 %v482
      %v1134 = vunpack.c.l.b16 %v483
      %v1135 = vunpack.c.l.b16 %v484
      %v1136 = vunpack.c.l.b16 %v485
      %v1137 = vunpack.c.l.b16 %v486
      %v1138 = vunpack.c.l.b16 %v487
      %v1139 = vunpack.c.l.b16 %v488
      %v1140 = vunpack.c.l.b16 %v489
      %v1141 = vunpack.c.l.b16 %v490
      %v1142 = vunpack.c.l.b16 %v491
      %v1143 = vunpack.c.l.b16 %v492
      %v1144 = vunpack.c.l.b16 %v493
      %v1145 = vunpack.c.l.b16 %v494
      %v1146 = vunpack.c.l.b16 %v495
      %v1147 = vunpack.c.l.b16 %v496
      %v1148 = vunpack.c.l.b16 %v497
      %v1149 = vunpack.c.l.b16 %v498
      %v1150 = vunpack.c.l.b16 %v499
      %v1151 = vunpack.c.l.b16 %v500
      %v1152 = vunpack.c.l.b16 %v501
      %v1153 = vunpack.c.l.b16 %v502
      %v1154 = vunpack.c.l.b16 %v503
      %v1155 = vunpack.c.l.b16 %v504
      %v1156 = vunpack.c.l.b16 %v505
      %v1157 = vunpack.c.l.b16 %v506
      %v1158 = vunpack.c.l.b16 %v507
      %v1159 = vunpack.c.l.b16 %v508
      %v1160 = vunpack.c.l.b16 %v509
      %v1161 = vunpack.c.l.b16 %v510
      %v1162 = vunpack.c.l.b16 %v511
      %v1163 = vunpack.c.l.b16 %v512
      %v1164 = vunpack.c.l.b16 %v513
      %v1165 = vunpack.c.l.b16 %v514
      %v1166 = vunpack.c.l.b16 %v515
      %v1167 = vunpack.c.l.b16 %v516
      %v1168 = vunpack.c.l.b16 %v517
      %v1169 = vunpack.c.l.b16 %v518
      %v1170 = vunpack.c.l.b16 %v519
      %v1171 = vunpack.c.l.b16 %v520
      %v1172 = vunpack.c.l.b16 %v521
      %v1173 = vunpack.c.l.b16 %v522
      %v1174 = vunpack.c.l.b16 %v523
      %v1175 = vunpack.c.l.b16 %v524
      %v1176 = vunpack.c.l.b16 %v525
      %v1177 = vunpack.c.l.b16 %v526
      %v1178 = vunpack.c.l.b16 %v527
      %v1179 = vunpack.c.l.b16 %v528
      %v1180 = vunpack.c.l.b16 %v529
      %v1181 = vunpack.c.l.b16 %v530
      %v1182 = vunpack.c.l.b16 %v531
      %v1183 = vunpack.c.l.b16 %v532
      %v1184 = vunpack.c.l.b16 %v533
      %v1185 = vunpack.c.l.b16 %v534
      %v1186 = vunpack.c.l.b16 %v535
      %v1187 = vunpack.c.l.b16 %v536
      %v1188 = vunpack.c.l.b16 %v537
      %v1189 = vunpack.c.l.b16 %v538
      %v1190 = vunpack.c.l.b16 %v539
      %v1191 = vunpack.c.l.b16 %v540
      %v1192 = vunpack.c.l.b16 %v541
      %v1193 = vunpack.c.l.b16 %v542
      %v1194 = vunpack.c.l.b16 %v543
      %v1195 = vunpack.c.l.b16 %v544
      %v1196 = vunpack.c.l.b16 %v545
      %v1197 = vunpack.c.l.b16 %v546
      %v1198 = vunpack.c.l.b16 %v547
      %v1199 = vunpack.c.l.b16 %v548
      %v1200 = vunpack.c.l.b16 %v549
      %v1201 = vunpack.c.l.b16 %v550
      %v1202 = vunpack.c.l.b16 %v551
      %v1203 = vunpack.c.l.b16 %v552
      %v1204 = vunpack.c.l.b16 %v553
      %v1205 = vunpack.c.l.b16 %v554
      %v1206 = vunpack.c.l.b16 %v555
      %v1207 = vunpack.c.l.b16 %v556
      %v1208 = vunpack.c.l.b16 %v557
      %v1209 = vunpack.c.l.b16 %v558
      %v1210 = vunpack.c.l.b16 %v559
      %v1211 = vunpack.c.l.b16 %v560
      %v1212 = vunpack.c.l.b16 %v561
      %v1213 = vunpack.c.l.b16 %v562
      %v1214 = vunpack.c.l.b16 %v563
      %v1215 = vunpack.c.l.b16 %v564
      %v1216 = vunpack.c.l.b16 %v565
      %v1217 = vunpack.c.l.b16 %v566
      %v1218 = vunpack.c.l.b16 %v567
      %v1219 = vunpack.c.l.b16 %v568
      %v1220 = vunpack.c.l.b16 %v569
      %v1221 = vunpack.c.l.b16 %v570
      %v1222 = vunpack.c.l.b16 %v571
      %v1223 = vunpack.c.l.b16 %v572
      %v1224 = vunpack.c.l.b16 %v573
      %v1225 = vunpack.c.l.b16 %v574
      %v1226 = vunpack.c.l.b16 %v575
      %v1227 = vunpack.c.l.b16 %v576
      %v1228 = vunpack.c.l.b16 %v577
      %v1229 = vunpack.c.l.b16 %v578
      %v1230 = vunpack.c.l.b16 %v579
      %v1231 = vunpack.c.l.b16 %v580
      %v1232 = vunpack.c.l.b16 %v581
      %v1233 = vunpack.c.l.b16 %v582
      %v1234 = vunpack.c.l.b16 %v583
      %v1235 = vunpack.c.l.b16 %v584
      %v1236 = vunpack.c.l.b16 %v585
      %v1237 = vunpack.c.l.b16 %v586
      %v1238 = vunpack.c.l.b16 %v587
      %v1239 = vunpack.c.l.b16 %v588
      %v1240 = vunpack.c.l.b16 %v589
      %v1241 = vunpack.c.l.b16 %v590
      %v1242 = vunpack.c.l.b16 %v591
      %v1243 = vunpack.c.l.b16 %v592
      %v1244 = vunpack.c.l.b16 %v593
      %v1245 = vunpack.c.l.b16 %v594
      %v1246 = vunpack.c.l.b16 %v595
      %v1247 = vunpack.c.l.b16 %v596
      %v1248 = vunpack.c.l.b16 %v597
      %v1249 = vunpack.c.l.b16 %v598
      %v1250 = vunpack.c.l.b16 %v599
      %v1251 = vunpack.c.l.b16 %v600
      %v1252 = vunpack.c.l.b16 %v601
      %v1253 = vpack.c.b16 %v934, %v933
      %v1254 = vpack.c.b16 %v936, %v935
      %v1255 = vpack.c.b16 %v938, %v937
      %v1256 = vpack.c.b16 %v940, %v939
      %v1257 = vpack.c.b16 %v942, %v941
      %v1258 = vpack.c.b16 %v944, %v943
      %v1259 = vpack.c.b16 %v946, %v945
      %v1260 = vpack.c.b16 %v948, %v947
      %v1261 = vpack.c.b16 %v950, %v949
      %v1262 = vpack.c.b16 %v952, %v951
      %v1263 = vpack.c.b16 %v954, %v953
      %v1264 = vpack.c.b16 %v956, %v955
      %v1265 = vpack.c.b16 %v958, %v957
      %v1266 = vpack.c.b16 %v960, %v959
      %v1267 = vpack.c.b16 %v962, %v961
      %v1268 = vpack.c.b16 %v964, %v963
      %v1269 = vpack.c.b16 %v966, %v965
      %v1270 = vpack.c.b16 %v968, %v967
      %v1271 = vpack.c.b16 %v970, %v969
      %v1272 = vpack.c.b16 %v972, %v971
      %v1273 = vpack.c.b16 %v974, %v973
      %v1274 = vpack.c.b16 %v976, %v975
      %v1275 = vpack.c.b16 %v978, %v977
      %v1276 = vpack.c.b16 %v980, %v979
      %v1277 = vpack.c.b16 %v982, %v981
      %v1278 = vpack.c.b16 %v984, %v983
      %v1279 = vpack.c.b16 %v986, %v985
      %v1280 = vpack.c.b16 %v988, %v987
      %v1281 = vpack.c.b16 %v990, %v989
      %v1282 = vpack.c.b16 %v992, %v991
      %v1283 = vpack.c.b16 %v994, %v993
      %v1284 = vpack.c.b16 %v996, %v995
      %v1285 = vpack.c.b16 %v998, %v997
      %v1286 = vpack.c.b16 %v1000, %v999
      %v1287 = vpack.c.b16 %v1002, %v1001
      %v1288 = vpack.c.b16 %v1004, %v1003
      %v1289 = vpack.c.b16 %v1006, %v1005
      %v1290 = vpack.c.b16 %v1008, %v1007
      %v1291 = vpack.c.b16 %v1010, %v1009
      %v1292 = vpack.c.b16 %v1012, %v1011
      %v1293 = vpack.c.b16 %v1014, %v1013
      %v1294 = vpack.c.b16 %v1016, %v1015
      %v1295 = vpack.c.b16 %v1018, %v1017
      %v1296 = vpack.c.b16 %v1020, %v1019
      %v1297 = vpack.c.b16 %v1022, %v1021
      %v1298 = vpack.c.b16 %v1024, %v1023
      %v1299 = vpack.c.b16 %v1026, %v1025
      %v1300 = vpack.c.b16 %v1028, %v1027
      %v1301 = vpack.c.b16 %v1030, %v1029
      %v1302 = vpack.c.b16 %v1032, %v1031
      %v1303 = vpack.c.b16 %v1034, %v1033
      %v1304 = vpack.c.b16 %v1036, %v1035
      %v1305 = vpack.c.b16 %v1038, %v1037
      %v1306 = vpack.c.b16 %v1040, %v1039
      %v1307 = vpack.c.b16 %v1042, %v1041
      %v1308 = vpack.c.b16 %v1044, %v1043
      %v1309 = vpack.c.b16 %v1046, %v1045
      %v1310 = vpack.c.b16 %v1048, %v1047
      %v1311 = vpack.c.b16 %v1050, %v1049
      %v1312 = vpack.c.b16 %v1052, %v1051
      %v1313 = vpack.c.b16 %v1054, %v1053
      %v1314 = vpack.c.b16 %v1056, %v1055
      %v1315 = vpack.c.b16 %v1058, %v1057
      %v1316 = vpack.c.b16 %v1060, %v1059
      %v1317 = vpack.c.b16 %v1062, %v1061
      %v1318 = vpack.c.b16 %v1064, %v1063
      %v1319 = vpack.c.b16 %v1066, %v1065
      %v1320 = vpack.c.b16 %v1068, %v1067
      %v1321 = vpack.c.b16 %v1070, %v1069
      %v1322 = vpack.c.b16 %v1072, %v1071
      %v1323 = vpack.c.b16 %v1074, %v1073
      %v1324 = vpack.c.b16 %v1076, %v1075
      %v1325 = vpack.c.b16 %v1078, %v1077
      %v1326 = vpack.c.b16 %v1080, %v1079
      %v1327 = vpack.c.b16 %v1082, %v1081
      %v1328 = vpack.c.b16 %v1084, %v1083
      %v1329 = vpack.c.b16 %v1086, %v1085
      %v1330 = vpack.c.b16 %v1088, %v1087
      %v1331 = vpack.c.b16 %v1090, %v1089
      %v1332 = vpack.c.b16 %v1092, %v1091
      %v1333 = vpack.c.b16 %v1094, %v1093
      %v1334 = vpack.c.b16 %v1096, %v1095
      %v1335 = vpack.c.b16 %v1098, %v1097
      %v1336 = vpack.c.b16 %v1100, %v1099
      %v1337 = vpack.c.b16 %v1102, %v1101
      %v1338 = vpack.c.b16 %v1104, %v1103
      %v1339 = vpack.c.b16 %v1106, %v1105
      %v1340 = vpack.c.b16 %v1108, %v1107
      %v1341 = vpack.c.b16 %v1110, %v1109
      %v1342 = vpack.c.b16 %v1112, %v1111
      %v1343 = vpack.c.b16 %v1114, %v1113
      %v1344 = vpack.c.b16 %v1116, %v1115
      %v1345 = vpack.c.b16 %v1118, %v1117
      %v1346 = vpack.c.b16 %v1120, %v1119
      %v1347 = vpack.c.b16 %v1122, %v1121
      %v1348 = vpack.c.b16 %v1124, %v1123
      %v1349 = vpack.c.b16 %v1126, %v1125
      %v1350 = vpack.c.b16 %v1128, %v1127
      %v1351 = vpack.c.b16 %v1130, %v1129
      %v1352 = vpack.c.b16 %v1132, %v1131
      %v1353 = vpack.c.b16 %v1134, %v1133
      %v1354 = vpack.c.b16 %v1136, %v1135
      %v1355 = vpack.c.b16 %v1138, %v1137
      %v1356 = vpack.c.b16 %v1140, %v1139
      %v1357 = vpack.c.b16 %v1142, %v1141
      %v1358 = vpack.c.b16 %v1144, %v1143
      %v1359 = vpack.c.b16 %v1146, %v1145
      %v1360 = vpack.c.b16 %v1148, %v1147
      %v1361 = vpack.c.b16 %v1150, %v1149
      %v1362 = vpack.c.b16 %v1152, %v1151
      %v1363 = vpack.c.b16 %v1154, %v1153
      %v1364 = vpack.c.b16 %v1156, %v1155
      %v1365 = vpack.c.b16 %v1158, %v1157
      %v1366 = vpack.c.b16 %v1160, %v1159
      %v1367 = vpack.c.b16 %v1162, %v1161
      %v1368 = vpack.c.b16 %v1164, %v1163
      %v1369 = vpack.c.b16 %v1166, %v1165
      %v1370 = vpack.c.b16 %v1168, %v1167
      %v1371 = vpack.c.b16 %v1170, %v1169
      %v1372 = vpack.c.b16 %v1172, %v1171
      %v1373 = vpack.c.b16 %v1174, %v1173
      %v1374 = vpack.c.b16 %v1176, %v1175
      %v1375 = vpack.c.b16 %v1178, %v1177
      %v1376 = vpack.c.b16 %v1180, %v1179
      %v1377 = vpack.c.b16 %v1182, %v1181
      %v1378 = vpack.c.b16 %v1184, %v1183
      %v1379 = vpack.c.b16 %v1186, %v1185
      %v1380 = vpack.c.b16 %v1188, %v1187
      %v1381 = vpack.c.b16 %v1190, %v1189
      %v1382 = vpack.c.b16 %v1192, %v1191
      %v1383 = vpack.c.b16 %v1194, %v1193
      %v1384 = vpack.c.b16 %v1196, %v1195
      %v1385 = vpack.c.b16 %v1198, %v1197
      %v1386 = vpack.c.b16 %v1200, %v1199
      %v1387 = vpack.c.b16 %v1202, %v1201
      %v1388 = vpack.c.b16 %v1204, %v1203
      %v1389 = vpack.c.b16 %v1206, %v1205
      %v1390 = vpack.c.b16 %v1208, %v1207
      %v1391 = vpack.c.b16 %v1210, %v1209
      %v1392 = vpack.c.b16 %v1212, %v1211
      %v1393 = vpack.c.b16 %v1214, %v1213
      %v1394 = vpack.c.b16 %v1216, %v1215
      %v1395 = vpack.c.b16 %v1218, %v1217
      %v1396 = vpack.c.b16 %v1220, %v1219
      %v1397 = vpack.c.b16 %v1222, %v1221
      %v1398 = vpack.c.b16 %v1224, %v1223
      %v1399 = vpack.c.b16 %v1226, %v1225
      %v1400 = vpack.c.b16 %v1228, %v1227
      %v1401 = vpack.c.b16 %v1230, %v1229
      %v1402 = vpack.c.b16 %v1232, %v1231
      %v1403 = vpack.c.b16 %v1234, %v1233
      %v1404 = vpack.c.b16 %v1236, %v1235
      %v1405 = vpack.c.b16 %v1238, %v1237
      %v1406 = vpack.c.b16 %v1240, %v1239
      %v1407 = vpack.c.b16 %v1242, %v1241
      %v1408 = vpack.c.b16 %v1244, %v1243
      %v1409 = vpack.c.b16 %v1246, %v1245
      %v1410 = vpack.c.b16 %v1248, %v1247
      %v1411 = vpack.c.b16 %v1250, %v1249
      %v1412 = vpack.c.b16 %v1252, %v1251
      %v1417 = vunpack.c.l.b16 %v602
      %v1418 = vunpack.c.l.b16 %v603
      %v1419 = vunpack.c.l.b16 %v604
      %v1420 = vunpack.c.l.b16 %v605
      %v1421 = vpack.c.b16 %v1418, %v1417
      %v1422 = vpack.c.b16 %v1420, %v1419
      %vm1424 = vcmask 220160
      %v1426 = vsel %vm1424, %v1253, 0
      %v1429 = vsel %vm1424, %v1254, 0
      %v1432 = vsel %vm1424, %v1255, 0
      %v1435 = vsel %vm1424, %v1256, 0
      %v1438 = vsel %vm1424, %v1257, 0
      %v1441 = vsel %vm1424, %v1258, 0
      %v1444 = vsel %vm1424, %v1259, 0
      %v1447 = vsel %vm1424, %v1260, 0
      %v1450 = vsel %vm1424, %v1261, 0
      %v1453 = vsel %vm1424, %v1262, 0
      %v1456 = vsel %vm1424, %v1263, 0
      %v1459 = vsel %vm1424, %v1264, 0
      %v1462 = vsel %vm1424, %v1265, 0
      %v1465 = vsel %vm1424, %v1266, 0
      %v1468 = vsel %vm1424, %v1267, 0
      %v1471 = vsel %vm1424, %v1268, 0
      %v1474 = vsel %vm1424, %v1269, 0
      %v1477 = vsel %vm1424, %v1270, 0
      %v1480 = vsel %vm1424, %v1271, 0
      %v1483 = vsel %vm1424, %v1272, 0
      %v1486 = vsel %vm1424, %v1273, 0
      %v1489 = vsel %vm1424, %v1274, 0
      %v1492 = vsel %vm1424, %v1275, 0
      %v1495 = vsel %vm1424, %v1276, 0
      %v1498 = vsel %vm1424, %v1277, 0
      %v1501 = vsel %vm1424, %v1278, 0
      %v1504 = vsel %vm1424, %v1279, 0
      %v1507 = vsel %vm1424, %v1280, 0
      %v1510 = vsel %vm1424, %v1281, 0
      %v1513 = vsel %vm1424, %v1282, 0
      %v1516 = vsel %vm1424, %v1283, 0
      %v1519 = vsel %vm1424, %v1284, 0
      %v1522 = vsel %vm1424, %v1285, 0
      %v1525 = vsel %vm1424, %v1286, 0
      %v1528 = vsel %vm1424, %v1287, 0
      %v1531 = vsel %vm1424, %v1288, 0
      %v1534 = vsel %vm1424, %v1289, 0
      %v1537 = vsel %vm1424, %v1290, 0
      %v1540 = vsel %vm1424, %v1291, 0
      %v1543 = vsel %vm1424, %v1292, 0
      %v1546 = vsel %vm1424, %v1293, 0
      %v1549 = vsel %vm1424, %v1294, 0
      %v1552 = vsel %vm1424, %v1295, 0
      %v1555 = vsel %vm1424, %v1296, 0
      %v1558 = vsel %vm1424, %v1297, 0
      %v1561 = vsel %vm1424, %v1298, 0
      %v1564 = vsel %vm1424, %v1299, 0
      %v1567 = vsel %vm1424, %v1300, 0
      %v1570 = vsel %vm1424, %v1301, 0
      %v1573 = vsel %vm1424, %v1302, 0
      %v1576 = vsel %vm1424, %v1303, 0
      %v1579 = vsel %vm1424, %v1304, 0
      %v1582 = vsel %vm1424, %v1305, 0
      %v1585 = vsel %vm1424, %v1306, 0
      %v1588 = vsel %vm1424, %v1307, 0
      %v1591 = vsel %vm1424, %v1308, 0
      %v1594 = vsel %vm1424, %v1309, 0
      %v1597 = vsel %vm1424, %v1310, 0
      %v1600 = vsel %vm1424, %v1311, 0
      %v1603 = vsel %vm1424, %v1312, 0
      %v1606 = vsel %vm1424, %v1313, 0
      %v1609 = vsel %vm1424, %v1314, 0
      %v1612 = vsel %vm1424, %v1315, 0
      %v1615 = vsel %vm1424, %v1316, 0
      %v1618 = vsel %vm1424, %v1317, 0
      %v1621 = vsel %vm1424, %v1318, 0
      %v1624 = vsel %vm1424, %v1319, 0
      %v1627 = vsel %vm1424, %v1320, 0
      %v1630 = vsel %vm1424, %v1321, 0
      %v1633 = vsel %vm1424, %v1322, 0
      %v1636 = vsel %vm1424, %v1323, 0
      %v1639 = vsel %vm1424, %v1324, 0
      %v1642 = vsel %vm1424, %v1325, 0
      %v1645 = vsel %vm1424, %v1326, 0
      %v1648 = vsel %vm1424, %v1327, 0
      %v1651 = vsel %vm1424, %v1328, 0
      %v1654 = vsel %vm1424, %v1329, 0
      %v1657 = vsel %vm1424, %v1330, 0
      %v1660 = vsel %vm1424, %v1331, 0
      %v1663 = vsel %vm1424, %v1332, 0
      %v1666 = vsel %vm1424, %v1333, 0
      %v1669 = vsel %vm1424, %v1334, 0
      %v1672 = vsel %vm1424, %v1335, 0
      %v1675 = vsel %vm1424, %v1336, 0
      %v1678 = vsel %vm1424, %v1337, 0
      %v1681 = vsel %vm1424, %v1338, 0
      %v1684 = vsel %vm1424, %v1339, 0
      %v1687 = vsel %vm1424, %v1340, 0
      %v1690 = vsel %vm1424, %v1341, 0
      %v1693 = vsel %vm1424, %v1342, 0
      %v1696 = vsel %vm1424, %v1343, 0
      %v1699 = vsel %vm1424, %v1344, 0
      %v1702 = vsel %vm1424, %v1345, 0
      %v1705 = vsel %vm1424, %v1346, 0
      %v1708 = vsel %vm1424, %v1347, 0
      %v1711 = vsel %vm1424, %v1348, 0
      %v1714 = vsel %vm1424, %v1349, 0
      %v1717 = vsel %vm1424, %v1350, 0
      %v1720 = vsel %vm1424, %v1351, 0
      %v1723 = vsel %vm1424, %v1352, 0
      %v1726 = vsel %vm1424, %v1353, 0
      %v1729 = vsel %vm1424, %v1354, 0
      %v1732 = vsel %vm1424, %v1355, 0
      %v1735 = vsel %vm1424, %v1356, 0
      %v1738 = vsel %vm1424, %v1357, 0
      %v1741 = vsel %vm1424, %v1358, 0
      %v1744 = vsel %vm1424, %v1359, 0
      %v1747 = vsel %vm1424, %v1360, 0
      %v1750 = vsel %vm1424, %v1361, 0
      %v1753 = vsel %vm1424, %v1362, 0
      %v1756 = vsel %vm1424, %v1363, 0
      %v1759 = vsel %vm1424, %v1364, 0
      %v1762 = vsel %vm1424, %v1365, 0
      %v1765 = vsel %vm1424, %v1366, 0
      %v1768 = vsel %vm1424, %v1367, 0
      %v1771 = vsel %vm1424, %v1368, 0
      %v1774 = vsel %vm1424, %v1369, 0
      %v1777 = vsel %vm1424, %v1370, 0
      %v1780 = vsel %vm1424, %v1371, 0
      %v1783 = vsel %vm1424, %v1372, 0
      %v1786 = vsel %vm1424, %v1373, 0
      %v1789 = vsel %vm1424, %v1374, 0
      %v1792 = vsel %vm1424, %v1375, 0
      %v1795 = vsel %vm1424, %v1376, 0
      %v1798 = vsel %vm1424, %v1377, 0
      %v1801 = vsel %vm1424, %v1378, 0
      %v1804 = vsel %vm1424, %v1379, 0
      %v1807 = vsel %vm1424, %v1380, 0
      %v1810 = vsel %vm1424, %v1381, 0
      %v1813 = vsel %vm1424, %v1382, 0
      %v1816 = vsel %vm1424, %v1383, 0
      %v1819 = vsel %vm1424, %v1384, 0
      %v1822 = vsel %vm1424, %v1385, 0
      %v1825 = vsel %vm1424, %v1386, 0
      %v1828 = vsel %vm1424, %v1387, 0
      %v1831 = vsel %vm1424, %v1388, 0
      %v1834 = vsel %vm1424, %v1389, 0
      %v1837 = vsel %vm1424, %v1390, 0
      %v1840 = vsel %vm1424, %v1391, 0
      %v1843 = vsel %vm1424, %v1392, 0
      %v1846 = vsel %vm1424, %v1393, 0
      %v1849 = vsel %vm1424, %v1394, 0
      %v1852 = vsel %vm1424, %v1395, 0
      %v1855 = vsel %vm1424, %v1396, 0
      %v1858 = vsel %vm1424, %v1397, 0
      %v1861 = vsel %vm1424, %v1398, 0
      %v1864 = vsel %vm1424, %v1399, 0
      %v1867 = vsel %vm1424, %v1400, 0
      %v1870 = vsel %vm1424, %v1401, 0
      %v1873 = vsel %vm1424, %v1402, 0
      %v1876 = vsel %vm1424, %v1403, 0
      %v1879 = vsel %vm1424, %v1404, 0
      %v1882 = vsel %vm1424, %v1405, 0
      %v1885 = vsel %vm1424, %v1406, 0
      %v1888 = vsel %vm1424, %v1407, 0
      %v1891 = vsel %vm1424, %v1408, 0
      %v1894 = vsel %vm1424, %v1409, 0
      %v1897 = vsel %vm1424, %v1410, 0
      %v1900 = vsel %vm1424, %v1411, 0
      %v1903 = vsel %vm1424, %v1412, 0
      %vm1905 = vcmask 1044480
      %vm1906 = vcmask 1045504
      %v1907 = vsel %vm1905, 4294967295, 65535
      %v1908 = vsel %vm1906, %v1907, 0
      %v1910 = vand.u32 %v1422, %v1908
      %1912 = vmatprep.subr.bf16.mxu0 0
      %1913 = vmatpush1.bf16.msra.mxu0 %v1421
      %1914 = vmatprep.subr.bf16.mxu0 0
      %1915 = vmatpush1.bf16.msra.mxu0 %v1910
      %1916 = vmatprep.subr.bf16.mxu0 0
      %1917 = vmatpush1.bf16.msra.mxu0 0
      %1918 = vmatprep.subr.bf16.mxu0 0
      %1919 = vmatpush1.bf16.msra.mxu0 0
      %1920 = vmatprep.subr.bf16.mxu0 0
      %1921 = vmatpush1.bf16.msra.mxu0 0
      %1922 = vmatprep.subr.bf16.mxu0 0
      %1923 = vmatpush1.bf16.msra.mxu0 0
      %1924 = vmatprep.subr.bf16.mxu0 0
      %1925 = vmatpush1.bf16.msra.mxu0 0
      %1926 = vmatprep.subr.bf16.mxu0 0
      %1927 = vmatpush1.bf16.msra.mxu0 0
      %1928 = vmatprep.subr.bf16.mxu0 0
      %1929 = vmatpush1.bf16.msra.mxu0 0
      %1930 = vmatprep.subr.bf16.mxu0 0
      %1931 = vmatpush1.bf16.msra.mxu0 0
      %1932 = vmatprep.subr.bf16.mxu0 0
      %1933 = vmatpush1.bf16.msra.mxu0 0
      %1934 = vmatprep.subr.bf16.mxu0 0
      %1935 = vmatpush1.bf16.msra.mxu0 0
      %1936 = vmatprep.subr.bf16.mxu0 0
      %1937 = vmatpush1.bf16.msra.mxu0 0
      %1938 = vmatprep.subr.bf16.mxu0 0
      %1939 = vmatpush1.bf16.msra.mxu0 0
      %1940 = vmatprep.subr.bf16.mxu0 0
      %1941 = vmatpush1.bf16.msra.mxu0 0
      %1942 = vmatprep.subr.bf16.mxu0 0
      %1943 = vmatpush1.bf16.msra.mxu0 0
      %1944 = vmatprep.mubr.bf16.mxu0 0
      %1945 = vmatmul.mubr.bf16.gmra.mrb[0].mxu0 %v1426
      %v1946 = vpop.f32.mrb[0].mxu0
      %v1947 = vadd.f32 %v611, %v1946
      %v1948 = vpop.f32.mrb[0].mxu0
      %v1949 = vpop.f32.mrb[0].mxu0
      %v1950 = vadd.f32 %v611, %v1949
      %v1951 = vpop.f32.mrb[0].mxu0
      %1952 = vmatprep.mubr.bf16.mxu0 0
      %1953 = vmatmul.mubr.bf16.gmra.mrb[0].mxu0 %v1429
      %v1954 = vpop.f32.mrb[0].mxu0
      %v1955 = vadd.f32 %v611, %v1954
      %v1956 = vpop.f32.mrb[0].mxu0
      %v1957 = vpop.f32.mrb[0].mxu0
      %v1958 = vadd.f32 %v611, %v1957
      %v1959 = vpop.f32.mrb[0].mxu0
      %1960 = vmatprep.mubr.bf16.mxu0 0
      %1961 = vmatmul.mubr.bf16.gmra.mrb[0].mxu0 %v1432
      %v1962 = vpop.f32.mrb[0].mxu0
      %v1963 = vadd.f32 %v611, %v1962
      %v1964 = vpop.f32.mrb[0].mxu0
      %v1965 = vpop.f32.mrb[0].mxu0
      %v1966 = vadd.f32 %v611, %v1965
      %v1967 = vpop.f32.mrb[0].mxu0
      %1968 = vmatprep.mubr.bf16.mxu0 0
      %1969 = vmatmul.mubr.bf16.gmra.mrb[0].mxu0 %v1435
      %v1970 = vpop.f32.mrb[0].mxu0
      %v1971 = vadd.f32 %v611, %v1970
      %v1972 = vpop.f32.mrb[0].mxu0
      %v1973 = vpop.f32.mrb[0].mxu0
      %v1974 = vadd.f32 %v611, %v1973
      %v1975 = vpop.f32.mrb[0].mxu0
      %1976 = vmatprep.mubr.bf16.mxu0 0
      %1977 = vmatmul.mubr.bf16.gmra.mrb[0].mxu0 %v1438
      %v1978 = vpop.f32.mrb[0].mxu0
      %v1979 = vadd.f32 %v611, %v1978
      %v1980 = vpop.f32.mrb[0].mxu0
      %v1981 = vpop.f32.mrb[0].mxu0
      %v1982 = vadd.f32 %v611, %v1981
      %v1983 = vpop.f32.mrb[0].mxu0
      %1984 = vmatprep.mubr.bf16.mxu0 0
      %1985 = vmatmul.mubr.bf16.gmra.mrb[0].mxu0 %v1441
      %v1986 = vpop.f32.mrb[0].mxu0
      %v1987 = vadd.f32 %v611, %v1986
      %v1988 = vpop.f32.mrb[0].mxu0
      %v1989 = vpop.f32.mrb[0].mxu0
      %v1990 = vadd.f32 %v611, %v1989
      %v1991 = vpop.f32.mrb[0].mxu0
      %1992 = vmatprep.mubr.bf16.mxu0 0
      %1993 = vmatmul.mubr.bf16.gmra.mrb[0].mxu0 %v1444
      %v1994 = vpop.f32.mrb[0].mxu0
      %v1995 = vadd.f32 %v611, %v1994
      %v1996 = vpop.f32.mrb[0].mxu0
      %v1997 = vpop.f32.mrb[0].mxu0
      %v1998 = vadd.f32 %v611, %v1997
      %v1999 = vpop.f32.mrb[0].mxu0
      %2000 = vmatprep.mubr.bf16.mxu0 0
      %2001 = vmatmul.mubr.bf16.gmra.mrb[0].mxu0 %v1447
      %v2002 = vpop.f32.mrb[0].mxu0
      %v2003 = vadd.f32 %v611, %v2002
      %v2004 = vpop.f32.mrb[0].mxu0
      %v2005 = vpop.f32.mrb[0].mxu0
      %v2006 = vadd.f32 %v611, %v2005
      %v2007 = vpop.f32.mrb[0].mxu0
      %2008 = vmatprep.mubr.bf16.mxu0 0
      %2009 = vmatmul.mubr.bf16.gmra.mrb[0].mxu0 %v1450
      %v2010 = vpop.f32.mrb[0].mxu0
      %v2011 = vadd.f32 %v611, %v2010
      %v2012 = vpop.f32.mrb[0].mxu0
      %v2013 = vpop.f32.mrb[0].mxu0
      %v2014 = vadd.f32 %v611, %v2013
      %v2015 = vpop.f32.mrb[0].mxu0
      %2016 = vmatprep.mubr.bf16.mxu0 0
      %2017 = vmatmul.mubr.bf16.gmra.mrb[0].mxu0 %v1453
      %v2018 = vpop.f32.mrb[0].mxu0
      %v2019 = vadd.f32 %v611, %v2018
      %v2020 = vpop.f32.mrb[0].mxu0
      %v2021 = vpop.f32.mrb[0].mxu0
      %v2022 = vadd.f32 %v611, %v2021
      %v2023 = vpop.f32.mrb[0].mxu0
      %2024 = vmatprep.mubr.bf16.mxu0 0
      %2025 = vmatmul.mubr.bf16.gmra.mrb[0].mxu0 %v1456
      %v2026 = vpop.f32.mrb[0].mxu0
      %v2027 = vadd.f32 %v611, %v2026
      %v2028 = vpop.f32.mrb[0].mxu0
      %v2029 = vpop.f32.mrb[0].mxu0
      %v2030 = vadd.f32 %v611, %v2029
      %v2031 = vpop.f32.mrb[0].mxu0
      %2032 = vmatprep.mubr.bf16.mxu0 0
      %2033 = vmatmul.mubr.bf16.gmra.mrb[0].mxu0 %v1459
      %v2034 = vpop.f32.mrb[0].mxu0
      %v2035 = vadd.f32 %v611, %v2034
      %v2036 = vpop.f32.mrb[0].mxu0
      %v2037 = vpop.f32.mrb[0].mxu0
      %v2038 = vadd.f32 %v611, %v2037
      %v2039 = vpop.f32.mrb[0].mxu0
      %2040 = vmatprep.mubr.bf16.mxu0 0
      %2041 = vmatmul.mubr.bf16.gmra.mrb[0].mxu0 %v1462
      %v2042 = vpop.f32.mrb[0].mxu0
      %v2043 = vadd.f32 %v611, %v2042
      %v2044 = vpop.f32.mrb[0].mxu0
      %v2045 = vpop.f32.mrb[0].mxu0
      %v2046 = vadd.f32 %v611, %v2045
      %v2047 = vpop.f32.mrb[0].mxu0
      %2048 = vmatprep.mubr.bf16.mxu0 0
      %2049 = vmatmul.mubr.bf16.gmra.mrb[0].mxu0 %v1465
      %v2050 = vpop.f32.mrb[0].mxu0
      %v2051 = vadd.f32 %v611, %v2050
      %v2052 = vpop.f32.mrb[0].mxu0
      %v2053 = vpop.f32.mrb[0].mxu0
      %v2054 = vadd.f32 %v611, %v2053
      %v2055 = vpop.f32.mrb[0].mxu0
      %2056 = vmatprep.mubr.bf16.mxu0 0
      %2057 = vmatmul.mubr.bf16.gmra.mrb[0].mxu0 %v1468
      %v2058 = vpop.f32.mrb[0].mxu0
      %v2059 = vadd.f32 %v611, %v2058
      %v2060 = vpop.f32.mrb[0].mxu0
      %v2061 = vpop.f32.mrb[0].mxu0
      %v2062 = vadd.f32 %v611, %v2061
      %v2063 = vpop.f32.mrb[0].mxu0
      %2064 = vmatprep.mubr.bf16.mxu0 0
      %2065 = vmatmul.mubr.bf16.gmra.mrb[0].mxu0 %v1471
      %v2066 = vpop.f32.mrb[0].mxu0
      %v2067 = vadd.f32 %v611, %v2066
      %v2068 = vpop.f32.mrb[0].mxu0
      %v2069 = vpop.f32.mrb[0].mxu0
      %v2070 = vadd.f32 %v611, %v2069
      %v2071 = vpop.f32.mrb[0].mxu0
      %2072 = vmatprep.mubr.bf16.mxu0 0
      %2073 = vmatmul.mubr.bf16.gmra.mrb[0].mxu0 %v1474
      %v2074 = vpop.f32.mrb[0].mxu0
      %v2075 = vadd.f32 %v611, %v2074
      %v2076 = vpop.f32.mrb[0].mxu0
      %v2077 = vpop.f32.mrb[0].mxu0
      %v2078 = vadd.f32 %v611, %v2077
      %v2079 = vpop.f32.mrb[0].mxu0
      %2080 = vmatprep.mubr.bf16.mxu0 0
      %2081 = vmatmul.mubr.bf16.gmra.mrb[0].mxu0 %v1477
      %v2082 = vpop.f32.mrb[0].mxu0
      %v2083 = vadd.f32 %v611, %v2082
      %v2084 = vpop.f32.mrb[0].mxu0
      %v2085 = vpop.f32.mrb[0].mxu0
      %v2086 = vadd.f32 %v611, %v2085
      %v2087 = vpop.f32.mrb[0].mxu0
      %2088 = vmatprep.mubr.bf16.mxu0 0
      %2089 = vmatmul.mubr.bf16.gmra.mrb[0].mxu0 %v1480
      %v2090 = vpop.f32.mrb[0].mxu0
      %v2091 = vadd.f32 %v611, %v2090
      %v2092 = vpop.f32.mrb[0].mxu0
      %v2093 = vpop.f32.mrb[0].mxu0
      %v2094 = vadd.f32 %v611, %v2093
      %v2095 = vpop.f32.mrb[0].mxu0
      %2096 = vmatprep.mubr.bf16.mxu0 0
      %2097 = vmatmul.mubr.bf16.gmra.mrb[0].mxu0 %v1483
      %v2098 = vpop.f32.mrb[0].mxu0
      %v2099 = vadd.f32 %v611, %v2098
      %v2100 = vpop.f32.mrb[0].mxu0
      %v2101 = vpop.f32.mrb[0].mxu0
      %v2102 = vadd.f32 %v611, %v2101
      %v2103 = vpop.f32.mrb[0].mxu0
      %2104 = vmatprep.mubr.bf16.mxu0 0
      %2105 = vmatmul.mubr.bf16.gmra.mrb[0].mxu0 %v1486
      %v2106 = vpop.f32.mrb[0].mxu0
      %v2107 = vadd.f32 %v611, %v2106
      %v2108 = vpop.f32.mrb[0].mxu0
      %v2109 = vpop.f32.mrb[0].mxu0
      %v2110 = vadd.f32 %v611, %v2109
      %v2111 = vpop.f32.mrb[0].mxu0
      %2112 = vmatprep.mubr.bf16.mxu0 0
      %2113 = vmatmul.mubr.bf16.gmra.mrb[0].mxu0 %v1489
      %v2114 = vpop.f32.mrb[0].mxu0
      %v2115 = vadd.f32 %v611, %v2114
      %v2116 = vpop.f32.mrb[0].mxu0
      %v2117 = vpop.f32.mrb[0].mxu0
      %v2118 = vadd.f32 %v611, %v2117
      %v2119 = vpop.f32.mrb[0].mxu0
      %2120 = vmatprep.mubr.bf16.mxu0 0
      %2121 = vmatmul.mubr.bf16.gmra.mrb[0].mxu0 %v1492
      %v2122 = vpop.f32.mrb[0].mxu0
      %v2123 = vadd.f32 %v611, %v2122
      %v2124 = vpop.f32.mrb[0].mxu0
      %v2125 = vpop.f32.mrb[0].mxu0
      %v2126 = vadd.f32 %v611, %v2125
      %v2127 = vpop.f32.mrb[0].mxu0
      %2128 = vmatprep.mubr.bf16.mxu0 0
      %2129 = vmatmul.mubr.bf16.gmra.mrb[0].mxu0 %v1495
      %v2130 = vpop.f32.mrb[0].mxu0
      %v2131 = vadd.f32 %v611, %v2130
      %v2132 = vpop.f32.mrb[0].mxu0
      %v2133 = vpop.f32.mrb[0].mxu0
      %v2134 = vadd.f32 %v611, %v2133
      %v2135 = vpop.f32.mrb[0].mxu0
      %2136 = vmatprep.mubr.bf16.mxu0 0
      %2137 = vmatmul.mubr.bf16.gmra.mrb[0].mxu0 %v1498
      %v2138 = vpop.f32.mrb[0].mxu0
      %v2139 = vadd.f32 %v611, %v2138
      %v2140 = vpop.f32.mrb[0].mxu0
      %v2141 = vpop.f32.mrb[0].mxu0
      %v2142 = vadd.f32 %v611, %v2141
      %v2143 = vpop.f32.mrb[0].mxu0
      %2144 = vmatprep.mubr.bf16.mxu0 0
      %2145 = vmatmul.mubr.bf16.gmra.mrb[0].mxu0 %v1501
      %v2146 = vpop.f32.mrb[0].mxu0
      %v2147 = vadd.f32 %v611, %v2146
      %v2148 = vpop.f32.mrb[0].mxu0
      %v2149 = vpop.f32.mrb[0].mxu0
      %v2150 = vadd.f32 %v611, %v2149
      %v2151 = vpop.f32.mrb[0].mxu0
      %2152 = vmatprep.mubr.bf16.mxu0 0
      %2153 = vmatmul.mubr.bf16.gmra.mrb[0].mxu0 %v1504
      %v2154 = vpop.f32.mrb[0].mxu0
      %v2155 = vadd.f32 %v611, %v2154
      %v2156 = vpop.f32.mrb[0].mxu0
      %v2157 = vpop.f32.mrb[0].mxu0
      %v2158 = vadd.f32 %v611, %v2157
      %v2159 = vpop.f32.mrb[0].mxu0
      %2160 = vmatprep.mubr.bf16.mxu0 0
      %2161 = vmatmul.mubr.bf16.gmra.mrb[0].mxu0 %v1507
      %v2162 = vpop.f32.mrb[0].mxu0
      %v2163 = vadd.f32 %v611, %v2162
      %v2164 = vpop.f32.mrb[0].mxu0
      %v2165 = vpop.f32.mrb[0].mxu0
      %v2166 = vadd.f32 %v611, %v2165
      %v2167 = vpop.f32.mrb[0].mxu0
      %2168 = vmatprep.mubr.bf16.mxu0 0
      %2169 = vmatmul.mubr.bf16.gmra.mrb[0].mxu0 %v1510
      %v2170 = vpop.f32.mrb[0].mxu0
      %v2171 = vadd.f32 %v611, %v2170
      %v2172 = vpop.f32.mrb[0].mxu0
      %v2173 = vpop.f32.mrb[0].mxu0
      %v2174 = vadd.f32 %v611, %v2173
      %v2175 = vpop.f32.mrb[0].mxu0
      %2176 = vmatprep.mubr.bf16.mxu0 0
      %2177 = vmatmul.mubr.bf16.gmra.mrb[0].mxu0 %v1513
      %v2178 = vpop.f32.mrb[0].mxu0
      %v2179 = vadd.f32 %v611, %v2178
      %v2180 = vpop.f32.mrb[0].mxu0
      %v2181 = vpop.f32.mrb[0].mxu0
      %v2182 = vadd.f32 %v611, %v2181
      %v2183 = vpop.f32.mrb[0].mxu0
      %2184 = vmatprep.mubr.bf16.mxu0 0
      %2185 = vmatmul.mubr.bf16.gmra.mrb[0].mxu0 %v1516
      %v2186 = vpop.f32.mrb[0].mxu0
      %v2187 = vadd.f32 %v611, %v2186
      %v2188 = vpop.f32.mrb[0].mxu0
      %v2189 = vpop.f32.mrb[0].mxu0
      %v2190 = vadd.f32 %v611, %v2189
      %v2191 = vpop.f32.mrb[0].mxu0
      %2192 = vmatprep.mubr.bf16.mxu0 0
      %2193 = vmatmul.mubr.bf16.gmra.mrb[0].mxu0 %v1519
      %v2194 = vpop.f32.mrb[0].mxu0
      %v2195 = vadd.f32 %v611, %v2194
      %v2196 = vpop.f32.mrb[0].mxu0
      %v2197 = vpop.f32.mrb[0].mxu0
      %v2198 = vadd.f32 %v611, %v2197
      %v2199 = vpop.f32.mrb[0].mxu0
      %2200 = vmatprep.mubr.bf16.mxu0 0
      %2201 = vmatmul.mubr.bf16.gmra.mrb[0].mxu0 %v1522
      %v2202 = vpop.f32.mrb[0].mxu0
      %v2203 = vadd.f32 %v611, %v2202
      %v2204 = vpop.f32.mrb[0].mxu0
      %v2205 = vpop.f32.mrb[0].mxu0
      %v2206 = vadd.f32 %v611, %v2205
      %v2207 = vpop.f32.mrb[0].mxu0
      %2208 = vmatprep.mubr.bf16.mxu0 0
      %2209 = vmatmul.mubr.bf16.gmra.mrb[0].mxu0 %v1525
      %v2210 = vpop.f32.mrb[0].mxu0
      %v2211 = vadd.f32 %v611, %v2210
      %v2212 = vpop.f32.mrb[0].mxu0
      %v2213 = vpop.f32.mrb[0].mxu0
      %v2214 = vadd.f32 %v611, %v2213
      %v2215 = vpop.f32.mrb[0].mxu0
      %2216 = vmatprep.mubr.bf16.mxu0 0
      %2217 = vmatmul.mubr.bf16.gmra.mrb[0].mxu0 %v1528
      %v2218 = vpop.f32.mrb[0].mxu0
      %v2219 = vadd.f32 %v611, %v2218
      %v2220 = vpop.f32.mrb[0].mxu0
      %v2221 = vpop.f32.mrb[0].mxu0
      %v2222 = vadd.f32 %v611, %v2221
      %v2223 = vpop.f32.mrb[0].mxu0
      %2224 = vmatprep.mubr.bf16.mxu0 0
      %2225 = vmatmul.mubr.bf16.gmra.mrb[0].mxu0 %v1531
      %v2226 = vpop.f32.mrb[0].mxu0
      %v2227 = vadd.f32 %v611, %v2226
      %v2228 = vpop.f32.mrb[0].mxu0
      %v2229 = vpop.f32.mrb[0].mxu0
      %v2230 = vadd.f32 %v611, %v2229
      %v2231 = vpop.f32.mrb[0].mxu0
      %2232 = vmatprep.mubr.bf16.mxu0 0
      %2233 = vmatmul.mubr.bf16.gmra.mrb[0].mxu0 %v1534
      %v2234 = vpop.f32.mrb[0].mxu0
      %v2235 = vadd.f32 %v611, %v2234
      %v2236 = vpop.f32.mrb[0].mxu0
      %v2237 = vpop.f32.mrb[0].mxu0
      %v2238 = vadd.f32 %v611, %v2237
      %v2239 = vpop.f32.mrb[0].mxu0
      %2240 = vmatprep.mubr.bf16.mxu0 0
      %2241 = vmatmul.mubr.bf16.gmra.mrb[0].mxu0 %v1537
      %v2242 = vpop.f32.mrb[0].mxu0
      %v2243 = vadd.f32 %v611, %v2242
      %v2244 = vpop.f32.mrb[0].mxu0
      %v2245 = vpop.f32.mrb[0].mxu0
      %v2246 = vadd.f32 %v611, %v2245
      %v2247 = vpop.f32.mrb[0].mxu0
      %2248 = vmatprep.mubr.bf16.mxu0 0
      %2249 = vmatmul.mubr.bf16.gmra.mrb[0].mxu0 %v1540
      %v2250 = vpop.f32.mrb[0].mxu0
      %v2251 = vadd.f32 %v611, %v2250
      %v2252 = vpop.f32.mrb[0].mxu0
      %v2253 = vpop.f32.mrb[0].mxu0
      %v2254 = vadd.f32 %v611, %v2253
      %v2255 = vpop.f32.mrb[0].mxu0
      %2256 = vmatprep.mubr.bf16.mxu0 0
      %2257 = vmatmul.mubr.bf16.gmra.mrb[0].mxu0 %v1543
      %v2258 = vpop.f32.mrb[0].mxu0
      %v2259 = vadd.f32 %v611, %v2258
      %v2260 = vpop.f32.mrb[0].mxu0
      %v2261 = vpop.f32.mrb[0].mxu0
      %v2262 = vadd.f32 %v611, %v2261
      %v2263 = vpop.f32.mrb[0].mxu0
      %2264 = vmatprep.mubr.bf16.mxu0 0
      %2265 = vmatmul.mubr.bf16.gmra.mrb[0].mxu0 %v1546
      %v2266 = vpop.f32.mrb[0].mxu0
      %v2267 = vadd.f32 %v611, %v2266
      %v2268 = vpop.f32.mrb[0].mxu0
      %v2269 = vpop.f32.mrb[0].mxu0
      %v2270 = vadd.f32 %v611, %v2269
      %v2271 = vpop.f32.mrb[0].mxu0
      %2272 = vmatprep.mubr.bf16.mxu0 0
      %2273 = vmatmul.mubr.bf16.gmra.mrb[0].mxu0 %v1549
      %v2274 = vpop.f32.mrb[0].mxu0
      %v2275 = vadd.f32 %v611, %v2274
      %v2276 = vpop.f32.mrb[0].mxu0
      %v2277 = vpop.f32.mrb[0].mxu0
      %v2278 = vadd.f32 %v611, %v2277
      %v2279 = vpop.f32.mrb[0].mxu0
      %2280 = vmatprep.mubr.bf16.mxu0 0
      %2281 = vmatmul.mubr.bf16.gmra.mrb[0].mxu0 %v1552
      %v2282 = vpop.f32.mrb[0].mxu0
      %v2283 = vadd.f32 %v611, %v2282
      %v2284 = vpop.f32.mrb[0].mxu0
      %v2285 = vpop.f32.mrb[0].mxu0
      %v2286 = vadd.f32 %v611, %v2285
      %v2287 = vpop.f32.mrb[0].mxu0
      %2288 = vmatprep.mubr.bf16.mxu0 0
      %2289 = vmatmul.mubr.bf16.gmra.mrb[0].mxu0 %v1555
      %v2290 = vpop.f32.mrb[0].mxu0
      %v2291 = vadd.f32 %v611, %v2290
      %v2292 = vpop.f32.mrb[0].mxu0
      %v2293 = vpop.f32.mrb[0].mxu0
      %v2294 = vadd.f32 %v611, %v2293
      %v2295 = vpop.f32.mrb[0].mxu0
      %2296 = vmatprep.mubr.bf16.mxu0 0
      %2297 = vmatmul.mubr.bf16.gmra.mrb[0].mxu0 %v1558
      %v2298 = vpop.f32.mrb[0].mxu0
      %v2299 = vadd.f32 %v611, %v2298
      %v2300 = vpop.f32.mrb[0].mxu0
      %v2301 = vpop.f32.mrb[0].mxu0
      %v2302 = vadd.f32 %v611, %v2301
      %v2303 = vpop.f32.mrb[0].mxu0
      %2304 = vmatprep.mubr.bf16.mxu0 0
      %2305 = vmatmul.mubr.bf16.gmra.mrb[0].mxu0 %v1561
      %v2306 = vpop.f32.mrb[0].mxu0
      %v2307 = vadd.f32 %v611, %v2306
      %v2308 = vpop.f32.mrb[0].mxu0
      %v2309 = vpop.f32.mrb[0].mxu0
      %v2310 = vadd.f32 %v611, %v2309
      %v2311 = vpop.f32.mrb[0].mxu0
      %2312 = vmatprep.mubr.bf16.mxu0 0
      %2313 = vmatmul.mubr.bf16.gmra.mrb[0].mxu0 %v1564
      %v2314 = vpop.f32.mrb[0].mxu0
      %v2315 = vadd.f32 %v611, %v2314
      %v2316 = vpop.f32.mrb[0].mxu0
      %v2317 = vpop.f32.mrb[0].mxu0
      %v2318 = vadd.f32 %v611, %v2317
      %v2319 = vpop.f32.mrb[0].mxu0
      %2320 = vmatprep.mubr.bf16.mxu0 0
      %2321 = vmatmul.mubr.bf16.gmra.mrb[0].mxu0 %v1567
      %v2322 = vpop.f32.mrb[0].mxu0
      %v2323 = vadd.f32 %v611, %v2322
      %v2324 = vpop.f32.mrb[0].mxu0
      %v2325 = vpop.f32.mrb[0].mxu0
      %v2326 = vadd.f32 %v611, %v2325
      %v2327 = vpop.f32.mrb[0].mxu0
      %2328 = vmatprep.mubr.bf16.mxu0 0
      %2329 = vmatmul.mubr.bf16.gmra.mrb[0].mxu0 %v1570
      %v2330 = vpop.f32.mrb[0].mxu0
      %v2331 = vadd.f32 %v611, %v2330
      %v2332 = vpop.f32.mrb[0].mxu0
      %v2333 = vpop.f32.mrb[0].mxu0
      %v2334 = vadd.f32 %v611, %v2333
      %v2335 = vpop.f32.mrb[0].mxu0
      %2336 = vmatprep.mubr.bf16.mxu0 0
      %2337 = vmatmul.mubr.bf16.gmra.mrb[0].mxu0 %v1573
      %v2338 = vpop.f32.mrb[0].mxu0
      %v2339 = vadd.f32 %v611, %v2338
      %v2340 = vpop.f32.mrb[0].mxu0
      %v2341 = vpop.f32.mrb[0].mxu0
      %v2342 = vadd.f32 %v611, %v2341
      %v2343 = vpop.f32.mrb[0].mxu0
      %2344 = vmatprep.mubr.bf16.mxu0 0
      %2345 = vmatmul.mubr.bf16.gmra.mrb[0].mxu0 %v1576
      %v2346 = vpop.f32.mrb[0].mxu0
      %v2347 = vadd.f32 %v611, %v2346
      %v2348 = vpop.f32.mrb[0].mxu0
      %v2349 = vpop.f32.mrb[0].mxu0
      %v2350 = vadd.f32 %v611, %v2349
      %v2351 = vpop.f32.mrb[0].mxu0
      %2352 = vmatprep.mubr.bf16.mxu0 0
      %2353 = vmatmul.mubr.bf16.gmra.mrb[0].mxu0 %v1579
      %v2354 = vpop.f32.mrb[0].mxu0
      %v2355 = vadd.f32 %v611, %v2354
      %v2356 = vpop.f32.mrb[0].mxu0
      %v2357 = vpop.f32.mrb[0].mxu0
      %v2358 = vadd.f32 %v611, %v2357
      %v2359 = vpop.f32.mrb[0].mxu0
      %2360 = vmatprep.mubr.bf16.mxu0 0
      %2361 = vmatmul.mubr.bf16.gmra.mrb[0].mxu0 %v1582
      %v2362 = vpop.f32.mrb[0].mxu0
      %v2363 = vadd.f32 %v611, %v2362
      %v2364 = vpop.f32.mrb[0].mxu0
      %v2365 = vpop.f32.mrb[0].mxu0
      %v2366 = vadd.f32 %v611, %v2365
      %v2367 = vpop.f32.mrb[0].mxu0
      %2368 = vmatprep.mubr.bf16.mxu0 0
      %2369 = vmatmul.mubr.bf16.gmra.mrb[0].mxu0 %v1585
      %v2370 = vpop.f32.mrb[0].mxu0
      %v2371 = vadd.f32 %v611, %v2370
      %v2372 = vpop.f32.mrb[0].mxu0
      %v2373 = vpop.f32.mrb[0].mxu0
      %v2374 = vadd.f32 %v611, %v2373
      %v2375 = vpop.f32.mrb[0].mxu0
      %2376 = vmatprep.mubr.bf16.mxu0 0
      %2377 = vmatmul.mubr.bf16.gmra.mrb[0].mxu0 %v1588
      %v2378 = vpop.f32.mrb[0].mxu0
      %v2379 = vadd.f32 %v611, %v2378
      %v2380 = vpop.f32.mrb[0].mxu0
      %v2381 = vpop.f32.mrb[0].mxu0
      %v2382 = vadd.f32 %v611, %v2381
      %v2383 = vpop.f32.mrb[0].mxu0
      %2384 = vmatprep.mubr.bf16.mxu0 0
      %2385 = vmatmul.mubr.bf16.gmra.mrb[0].mxu0 %v1591
      %v2386 = vpop.f32.mrb[0].mxu0
      %v2387 = vadd.f32 %v611, %v2386
      %v2388 = vpop.f32.mrb[0].mxu0
      %v2389 = vpop.f32.mrb[0].mxu0
      %v2390 = vadd.f32 %v611, %v2389
      %v2391 = vpop.f32.mrb[0].mxu0
      %2392 = vmatprep.mubr.bf16.mxu0 0
      %2393 = vmatmul.mubr.bf16.gmra.mrb[0].mxu0 %v1594
      %v2394 = vpop.f32.mrb[0].mxu0
      %v2395 = vadd.f32 %v611, %v2394
      %v2396 = vpop.f32.mrb[0].mxu0
      %v2397 = vpop.f32.mrb[0].mxu0
      %v2398 = vadd.f32 %v611, %v2397
      %v2399 = vpop.f32.mrb[0].mxu0
      %2400 = vmatprep.mubr.bf16.mxu0 0
      %2401 = vmatmul.mubr.bf16.gmra.mrb[0].mxu0 %v1597
      %v2402 = vpop.f32.mrb[0].mxu0
      %v2403 = vadd.f32 %v611, %v2402
      %v2404 = vpop.f32.mrb[0].mxu0
      %v2405 = vpop.f32.mrb[0].mxu0
      %v2406 = vadd.f32 %v611, %v2405
      %v2407 = vpop.f32.mrb[0].mxu0
      %2408 = vmatprep.mubr.bf16.mxu0 0
      %2409 = vmatmul.mubr.bf16.gmra.mrb[0].mxu0 %v1600
      %v2410 = vpop.f32.mrb[0].mxu0
      %v2411 = vadd.f32 %v611, %v2410
      %v2412 = vpop.f32.mrb[0].mxu0
      %v2413 = vpop.f32.mrb[0].mxu0
      %v2414 = vadd.f32 %v611, %v2413
      %v2415 = vpop.f32.mrb[0].mxu0
      %2416 = vmatprep.mubr.bf16.mxu0 0
      %2417 = vmatmul.mubr.bf16.gmra.mrb[0].mxu0 %v1603
      %v2418 = vpop.f32.mrb[0].mxu0
      %v2419 = vadd.f32 %v611, %v2418
      %v2420 = vpop.f32.mrb[0].mxu0
      %v2421 = vpop.f32.mrb[0].mxu0
      %v2422 = vadd.f32 %v611, %v2421
      %v2423 = vpop.f32.mrb[0].mxu0
      %2424 = vmatprep.mubr.bf16.mxu0 0
      %2425 = vmatmul.mubr.bf16.gmra.mrb[0].mxu0 %v1606
      %v2426 = vpop.f32.mrb[0].mxu0
      %v2427 = vadd.f32 %v611, %v2426
      %v2428 = vpop.f32.mrb[0].mxu0
      %v2429 = vpop.f32.mrb[0].mxu0
      %v2430 = vadd.f32 %v611, %v2429
      %v2431 = vpop.f32.mrb[0].mxu0
      %2432 = vmatprep.mubr.bf16.mxu0 0
      %2433 = vmatmul.mubr.bf16.gmra.mrb[0].mxu0 %v1609
      %v2434 = vpop.f32.mrb[0].mxu0
      %v2435 = vadd.f32 %v611, %v2434
      %v2436 = vpop.f32.mrb[0].mxu0
      %v2437 = vpop.f32.mrb[0].mxu0
      %v2438 = vadd.f32 %v611, %v2437
      %v2439 = vpop.f32.mrb[0].mxu0
      %2440 = vmatprep.mubr.bf16.mxu0 0
      %2441 = vmatmul.mubr.bf16.gmra.mrb[0].mxu0 %v1612
      %v2442 = vpop.f32.mrb[0].mxu0
      %v2443 = vadd.f32 %v611, %v2442
      %v2444 = vpop.f32.mrb[0].mxu0
      %v2445 = vpop.f32.mrb[0].mxu0
      %v2446 = vadd.f32 %v611, %v2445
      %v2447 = vpop.f32.mrb[0].mxu0
      %2448 = vmatprep.mubr.bf16.mxu0 0
      %2449 = vmatmul.mubr.bf16.gmra.mrb[0].mxu0 %v1615
      %v2450 = vpop.f32.mrb[0].mxu0
      %v2451 = vadd.f32 %v611, %v2450
      %v2452 = vpop.f32.mrb[0].mxu0
      %v2453 = vpop.f32.mrb[0].mxu0
      %v2454 = vadd.f32 %v611, %v2453
      %v2455 = vpop.f32.mrb[0].mxu0
      %2456 = vmatprep.mubr.bf16.mxu0 0
      %2457 = vmatmul.mubr.bf16.gmra.mrb[0].mxu0 %v1618
      %v2458 = vpop.f32.mrb[0].mxu0
      %v2459 = vadd.f32 %v611, %v2458
      %v2460 = vpop.f32.mrb[0].mxu0
      %v2461 = vpop.f32.mrb[0].mxu0
      %v2462 = vadd.f32 %v611, %v2461
      %v2463 = vpop.f32.mrb[0].mxu0
      %2464 = vmatprep.mubr.bf16.mxu0 0
      %2465 = vmatmul.mubr.bf16.gmra.mrb[0].mxu0 %v1621
      %v2466 = vpop.f32.mrb[0].mxu0
      %v2467 = vadd.f32 %v611, %v2466
      %v2468 = vpop.f32.mrb[0].mxu0
      %v2469 = vpop.f32.mrb[0].mxu0
      %v2470 = vadd.f32 %v611, %v2469
      %v2471 = vpop.f32.mrb[0].mxu0
      %2472 = vmatprep.mubr.bf16.mxu0 0
      %2473 = vmatmul.mubr.bf16.gmra.mrb[0].mxu0 %v1624
      %v2474 = vpop.f32.mrb[0].mxu0
      %v2475 = vadd.f32 %v611, %v2474
      %v2476 = vpop.f32.mrb[0].mxu0
      %v2477 = vpop.f32.mrb[0].mxu0
      %v2478 = vadd.f32 %v611, %v2477
      %v2479 = vpop.f32.mrb[0].mxu0
      %2480 = vmatprep.mubr.bf16.mxu0 0
      %2481 = vmatmul.mubr.bf16.gmra.mrb[0].mxu0 %v1627
      %v2482 = vpop.f32.mrb[0].mxu0
      %v2483 = vadd.f32 %v611, %v2482
      %v2484 = vpop.f32.mrb[0].mxu0
      %v2485 = vpop.f32.mrb[0].mxu0
      %v2486 = vadd.f32 %v611, %v2485
      %v2487 = vpop.f32.mrb[0].mxu0
      %2488 = vmatprep.mubr.bf16.mxu0 0
      %2489 = vmatmul.mubr.bf16.gmra.mrb[0].mxu0 %v1630
      %v2490 = vpop.f32.mrb[0].mxu0
      %v2491 = vadd.f32 %v611, %v2490
      %v2492 = vpop.f32.mrb[0].mxu0
      %v2493 = vpop.f32.mrb[0].mxu0
      %v2494 = vadd.f32 %v611, %v2493
      %v2495 = vpop.f32.mrb[0].mxu0
      %2496 = vmatprep.mubr.bf16.mxu0 0
      %2497 = vmatmul.mubr.bf16.gmra.mrb[0].mxu0 %v1633
      %v2498 = vpop.f32.mrb[0].mxu0
      %v2499 = vadd.f32 %v611, %v2498
      %v2500 = vpop.f32.mrb[0].mxu0
      %v2501 = vpop.f32.mrb[0].mxu0
      %v2502 = vadd.f32 %v611, %v2501
      %v2503 = vpop.f32.mrb[0].mxu0
      %2504 = vmatprep.mubr.bf16.mxu0 0
      %2505 = vmatmul.mubr.bf16.gmra.mrb[0].mxu0 %v1636
      %v2506 = vpop.f32.mrb[0].mxu0
      %v2507 = vadd.f32 %v611, %v2506
      %v2508 = vpop.f32.mrb[0].mxu0
      %v2509 = vpop.f32.mrb[0].mxu0
      %v2510 = vadd.f32 %v611, %v2509
      %v2511 = vpop.f32.mrb[0].mxu0
      %2512 = vmatprep.mubr.bf16.mxu0 0
      %2513 = vmatmul.mubr.bf16.gmra.mrb[0].mxu0 %v1639
      %v2514 = vpop.f32.mrb[0].mxu0
      %v2515 = vadd.f32 %v611, %v2514
      %v2516 = vpop.f32.mrb[0].mxu0
      %v2517 = vpop.f32.mrb[0].mxu0
      %v2518 = vadd.f32 %v611, %v2517
      %v2519 = vpop.f32.mrb[0].mxu0
      %2520 = vmatprep.mubr.bf16.mxu0 0
      %2521 = vmatmul.mubr.bf16.gmra.mrb[0].mxu0 %v1642
      %v2522 = vpop.f32.mrb[0].mxu0
      %v2523 = vadd.f32 %v611, %v2522
      %v2524 = vpop.f32.mrb[0].mxu0
      %v2525 = vpop.f32.mrb[0].mxu0
      %v2526 = vadd.f32 %v611, %v2525
      %v2527 = vpop.f32.mrb[0].mxu0
      %2528 = vmatprep.mubr.bf16.mxu0 0
      %2529 = vmatmul.mubr.bf16.gmra.mrb[0].mxu0 %v1645
      %v2530 = vpop.f32.mrb[0].mxu0
      %v2531 = vadd.f32 %v611, %v2530
      %v2532 = vpop.f32.mrb[0].mxu0
      %v2533 = vpop.f32.mrb[0].mxu0
      %v2534 = vadd.f32 %v611, %v2533
      %v2535 = vpop.f32.mrb[0].mxu0
      %2536 = vmatprep.mubr.bf16.mxu0 0
      %2537 = vmatmul.mubr.bf16.gmra.mrb[0].mxu0 %v1648
      %v2538 = vpop.f32.mrb[0].mxu0
      %v2539 = vadd.f32 %v611, %v2538
      %v2540 = vpop.f32.mrb[0].mxu0
      %v2541 = vpop.f32.mrb[0].mxu0
      %v2542 = vadd.f32 %v611, %v2541
      %v2543 = vpop.f32.mrb[0].mxu0
      %2544 = vmatprep.mubr.bf16.mxu0 0
      %2545 = vmatmul.mubr.bf16.gmra.mrb[0].mxu0 %v1651
      %v2546 = vpop.f32.mrb[0].mxu0
      %v2547 = vadd.f32 %v611, %v2546
      %v2548 = vpop.f32.mrb[0].mxu0
      %v2549 = vpop.f32.mrb[0].mxu0
      %v2550 = vadd.f32 %v611, %v2549
      %v2551 = vpop.f32.mrb[0].mxu0
      %2552 = vmatprep.mubr.bf16.mxu0 0
      %2553 = vmatmul.mubr.bf16.gmra.mrb[0].mxu0 %v1654
      %v2554 = vpop.f32.mrb[0].mxu0
      %v2555 = vadd.f32 %v611, %v2554
      %v2556 = vpop.f32.mrb[0].mxu0
      %v2557 = vpop.f32.mrb[0].mxu0
      %v2558 = vadd.f32 %v611, %v2557
      %v2559 = vpop.f32.mrb[0].mxu0
      %2560 = vmatprep.mubr.bf16.mxu0 0
      %2561 = vmatmul.mubr.bf16.gmra.mrb[0].mxu0 %v1657
      %v2562 = vpop.f32.mrb[0].mxu0
      %v2563 = vadd.f32 %v611, %v2562
      %v2564 = vpop.f32.mrb[0].mxu0
      %v2565 = vpop.f32.mrb[0].mxu0
      %v2566 = vadd.f32 %v611, %v2565
      %v2567 = vpop.f32.mrb[0].mxu0
      %2568 = vmatprep.mubr.bf16.mxu0 0
      %2569 = vmatmul.mubr.bf16.gmra.mrb[0].mxu0 %v1660
      %v2570 = vpop.f32.mrb[0].mxu0
      %v2571 = vadd.f32 %v611, %v2570
      %v2572 = vpop.f32.mrb[0].mxu0
      %v2573 = vpop.f32.mrb[0].mxu0
      %v2574 = vadd.f32 %v611, %v2573
      %v2575 = vpop.f32.mrb[0].mxu0
      %2576 = vmatprep.mubr.bf16.mxu0 0
      %2577 = vmatmul.mubr.bf16.gmra.mrb[0].mxu0 %v1663
      %v2578 = vpop.f32.mrb[0].mxu0
      %v2579 = vadd.f32 %v611, %v2578
      %v2580 = vpop.f32.mrb[0].mxu0
      %v2581 = vpop.f32.mrb[0].mxu0
      %v2582 = vadd.f32 %v611, %v2581
      %v2583 = vpop.f32.mrb[0].mxu0
      %2584 = vmatprep.mubr.bf16.mxu0 0
      %2585 = vmatmul.mubr.bf16.gmra.mrb[0].mxu0 %v1666
      %v2586 = vpop.f32.mrb[0].mxu0
      %v2587 = vadd.f32 %v611, %v2586
      %v2588 = vpop.f32.mrb[0].mxu0
      %v2589 = vpop.f32.mrb[0].mxu0
      %v2590 = vadd.f32 %v611, %v2589
      %v2591 = vpop.f32.mrb[0].mxu0
      %2592 = vmatprep.mubr.bf16.mxu0 0
      %2593 = vmatmul.mubr.bf16.gmra.mrb[0].mxu0 %v1669
      %v2594 = vpop.f32.mrb[0].mxu0
      %v2595 = vadd.f32 %v611, %v2594
      %v2596 = vpop.f32.mrb[0].mxu0
      %v2597 = vpop.f32.mrb[0].mxu0
      %v2598 = vadd.f32 %v611, %v2597
      %v2599 = vpop.f32.mrb[0].mxu0
      %2600 = vmatprep.mubr.bf16.mxu0 0
      %2601 = vmatmul.mubr.bf16.gmra.mrb[0].mxu0 %v1672
      %v2602 = vpop.f32.mrb[0].mxu0
      %v2603 = vadd.f32 %v611, %v2602
      %v2604 = vpop.f32.mrb[0].mxu0
      %v2605 = vpop.f32.mrb[0].mxu0
      %v2606 = vadd.f32 %v611, %v2605
      %v2607 = vpop.f32.mrb[0].mxu0
      %2608 = vmatprep.mubr.bf16.mxu0 0
      %2609 = vmatmul.mubr.bf16.gmra.mrb[0].mxu0 %v1675
      %v2610 = vpop.f32.mrb[0].mxu0
      %v2611 = vadd.f32 %v611, %v2610
      %v2612 = vpop.f32.mrb[0].mxu0
      %v2613 = vpop.f32.mrb[0].mxu0
      %v2614 = vadd.f32 %v611, %v2613
      %v2615 = vpop.f32.mrb[0].mxu0
      %2616 = vmatprep.mubr.bf16.mxu0 0
      %2617 = vmatmul.mubr.bf16.gmra.mrb[0].mxu0 %v1678
      %v2618 = vpop.f32.mrb[0].mxu0
      %v2619 = vadd.f32 %v611, %v2618
      %v2620 = vpop.f32.mrb[0].mxu0
      %v2621 = vpop.f32.mrb[0].mxu0
      %v2622 = vadd.f32 %v611, %v2621
      %v2623 = vpop.f32.mrb[0].mxu0
      %2624 = vmatprep.mubr.bf16.mxu0 0
      %2625 = vmatmul.mubr.bf16.gmra.mrb[0].mxu0 %v1681
      %v2626 = vpop.f32.mrb[0].mxu0
      %v2627 = vadd.f32 %v611, %v2626
      %v2628 = vpop.f32.mrb[0].mxu0
      %v2629 = vpop.f32.mrb[0].mxu0
      %v2630 = vadd.f32 %v611, %v2629
      %v2631 = vpop.f32.mrb[0].mxu0
      %2632 = vmatprep.mubr.bf16.mxu0 0
      %2633 = vmatmul.mubr.bf16.gmra.mrb[0].mxu0 %v1684
      %v2634 = vpop.f32.mrb[0].mxu0
      %v2635 = vadd.f32 %v611, %v2634
      %v2636 = vpop.f32.mrb[0].mxu0
      %v2637 = vpop.f32.mrb[0].mxu0
      %v2638 = vadd.f32 %v611, %v2637
      %v2639 = vpop.f32.mrb[0].mxu0
      %2640 = vmatprep.mubr.bf16.mxu0 0
      %2641 = vmatmul.mubr.bf16.gmra.mrb[0].mxu0 %v1687
      %v2642 = vpop.f32.mrb[0].mxu0
      %v2643 = vadd.f32 %v611, %v2642
      %v2644 = vpop.f32.mrb[0].mxu0
      %v2645 = vpop.f32.mrb[0].mxu0
      %v2646 = vadd.f32 %v611, %v2645
      %v2647 = vpop.f32.mrb[0].mxu0
      %2648 = vmatprep.mubr.bf16.mxu0 0
      %2649 = vmatmul.mubr.bf16.gmra.mrb[0].mxu0 %v1690
      %v2650 = vpop.f32.mrb[0].mxu0
      %v2651 = vadd.f32 %v611, %v2650
      %v2652 = vpop.f32.mrb[0].mxu0
      %v2653 = vpop.f32.mrb[0].mxu0
      %v2654 = vadd.f32 %v611, %v2653
      %v2655 = vpop.f32.mrb[0].mxu0
      %2656 = vmatprep.mubr.bf16.mxu0 0
      %2657 = vmatmul.mubr.bf16.gmra.mrb[0].mxu0 %v1693
      %v2658 = vpop.f32.mrb[0].mxu0
      %v2659 = vadd.f32 %v611, %v2658
      %v2660 = vpop.f32.mrb[0].mxu0
      %v2661 = vpop.f32.mrb[0].mxu0
      %v2662 = vadd.f32 %v611, %v2661
      %v2663 = vpop.f32.mrb[0].mxu0
      %2664 = vmatprep.mubr.bf16.mxu0 0
      %2665 = vmatmul.mubr.bf16.gmra.mrb[0].mxu0 %v1696
      %v2666 = vpop.f32.mrb[0].mxu0
      %v2667 = vadd.f32 %v611, %v2666
      %v2668 = vpop.f32.mrb[0].mxu0
      %v2669 = vpop.f32.mrb[0].mxu0
      %v2670 = vadd.f32 %v611, %v2669
      %v2671 = vpop.f32.mrb[0].mxu0
      %2672 = vmatprep.mubr.bf16.mxu0 0
      %2673 = vmatmul.mubr.bf16.gmra.mrb[0].mxu0 %v1699
      %v2674 = vpop.f32.mrb[0].mxu0
      %v2675 = vadd.f32 %v611, %v2674
      %v2676 = vpop.f32.mrb[0].mxu0
      %v2677 = vpop.f32.mrb[0].mxu0
      %v2678 = vadd.f32 %v611, %v2677
      %v2679 = vpop.f32.mrb[0].mxu0
      %2680 = vmatprep.mubr.bf16.mxu0 0
      %2681 = vmatmul.mubr.bf16.gmra.mrb[0].mxu0 %v1702
      %v2682 = vpop.f32.mrb[0].mxu0
      %v2683 = vadd.f32 %v611, %v2682
      %v2684 = vpop.f32.mrb[0].mxu0
      %v2685 = vpop.f32.mrb[0].mxu0
      %v2686 = vadd.f32 %v611, %v2685
      %v2687 = vpop.f32.mrb[0].mxu0
      %2688 = vmatprep.mubr.bf16.mxu0 0
      %2689 = vmatmul.mubr.bf16.gmra.mrb[0].mxu0 %v1705
      %v2690 = vpop.f32.mrb[0].mxu0
      %v2691 = vadd.f32 %v611, %v2690
      %v2692 = vpop.f32.mrb[0].mxu0
      %v2693 = vpop.f32.mrb[0].mxu0
      %v2694 = vadd.f32 %v611, %v2693
      %v2695 = vpop.f32.mrb[0].mxu0
      %2696 = vmatprep.mubr.bf16.mxu0 0
      %2697 = vmatmul.mubr.bf16.gmra.mrb[0].mxu0 %v1708
      %v2698 = vpop.f32.mrb[0].mxu0
      %v2699 = vadd.f32 %v611, %v2698
      %v2700 = vpop.f32.mrb[0].mxu0
      %v2701 = vpop.f32.mrb[0].mxu0
      %v2702 = vadd.f32 %v611, %v2701
      %v2703 = vpop.f32.mrb[0].mxu0
      %2704 = vmatprep.mubr.bf16.mxu0 0
      %2705 = vmatmul.mubr.bf16.gmra.mrb[0].mxu0 %v1711
      %v2706 = vpop.f32.mrb[0].mxu0
      %v2707 = vadd.f32 %v611, %v2706
      %v2708 = vpop.f32.mrb[0].mxu0
      %v2709 = vpop.f32.mrb[0].mxu0
      %v2710 = vadd.f32 %v611, %v2709
      %v2711 = vpop.f32.mrb[0].mxu0
      %2712 = vmatprep.mubr.bf16.mxu0 0
      %2713 = vmatmul.mubr.bf16.gmra.mrb[0].mxu0 %v1714
      %v2714 = vpop.f32.mrb[0].mxu0
      %v2715 = vadd.f32 %v611, %v2714
      %v2716 = vpop.f32.mrb[0].mxu0
      %v2717 = vpop.f32.mrb[0].mxu0
      %v2718 = vadd.f32 %v611, %v2717
      %v2719 = vpop.f32.mrb[0].mxu0
      %2720 = vmatprep.mubr.bf16.mxu0 0
      %2721 = vmatmul.mubr.bf16.gmra.mrb[0].mxu0 %v1717
      %v2722 = vpop.f32.mrb[0].mxu0
      %v2723 = vadd.f32 %v611, %v2722
      %v2724 = vpop.f32.mrb[0].mxu0
      %v2725 = vpop.f32.mrb[0].mxu0
      %v2726 = vadd.f32 %v611, %v2725
      %v2727 = vpop.f32.mrb[0].mxu0
      %2728 = vmatprep.mubr.bf16.mxu0 0
      %2729 = vmatmul.mubr.bf16.gmra.mrb[0].mxu0 %v1720
      %v2730 = vpop.f32.mrb[0].mxu0
      %v2731 = vadd.f32 %v611, %v2730
      %v2732 = vpop.f32.mrb[0].mxu0
      %v2733 = vpop.f32.mrb[0].mxu0
      %v2734 = vadd.f32 %v611, %v2733
      %v2735 = vpop.f32.mrb[0].mxu0
      %2736 = vmatprep.mubr.bf16.mxu0 0
      %2737 = vmatmul.mubr.bf16.gmra.mrb[0].mxu0 %v1723
      %v2738 = vpop.f32.mrb[0].mxu0
      %v2739 = vadd.f32 %v611, %v2738
      %v2740 = vpop.f32.mrb[0].mxu0
      %v2741 = vpop.f32.mrb[0].mxu0
      %v2742 = vadd.f32 %v611, %v2741
      %v2743 = vpop.f32.mrb[0].mxu0
      %2744 = vmatprep.mubr.bf16.mxu0 0
      %2745 = vmatmul.mubr.bf16.gmra.mrb[0].mxu0 %v1726
      %v2746 = vpop.f32.mrb[0].mxu0
      %v2747 = vadd.f32 %v611, %v2746
      %v2748 = vpop.f32.mrb[0].mxu0
      %v2749 = vpop.f32.mrb[0].mxu0
      %v2750 = vadd.f32 %v611, %v2749
      %v2751 = vpop.f32.mrb[0].mxu0
      %2752 = vmatprep.mubr.bf16.mxu0 0
      %2753 = vmatmul.mubr.bf16.gmra.mrb[0].mxu0 %v1729
      %v2754 = vpop.f32.mrb[0].mxu0
      %v2755 = vadd.f32 %v611, %v2754
      %v2756 = vpop.f32.mrb[0].mxu0
      %v2757 = vpop.f32.mrb[0].mxu0
      %v2758 = vadd.f32 %v611, %v2757
      %v2759 = vpop.f32.mrb[0].mxu0
      %2760 = vmatprep.mubr.bf16.mxu0 0
      %2761 = vmatmul.mubr.bf16.gmra.mrb[0].mxu0 %v1732
      %v2762 = vpop.f32.mrb[0].mxu0
      %v2763 = vadd.f32 %v611, %v2762
      %v2764 = vpop.f32.mrb[0].mxu0
      %v2765 = vpop.f32.mrb[0].mxu0
      %v2766 = vadd.f32 %v611, %v2765
      %v2767 = vpop.f32.mrb[0].mxu0
      %2768 = vmatprep.mubr.bf16.mxu0 0
      %2769 = vmatmul.mubr.bf16.gmra.mrb[0].mxu0 %v1735
      %v2770 = vpop.f32.mrb[0].mxu0
      %v2771 = vadd.f32 %v611, %v2770
      %v2772 = vpop.f32.mrb[0].mxu0
      %v2773 = vpop.f32.mrb[0].mxu0
      %v2774 = vadd.f32 %v611, %v2773
      %v2775 = vpop.f32.mrb[0].mxu0
      %2776 = vmatprep.mubr.bf16.mxu0 0
      %2777 = vmatmul.mubr.bf16.gmra.mrb[0].mxu0 %v1738
      %v2778 = vpop.f32.mrb[0].mxu0
      %v2779 = vadd.f32 %v611, %v2778
      %v2780 = vpop.f32.mrb[0].mxu0
      %v2781 = vpop.f32.mrb[0].mxu0
      %v2782 = vadd.f32 %v611, %v2781
      %v2783 = vpop.f32.mrb[0].mxu0
      %2784 = vmatprep.mubr.bf16.mxu0 0
      %2785 = vmatmul.mubr.bf16.gmra.mrb[0].mxu0 %v1741
      %v2786 = vpop.f32.mrb[0].mxu0
      %v2787 = vadd.f32 %v611, %v2786
      %v2788 = vpop.f32.mrb[0].mxu0
      %v2789 = vpop.f32.mrb[0].mxu0
      %v2790 = vadd.f32 %v611, %v2789
      %v2791 = vpop.f32.mrb[0].mxu0
      %2792 = vmatprep.mubr.bf16.mxu0 0
      %2793 = vmatmul.mubr.bf16.gmra.mrb[0].mxu0 %v1744
      %v2794 = vpop.f32.mrb[0].mxu0
      %v2795 = vadd.f32 %v611, %v2794
      %v2796 = vpop.f32.mrb[0].mxu0
      %v2797 = vpop.f32.mrb[0].mxu0
      %v2798 = vadd.f32 %v611, %v2797
      %v2799 = vpop.f32.mrb[0].mxu0
      %2800 = vmatprep.mubr.bf16.mxu0 0
      %2801 = vmatmul.mubr.bf16.gmra.mrb[0].mxu0 %v1747
      %v2802 = vpop.f32.mrb[0].mxu0
      %v2803 = vadd.f32 %v611, %v2802
      %v2804 = vpop.f32.mrb[0].mxu0
      %v2805 = vpop.f32.mrb[0].mxu0
      %v2806 = vadd.f32 %v611, %v2805
      %v2807 = vpop.f32.mrb[0].mxu0
      %2808 = vmatprep.mubr.bf16.mxu0 0
      %2809 = vmatmul.mubr.bf16.gmra.mrb[0].mxu0 %v1750
      %v2810 = vpop.f32.mrb[0].mxu0
      %v2811 = vadd.f32 %v611, %v2810
      %v2812 = vpop.f32.mrb[0].mxu0
      %v2813 = vpop.f32.mrb[0].mxu0
      %v2814 = vadd.f32 %v611, %v2813
      %v2815 = vpop.f32.mrb[0].mxu0
      %2816 = vmatprep.mubr.bf16.mxu0 0
      %2817 = vmatmul.mubr.bf16.gmra.mrb[0].mxu0 %v1753
      %v2818 = vpop.f32.mrb[0].mxu0
      %v2819 = vadd.f32 %v611, %v2818
      %v2820 = vpop.f32.mrb[0].mxu0
      %v2821 = vpop.f32.mrb[0].mxu0
      %v2822 = vadd.f32 %v611, %v2821
      %v2823 = vpop.f32.mrb[0].mxu0
      %2824 = vmatprep.mubr.bf16.mxu0 0
      %2825 = vmatmul.mubr.bf16.gmra.mrb[0].mxu0 %v1756
      %v2826 = vpop.f32.mrb[0].mxu0
      %v2827 = vadd.f32 %v611, %v2826
      %v2828 = vpop.f32.mrb[0].mxu0
      %v2829 = vpop.f32.mrb[0].mxu0
      %v2830 = vadd.f32 %v611, %v2829
      %v2831 = vpop.f32.mrb[0].mxu0
      %2832 = vmatprep.mubr.bf16.mxu0 0
      %2833 = vmatmul.mubr.bf16.gmra.mrb[0].mxu0 %v1759
      %v2834 = vpop.f32.mrb[0].mxu0
      %v2835 = vadd.f32 %v611, %v2834
      %v2836 = vpop.f32.mrb[0].mxu0
      %v2837 = vpop.f32.mrb[0].mxu0
      %v2838 = vadd.f32 %v611, %v2837
      %v2839 = vpop.f32.mrb[0].mxu0
      %2840 = vmatprep.mubr.bf16.mxu0 0
      %2841 = vmatmul.mubr.bf16.gmra.mrb[0].mxu0 %v1762
      %v2842 = vpop.f32.mrb[0].mxu0
      %v2843 = vadd.f32 %v611, %v2842
      %v2844 = vpop.f32.mrb[0].mxu0
      %v2845 = vpop.f32.mrb[0].mxu0
      %v2846 = vadd.f32 %v611, %v2845
      %v2847 = vpop.f32.mrb[0].mxu0
      %2848 = vmatprep.mubr.bf16.mxu0 0
      %2849 = vmatmul.mubr.bf16.gmra.mrb[0].mxu0 %v1765
      %v2850 = vpop.f32.mrb[0].mxu0
      %v2851 = vadd.f32 %v611, %v2850
      %v2852 = vpop.f32.mrb[0].mxu0
      %v2853 = vpop.f32.mrb[0].mxu0
      %v2854 = vadd.f32 %v611, %v2853
      %v2855 = vpop.f32.mrb[0].mxu0
      %2856 = vmatprep.mubr.bf16.mxu0 0
      %2857 = vmatmul.mubr.bf16.gmra.mrb[0].mxu0 %v1768
      %v2858 = vpop.f32.mrb[0].mxu0
      %v2859 = vadd.f32 %v611, %v2858
      %v2860 = vpop.f32.mrb[0].mxu0
      %v2861 = vpop.f32.mrb[0].mxu0
      %v2862 = vadd.f32 %v611, %v2861
      %v2863 = vpop.f32.mrb[0].mxu0
      %2864 = vmatprep.mubr.bf16.mxu0 0
      %2865 = vmatmul.mubr.bf16.gmra.mrb[0].mxu0 %v1771
      %v2866 = vpop.f32.mrb[0].mxu0
      %v2867 = vadd.f32 %v611, %v2866
      %v2868 = vpop.f32.mrb[0].mxu0
      %v2869 = vpop.f32.mrb[0].mxu0
      %v2870 = vadd.f32 %v611, %v2869
      %v2871 = vpop.f32.mrb[0].mxu0
      %2872 = vmatprep.mubr.bf16.mxu0 0
      %2873 = vmatmul.mubr.bf16.gmra.mrb[0].mxu0 %v1774
      %v2874 = vpop.f32.mrb[0].mxu0
      %v2875 = vadd.f32 %v611, %v2874
      %v2876 = vpop.f32.mrb[0].mxu0
      %v2877 = vpop.f32.mrb[0].mxu0
      %v2878 = vadd.f32 %v611, %v2877
      %v2879 = vpop.f32.mrb[0].mxu0
      %2880 = vmatprep.mubr.bf16.mxu0 0
      %2881 = vmatmul.mubr.bf16.gmra.mrb[0].mxu0 %v1777
      %v2882 = vpop.f32.mrb[0].mxu0
      %v2883 = vadd.f32 %v611, %v2882
      %v2884 = vpop.f32.mrb[0].mxu0
      %v2885 = vpop.f32.mrb[0].mxu0
      %v2886 = vadd.f32 %v611, %v2885
      %v2887 = vpop.f32.mrb[0].mxu0
      %2888 = vmatprep.mubr.bf16.mxu0 0
      %2889 = vmatmul.mubr.bf16.gmra.mrb[0].mxu0 %v1780
      %v2890 = vpop.f32.mrb[0].mxu0
      %v2891 = vadd.f32 %v611, %v2890
      %v2892 = vpop.f32.mrb[0].mxu0
      %v2893 = vpop.f32.mrb[0].mxu0
      %v2894 = vadd.f32 %v611, %v2893
      %v2895 = vpop.f32.mrb[0].mxu0
      %2896 = vmatprep.mubr.bf16.mxu0 0
      %2897 = vmatmul.mubr.bf16.gmra.mrb[0].mxu0 %v1783
      %v2898 = vpop.f32.mrb[0].mxu0
      %v2899 = vadd.f32 %v611, %v2898
      %v2900 = vpop.f32.mrb[0].mxu0
      %v2901 = vpop.f32.mrb[0].mxu0
      %v2902 = vadd.f32 %v611, %v2901
      %v2903 = vpop.f32.mrb[0].mxu0
      %2904 = vmatprep.mubr.bf16.mxu0 0
      %2905 = vmatmul.mubr.bf16.gmra.mrb[0].mxu0 %v1786
      %v2906 = vpop.f32.mrb[0].mxu0
      %v2907 = vadd.f32 %v611, %v2906
      %v2908 = vpop.f32.mrb[0].mxu0
      %v2909 = vpop.f32.mrb[0].mxu0
      %v2910 = vadd.f32 %v611, %v2909
      %v2911 = vpop.f32.mrb[0].mxu0
      %2912 = vmatprep.mubr.bf16.mxu0 0
      %2913 = vmatmul.mubr.bf16.gmra.mrb[0].mxu0 %v1789
      %v2914 = vpop.f32.mrb[0].mxu0
      %v2915 = vadd.f32 %v611, %v2914
      %v2916 = vpop.f32.mrb[0].mxu0
      %v2917 = vpop.f32.mrb[0].mxu0
      %v2918 = vadd.f32 %v611, %v2917
      %v2919 = vpop.f32.mrb[0].mxu0
      %2920 = vmatprep.mubr.bf16.mxu0 0
      %2921 = vmatmul.mubr.bf16.gmra.mrb[0].mxu0 %v1792
      %v2922 = vpop.f32.mrb[0].mxu0
      %v2923 = vadd.f32 %v611, %v2922
      %v2924 = vpop.f32.mrb[0].mxu0
      %v2925 = vpop.f32.mrb[0].mxu0
      %v2926 = vadd.f32 %v611, %v2925
      %v2927 = vpop.f32.mrb[0].mxu0
      %2928 = vmatprep.mubr.bf16.mxu0 0
      %2929 = vmatmul.mubr.bf16.gmra.mrb[0].mxu0 %v1795
      %v2930 = vpop.f32.mrb[0].mxu0
      %v2931 = vadd.f32 %v611, %v2930
      %v2932 = vpop.f32.mrb[0].mxu0
      %v2933 = vpop.f32.mrb[0].mxu0
      %v2934 = vadd.f32 %v611, %v2933
      %v2935 = vpop.f32.mrb[0].mxu0
      %2936 = vmatprep.mubr.bf16.mxu0 0
      %2937 = vmatmul.mubr.bf16.gmra.mrb[0].mxu0 %v1798
      %v2938 = vpop.f32.mrb[0].mxu0
      %v2939 = vadd.f32 %v611, %v2938
      %v2940 = vpop.f32.mrb[0].mxu0
      %v2941 = vpop.f32.mrb[0].mxu0
      %v2942 = vadd.f32 %v611, %v2941
      %v2943 = vpop.f32.mrb[0].mxu0
      %2944 = vmatprep.mubr.bf16.mxu0 0
      %2945 = vmatmul.mubr.bf16.gmra.mrb[0].mxu0 %v1801
      %v2946 = vpop.f32.mrb[0].mxu0
      %v2947 = vadd.f32 %v611, %v2946
      %v2948 = vpop.f32.mrb[0].mxu0
      %v2949 = vpop.f32.mrb[0].mxu0
      %v2950 = vadd.f32 %v611, %v2949
      %v2951 = vpop.f32.mrb[0].mxu0
      %2952 = vmatprep.mubr.bf16.mxu0 0
      %2953 = vmatmul.mubr.bf16.gmra.mrb[0].mxu0 %v1804
      %v2954 = vpop.f32.mrb[0].mxu0
      %v2955 = vadd.f32 %v611, %v2954
      %v2956 = vpop.f32.mrb[0].mxu0
      %v2957 = vpop.f32.mrb[0].mxu0
      %v2958 = vadd.f32 %v611, %v2957
      %v2959 = vpop.f32.mrb[0].mxu0
      %2960 = vmatprep.mubr.bf16.mxu0 0
      %2961 = vmatmul.mubr.bf16.gmra.mrb[0].mxu0 %v1807
      %v2962 = vpop.f32.mrb[0].mxu0
      %v2963 = vadd.f32 %v611, %v2962
      %v2964 = vpop.f32.mrb[0].mxu0
      %v2965 = vpop.f32.mrb[0].mxu0
      %v2966 = vadd.f32 %v611, %v2965
      %v2967 = vpop.f32.mrb[0].mxu0
      %2968 = vmatprep.mubr.bf16.mxu0 0
      %2969 = vmatmul.mubr.bf16.gmra.mrb[0].mxu0 %v1810
      %v2970 = vpop.f32.mrb[0].mxu0
      %v2971 = vadd.f32 %v611, %v2970
      %v2972 = vpop.f32.mrb[0].mxu0
      %v2973 = vpop.f32.mrb[0].mxu0
      %v2974 = vadd.f32 %v611, %v2973
      %v2975 = vpop.f32.mrb[0].mxu0
      %2976 = vmatprep.mubr.bf16.mxu0 0
      %2977 = vmatmul.mubr.bf16.gmra.mrb[0].mxu0 %v1813
      %v2978 = vpop.f32.mrb[0].mxu0
      %v2979 = vadd.f32 %v611, %v2978
      %v2980 = vpop.f32.mrb[0].mxu0
      %v2981 = vpop.f32.mrb[0].mxu0
      %v2982 = vadd.f32 %v611, %v2981
      %v2983 = vpop.f32.mrb[0].mxu0
      %2984 = vmatprep.mubr.bf16.mxu0 0
      %2985 = vmatmul.mubr.bf16.gmra.mrb[0].mxu0 %v1816
      %v2986 = vpop.f32.mrb[0].mxu0
      %v2987 = vadd.f32 %v611, %v2986
      %v2988 = vpop.f32.mrb[0].mxu0
      %v2989 = vpop.f32.mrb[0].mxu0
      %v2990 = vadd.f32 %v611, %v2989
      %v2991 = vpop.f32.mrb[0].mxu0
      %2992 = vmatprep.mubr.bf16.mxu0 0
      %2993 = vmatmul.mubr.bf16.gmra.mrb[0].mxu0 %v1819
      %v2994 = vpop.f32.mrb[0].mxu0
      %v2995 = vadd.f32 %v611, %v2994
      %v2996 = vpop.f32.mrb[0].mxu0
      %v2997 = vpop.f32.mrb[0].mxu0
      %v2998 = vadd.f32 %v611, %v2997
      %v2999 = vpop.f32.mrb[0].mxu0
      %3000 = vmatprep.mubr.bf16.mxu0 0
      %3001 = vmatmul.mubr.bf16.gmra.mrb[0].mxu0 %v1822
      %v3002 = vpop.f32.mrb[0].mxu0
      %v3003 = vadd.f32 %v611, %v3002
      %v3004 = vpop.f32.mrb[0].mxu0
      %v3005 = vpop.f32.mrb[0].mxu0
      %v3006 = vadd.f32 %v611, %v3005
      %v3007 = vpop.f32.mrb[0].mxu0
      %3008 = vmatprep.mubr.bf16.mxu0 0
      %3009 = vmatmul.mubr.bf16.gmra.mrb[0].mxu0 %v1825
      %v3010 = vpop.f32.mrb[0].mxu0
      %v3011 = vadd.f32 %v611, %v3010
      %v3012 = vpop.f32.mrb[0].mxu0
      %v3013 = vpop.f32.mrb[0].mxu0
      %v3014 = vadd.f32 %v611, %v3013
      %v3015 = vpop.f32.mrb[0].mxu0
      %3016 = vmatprep.mubr.bf16.mxu0 0
      %3017 = vmatmul.mubr.bf16.gmra.mrb[0].mxu0 %v1828
      %v3018 = vpop.f32.mrb[0].mxu0
      %v3019 = vadd.f32 %v611, %v3018
      %v3020 = vpop.f32.mrb[0].mxu0
      %v3021 = vpop.f32.mrb[0].mxu0
      %v3022 = vadd.f32 %v611, %v3021
      %v3023 = vpop.f32.mrb[0].mxu0
      %3024 = vmatprep.mubr.bf16.mxu0 0
      %3025 = vmatmul.mubr.bf16.gmra.mrb[0].mxu0 %v1831
      %v3026 = vpop.f32.mrb[0].mxu0
      %v3027 = vadd.f32 %v611, %v3026
      %v3028 = vpop.f32.mrb[0].mxu0
      %v3029 = vpop.f32.mrb[0].mxu0
      %v3030 = vadd.f32 %v611, %v3029
      %v3031 = vpop.f32.mrb[0].mxu0
      %3032 = vmatprep.mubr.bf16.mxu0 0
      %3033 = vmatmul.mubr.bf16.gmra.mrb[0].mxu0 %v1834
      %v3034 = vpop.f32.mrb[0].mxu0
      %v3035 = vadd.f32 %v611, %v3034
      %v3036 = vpop.f32.mrb[0].mxu0
      %v3037 = vpop.f32.mrb[0].mxu0
      %v3038 = vadd.f32 %v611, %v3037
      %v3039 = vpop.f32.mrb[0].mxu0
      %3040 = vmatprep.mubr.bf16.mxu0 0
      %3041 = vmatmul.mubr.bf16.gmra.mrb[0].mxu0 %v1837
      %v3042 = vpop.f32.mrb[0].mxu0
      %v3043 = vadd.f32 %v611, %v3042
      %v3044 = vpop.f32.mrb[0].mxu0
      %v3045 = vpop.f32.mrb[0].mxu0
      %v3046 = vadd.f32 %v611, %v3045
      %v3047 = vpop.f32.mrb[0].mxu0
      %3048 = vmatprep.mubr.bf16.mxu0 0
      %3049 = vmatmul.mubr.bf16.gmra.mrb[0].mxu0 %v1840
      %v3050 = vpop.f32.mrb[0].mxu0
      %v3051 = vadd.f32 %v611, %v3050
      %v3052 = vpop.f32.mrb[0].mxu0
      %v3053 = vpop.f32.mrb[0].mxu0
      %v3054 = vadd.f32 %v611, %v3053
      %v3055 = vpop.f32.mrb[0].mxu0
      %3056 = vmatprep.mubr.bf16.mxu0 0
      %3057 = vmatmul.mubr.bf16.gmra.mrb[0].mxu0 %v1843
      %v3058 = vpop.f32.mrb[0].mxu0
      %v3059 = vadd.f32 %v611, %v3058
      %v3060 = vpop.f32.mrb[0].mxu0
      %v3061 = vpop.f32.mrb[0].mxu0
      %v3062 = vadd.f32 %v611, %v3061
      %v3063 = vpop.f32.mrb[0].mxu0
      %3064 = vmatprep.mubr.bf16.mxu0 0
      %3065 = vmatmul.mubr.bf16.gmra.mrb[0].mxu0 %v1846
      %v3066 = vpop.f32.mrb[0].mxu0
      %v3067 = vadd.f32 %v611, %v3066
      %v3068 = vpop.f32.mrb[0].mxu0
      %v3069 = vpop.f32.mrb[0].mxu0
      %v3070 = vadd.f32 %v611, %v3069
      %v3071 = vpop.f32.mrb[0].mxu0
      %3072 = vmatprep.mubr.bf16.mxu0 0
      %3073 = vmatmul.mubr.bf16.gmra.mrb[0].mxu0 %v1849
      %v3074 = vpop.f32.mrb[0].mxu0
      %v3075 = vadd.f32 %v611, %v3074
      %v3076 = vpop.f32.mrb[0].mxu0
      %v3077 = vpop.f32.mrb[0].mxu0
      %v3078 = vadd.f32 %v611, %v3077
      %v3079 = vpop.f32.mrb[0].mxu0
      %3080 = vmatprep.mubr.bf16.mxu0 0
      %3081 = vmatmul.mubr.bf16.gmra.mrb[0].mxu0 %v1852
      %v3082 = vpop.f32.mrb[0].mxu0
      %v3083 = vadd.f32 %v611, %v3082
      %v3084 = vpop.f32.mrb[0].mxu0
      %v3085 = vpop.f32.mrb[0].mxu0
      %v3086 = vadd.f32 %v611, %v3085
      %v3087 = vpop.f32.mrb[0].mxu0
      %3088 = vmatprep.mubr.bf16.mxu0 0
      %3089 = vmatmul.mubr.bf16.gmra.mrb[0].mxu0 %v1855
      %v3090 = vpop.f32.mrb[0].mxu0
      %v3091 = vadd.f32 %v611, %v3090
      %v3092 = vpop.f32.mrb[0].mxu0
      %v3093 = vpop.f32.mrb[0].mxu0
      %v3094 = vadd.f32 %v611, %v3093
      %v3095 = vpop.f32.mrb[0].mxu0
      %3096 = vmatprep.mubr.bf16.mxu0 0
      %3097 = vmatmul.mubr.bf16.gmra.mrb[0].mxu0 %v1858
      %v3098 = vpop.f32.mrb[0].mxu0
      %v3099 = vadd.f32 %v611, %v3098
      %v3100 = vpop.f32.mrb[0].mxu0
      %v3101 = vpop.f32.mrb[0].mxu0
      %v3102 = vadd.f32 %v611, %v3101
      %v3103 = vpop.f32.mrb[0].mxu0
      %3104 = vmatprep.mubr.bf16.mxu0 0
      %3105 = vmatmul.mubr.bf16.gmra.mrb[0].mxu0 %v1861
      %v3106 = vpop.f32.mrb[0].mxu0
      %v3107 = vadd.f32 %v611, %v3106
      %v3108 = vpop.f32.mrb[0].mxu0
      %v3109 = vpop.f32.mrb[0].mxu0
      %v3110 = vadd.f32 %v611, %v3109
      %v3111 = vpop.f32.mrb[0].mxu0
      %3112 = vmatprep.mubr.bf16.mxu0 0
      %3113 = vmatmul.mubr.bf16.gmra.mrb[0].mxu0 %v1864
      %v3114 = vpop.f32.mrb[0].mxu0
      %v3115 = vadd.f32 %v611, %v3114
      %v3116 = vpop.f32.mrb[0].mxu0
      %v3117 = vpop.f32.mrb[0].mxu0
      %v3118 = vadd.f32 %v611, %v3117
      %v3119 = vpop.f32.mrb[0].mxu0
      %3120 = vmatprep.mubr.bf16.mxu0 0
      %3121 = vmatmul.mubr.bf16.gmra.mrb[0].mxu0 %v1867
      %v3122 = vpop.f32.mrb[0].mxu0
      %v3123 = vadd.f32 %v611, %v3122
      %v3124 = vpop.f32.mrb[0].mxu0
      %v3125 = vpop.f32.mrb[0].mxu0
      %v3126 = vadd.f32 %v611, %v3125
      %v3127 = vpop.f32.mrb[0].mxu0
      %3128 = vmatprep.mubr.bf16.mxu0 0
      %3129 = vmatmul.mubr.bf16.gmra.mrb[0].mxu0 %v1870
      %v3130 = vpop.f32.mrb[0].mxu0
      %v3131 = vadd.f32 %v611, %v3130
      %v3132 = vpop.f32.mrb[0].mxu0
      %v3133 = vpop.f32.mrb[0].mxu0
      %v3134 = vadd.f32 %v611, %v3133
      %v3135 = vpop.f32.mrb[0].mxu0
      %3136 = vmatprep.mubr.bf16.mxu0 0
      %3137 = vmatmul.mubr.bf16.gmra.mrb[0].mxu0 %v1873
      %v3138 = vpop.f32.mrb[0].mxu0
      %v3139 = vadd.f32 %v611, %v3138
      %v3140 = vpop.f32.mrb[0].mxu0
      %v3141 = vpop.f32.mrb[0].mxu0
      %v3142 = vadd.f32 %v611, %v3141
      %v3143 = vpop.f32.mrb[0].mxu0
      %3144 = vmatprep.mubr.bf16.mxu0 0
      %3145 = vmatmul.mubr.bf16.gmra.mrb[0].mxu0 %v1876
      %v3146 = vpop.f32.mrb[0].mxu0
      %v3147 = vadd.f32 %v611, %v3146
      %v3148 = vpop.f32.mrb[0].mxu0
      %v3149 = vpop.f32.mrb[0].mxu0
      %v3150 = vadd.f32 %v611, %v3149
      %v3151 = vpop.f32.mrb[0].mxu0
      %3152 = vmatprep.mubr.bf16.mxu0 0
      %3153 = vmatmul.mubr.bf16.gmra.mrb[0].mxu0 %v1879
      %v3154 = vpop.f32.mrb[0].mxu0
      %v3155 = vadd.f32 %v611, %v3154
      %v3156 = vpop.f32.mrb[0].mxu0
      %v3157 = vpop.f32.mrb[0].mxu0
      %v3158 = vadd.f32 %v611, %v3157
      %v3159 = vpop.f32.mrb[0].mxu0
      %3160 = vmatprep.mubr.bf16.mxu0 0
      %3161 = vmatmul.mubr.bf16.gmra.mrb[0].mxu0 %v1882
      %v3162 = vpop.f32.mrb[0].mxu0
      %v3163 = vadd.f32 %v611, %v3162
      %v3164 = vpop.f32.mrb[0].mxu0
      %v3165 = vpop.f32.mrb[0].mxu0
      %v3166 = vadd.f32 %v611, %v3165
      %v3167 = vpop.f32.mrb[0].mxu0
      %3168 = vmatprep.mubr.bf16.mxu0 0
      %3169 = vmatmul.mubr.bf16.gmra.mrb[0].mxu0 %v1885
      %v3170 = vpop.f32.mrb[0].mxu0
      %v3171 = vadd.f32 %v611, %v3170
      %v3172 = vpop.f32.mrb[0].mxu0
      %v3173 = vpop.f32.mrb[0].mxu0
      %v3174 = vadd.f32 %v611, %v3173
      %v3175 = vpop.f32.mrb[0].mxu0
      %3176 = vmatprep.mubr.bf16.mxu0 0
      %3177 = vmatmul.mubr.bf16.gmra.mrb[0].mxu0 %v1888
      %v3178 = vpop.f32.mrb[0].mxu0
      %v3179 = vadd.f32 %v611, %v3178
      %v3180 = vpop.f32.mrb[0].mxu0
      %v3181 = vpop.f32.mrb[0].mxu0
      %v3182 = vadd.f32 %v611, %v3181
      %v3183 = vpop.f32.mrb[0].mxu0
      %3184 = vmatprep.mubr.bf16.mxu0 0
      %3185 = vmatmul.mubr.bf16.gmra.mrb[0].mxu0 %v1891
      %v3186 = vpop.f32.mrb[0].mxu0
      %v3187 = vadd.f32 %v611, %v3186
      %v3188 = vpop.f32.mrb[0].mxu0
      %v3189 = vpop.f32.mrb[0].mxu0
      %v3190 = vadd.f32 %v611, %v3189
      %v3191 = vpop.f32.mrb[0].mxu0
      %3192 = vmatprep.mubr.bf16.mxu0 0
      %3193 = vmatmul.mubr.bf16.gmra.mrb[0].mxu0 %v1894
      %v3194 = vpop.f32.mrb[0].mxu0
      %v3195 = vadd.f32 %v611, %v3194
      %v3196 = vpop.f32.mrb[0].mxu0
      %v3197 = vpop.f32.mrb[0].mxu0
      %v3198 = vadd.f32 %v611, %v3197
      %v3199 = vpop.f32.mrb[0].mxu0
      %3200 = vmatprep.mubr.bf16.mxu0 0
      %3201 = vmatmul.mubr.bf16.gmra.mrb[0].mxu0 %v1897
      %v3202 = vpop.f32.mrb[0].mxu0
      %v3203 = vadd.f32 %v611, %v3202
      %v3204 = vpop.f32.mrb[0].mxu0
      %v3205 = vpop.f32.mrb[0].mxu0
      %v3206 = vadd.f32 %v611, %v3205
      %v3207 = vpop.f32.mrb[0].mxu0
      %3208 = vmatprep.mubr.bf16.mxu0 0
      %3209 = vmatmul.mubr.bf16.gmra.mrb[0].mxu0 %v1900
      %v3210 = vpop.f32.mrb[0].mxu0
      %v3211 = vadd.f32 %v611, %v3210
      %v3212 = vpop.f32.mrb[0].mxu0
      %v3213 = vpop.f32.mrb[0].mxu0
      %v3214 = vadd.f32 %v611, %v3213
      %v3215 = vpop.f32.mrb[0].mxu0
      %3216 = vmatprep.mubr.bf16.mxu0 0
      %3217 = vmatmul.mubr.bf16.gmra.mrb[0].mxu0 %v1903
      %v3218 = vpop.f32.mrb[0].mxu0
      %v3219 = vadd.f32 %v611, %v3218
      %v3220 = vpop.f32.mrb[0].mxu0
      %v3221 = vpop.f32.mrb[0].mxu0
      %v3222 = vadd.f32 %v611, %v3221
      %v3223 = vpop.f32.mrb[0].mxu0
      %3224 = vdwg.mxu0
      %v3225 = vmax.f32 %v1947, 0.0
      %v3226 = vmax.f32 %v1950, 0.0
      %v3227 = vmax.f32 %v1955, 0.0
      %v3228 = vmax.f32 %v1958, 0.0
      %v3229 = vmax.f32 %v1963, 0.0
      %v3230 = vmax.f32 %v1966, 0.0
      %v3231 = vmax.f32 %v1971, 0.0
      %v3232 = vmax.f32 %v1974, 0.0
      %v3233 = vmax.f32 %v1979, 0.0
      %v3234 = vmax.f32 %v1982, 0.0
      %v3235 = vmax.f32 %v1987, 0.0
      %v3236 = vmax.f32 %v1990, 0.0
      %v3237 = vmax.f32 %v1995, 0.0
      %v3238 = vmax.f32 %v1998, 0.0
      %v3239 = vmax.f32 %v2003, 0.0
      %v3240 = vmax.f32 %v2006, 0.0
      %v3241 = vmax.f32 %v2011, 0.0
      %v3242 = vmax.f32 %v2014, 0.0
      %v3243 = vmax.f32 %v2019, 0.0
      %v3244 = vmax.f32 %v2022, 0.0
      %v3245 = vmax.f32 %v2027, 0.0
      %v3246 = vmax.f32 %v2030, 0.0
      %v3247 = vmax.f32 %v2035, 0.0
      %v3248 = vmax.f32 %v2038, 0.0
      %v3249 = vmax.f32 %v2043, 0.0
      %v3250 = vmax.f32 %v2046, 0.0
      %v3251 = vmax.f32 %v2051, 0.0
      %v3252 = vmax.f32 %v2054, 0.0
      %v3253 = vmax.f32 %v2059, 0.0
      %v3254 = vmax.f32 %v2062, 0.0
      %v3255 = vmax.f32 %v2067, 0.0
      %v3256 = vmax.f32 %v2070, 0.0
      %v3257 = vmax.f32 %v2075, 0.0
      %v3258 = vmax.f32 %v2078, 0.0
      %v3259 = vmax.f32 %v2083, 0.0
      %v3260 = vmax.f32 %v2086, 0.0
      %v3261 = vmax.f32 %v2091, 0.0
      %v3262 = vmax.f32 %v2094, 0.0
      %v3263 = vmax.f32 %v2099, 0.0
      %v3264 = vmax.f32 %v2102, 0.0
      %v3265 = vmax.f32 %v2107, 0.0
      %v3266 = vmax.f32 %v2110, 0.0
      %v3267 = vmax.f32 %v2115, 0.0
      %v3268 = vmax.f32 %v2118, 0.0
      %v3269 = vmax.f32 %v2123, 0.0
      %v3270 = vmax.f32 %v2126, 0.0
      %v3271 = vmax.f32 %v2131, 0.0
      %v3272 = vmax.f32 %v2134, 0.0
      %v3273 = vmax.f32 %v2139, 0.0
      %v3274 = vmax.f32 %v2142, 0.0
      %v3275 = vmax.f32 %v2147, 0.0
      %v3276 = vmax.f32 %v2150, 0.0
      %v3277 = vmax.f32 %v2155, 0.0
      %v3278 = vmax.f32 %v2158, 0.0
      %v3279 = vmax.f32 %v2163, 0.0
      %v3280 = vmax.f32 %v2166, 0.0
      %v3281 = vmax.f32 %v2171, 0.0
      %v3282 = vmax.f32 %v2174, 0.0
      %v3283 = vmax.f32 %v2179, 0.0
      %v3284 = vmax.f32 %v2182, 0.0
      %v3285 = vmax.f32 %v2187, 0.0
      %v3286 = vmax.f32 %v2190, 0.0
      %v3287 = vmax.f32 %v2195, 0.0
      %v3288 = vmax.f32 %v2198, 0.0
      %v3289 = vmax.f32 %v2203, 0.0
      %v3290 = vmax.f32 %v2206, 0.0
      %v3291 = vmax.f32 %v2211, 0.0
      %v3292 = vmax.f32 %v2214, 0.0
      %v3293 = vmax.f32 %v2219, 0.0
      %v3294 = vmax.f32 %v2222, 0.0
      %v3295 = vmax.f32 %v2227, 0.0
      %v3296 = vmax.f32 %v2230, 0.0
      %v3297 = vmax.f32 %v2235, 0.0
      %v3298 = vmax.f32 %v2238, 0.0
      %v3299 = vmax.f32 %v2243, 0.0
      %v3300 = vmax.f32 %v2246, 0.0
      %v3301 = vmax.f32 %v2251, 0.0
      %v3302 = vmax.f32 %v2254, 0.0
      %v3303 = vmax.f32 %v2259, 0.0
      %v3304 = vmax.f32 %v2262, 0.0
      %v3305 = vmax.f32 %v2267, 0.0
      %v3306 = vmax.f32 %v2270, 0.0
      %v3307 = vmax.f32 %v2275, 0.0
      %v3308 = vmax.f32 %v2278, 0.0
      %v3309 = vmax.f32 %v2283, 0.0
      %v3310 = vmax.f32 %v2286, 0.0
      %v3311 = vmax.f32 %v2291, 0.0
      %v3312 = vmax.f32 %v2294, 0.0
      %v3313 = vmax.f32 %v2299, 0.0
      %v3314 = vmax.f32 %v2302, 0.0
      %v3315 = vmax.f32 %v2307, 0.0
      %v3316 = vmax.f32 %v2310, 0.0
      %v3317 = vmax.f32 %v2315, 0.0
      %v3318 = vmax.f32 %v2318, 0.0
      %v3319 = vmax.f32 %v2323, 0.0
      %v3320 = vmax.f32 %v2326, 0.0
      %v3321 = vmax.f32 %v2331, 0.0
      %v3322 = vmax.f32 %v2334, 0.0
      %v3323 = vmax.f32 %v2339, 0.0
      %v3324 = vmax.f32 %v2342, 0.0
      %v3325 = vmax.f32 %v2347, 0.0
      %v3326 = vmax.f32 %v2350, 0.0
      %v3327 = vmax.f32 %v2355, 0.0
      %v3328 = vmax.f32 %v2358, 0.0
      %v3329 = vmax.f32 %v2363, 0.0
      %v3330 = vmax.f32 %v2366, 0.0
      %v3331 = vmax.f32 %v2371, 0.0
      %v3332 = vmax.f32 %v2374, 0.0
      %v3333 = vmax.f32 %v2379, 0.0
      %v3334 = vmax.f32 %v2382, 0.0
      %v3335 = vmax.f32 %v2387, 0.0
      %v3336 = vmax.f32 %v2390, 0.0
      %v3337 = vmax.f32 %v2395, 0.0
      %v3338 = vmax.f32 %v2398, 0.0
      %v3339 = vmax.f32 %v2403, 0.0
      %v3340 = vmax.f32 %v2406, 0.0
      %v3341 = vmax.f32 %v2411, 0.0
      %v3342 = vmax.f32 %v2414, 0.0
      %v3343 = vmax.f32 %v2419, 0.0
      %v3344 = vmax.f32 %v2422, 0.0
      %v3345 = vmax.f32 %v2427, 0.0
      %v3346 = vmax.f32 %v2430, 0.0
      %v3347 = vmax.f32 %v2435, 0.0
      %v3348 = vmax.f32 %v2438, 0.0
      %v3349 = vmax.f32 %v2443, 0.0
      %v3350 = vmax.f32 %v2446, 0.0
      %v3351 = vmax.f32 %v2451, 0.0
      %v3352 = vmax.f32 %v2454, 0.0
      %v3353 = vmax.f32 %v2459, 0.0
      %v3354 = vmax.f32 %v2462, 0.0
      %v3355 = vmax.f32 %v2467, 0.0
      %v3356 = vmax.f32 %v2470, 0.0
      %v3357 = vmax.f32 %v2475, 0.0
      %v3358 = vmax.f32 %v2478, 0.0
      %v3359 = vmax.f32 %v2483, 0.0
      %v3360 = vmax.f32 %v2486, 0.0
      %v3361 = vmax.f32 %v2491, 0.0
      %v3362 = vmax.f32 %v2494, 0.0
      %v3363 = vmax.f32 %v2499, 0.0
      %v3364 = vmax.f32 %v2502, 0.0
      %v3365 = vmax.f32 %v2507, 0.0
      %v3366 = vmax.f32 %v2510, 0.0
      %v3367 = vmax.f32 %v2515, 0.0
      %v3368 = vmax.f32 %v2518, 0.0
      %v3369 = vmax.f32 %v2523, 0.0
      %v3370 = vmax.f32 %v2526, 0.0
      %v3371 = vmax.f32 %v2531, 0.0
      %v3372 = vmax.f32 %v2534, 0.0
      %v3373 = vmax.f32 %v2539, 0.0
      %v3374 = vmax.f32 %v2542, 0.0
      %v3375 = vmax.f32 %v2547, 0.0
      %v3376 = vmax.f32 %v2550, 0.0
      %v3377 = vmax.f32 %v2555, 0.0
      %v3378 = vmax.f32 %v2558, 0.0
      %v3379 = vmax.f32 %v2563, 0.0
      %v3380 = vmax.f32 %v2566, 0.0
      %v3381 = vmax.f32 %v2571, 0.0
      %v3382 = vmax.f32 %v2574, 0.0
      %v3383 = vmax.f32 %v2579, 0.0
      %v3384 = vmax.f32 %v2582, 0.0
      %v3385 = vmax.f32 %v2587, 0.0
      %v3386 = vmax.f32 %v2590, 0.0
      %v3387 = vmax.f32 %v2595, 0.0
      %v3388 = vmax.f32 %v2598, 0.0
      %v3389 = vmax.f32 %v2603, 0.0
      %v3390 = vmax.f32 %v2606, 0.0
      %v3391 = vmax.f32 %v2611, 0.0
      %v3392 = vmax.f32 %v2614, 0.0
      %v3393 = vmax.f32 %v2619, 0.0
      %v3394 = vmax.f32 %v2622, 0.0
      %v3395 = vmax.f32 %v2627, 0.0
      %v3396 = vmax.f32 %v2630, 0.0
      %v3397 = vmax.f32 %v2635, 0.0
      %v3398 = vmax.f32 %v2638, 0.0
      %v3399 = vmax.f32 %v2643, 0.0
      %v3400 = vmax.f32 %v2646, 0.0
      %v3401 = vmax.f32 %v2651, 0.0
      %v3402 = vmax.f32 %v2654, 0.0
      %v3403 = vmax.f32 %v2659, 0.0
      %v3404 = vmax.f32 %v2662, 0.0
      %v3405 = vmax.f32 %v2667, 0.0
      %v3406 = vmax.f32 %v2670, 0.0
      %v3407 = vmax.f32 %v2675, 0.0
      %v3408 = vmax.f32 %v2678, 0.0
      %v3409 = vmax.f32 %v2683, 0.0
      %v3410 = vmax.f32 %v2686, 0.0
      %v3411 = vmax.f32 %v2691, 0.0
      %v3412 = vmax.f32 %v2694, 0.0
      %v3413 = vmax.f32 %v2699, 0.0
      %v3414 = vmax.f32 %v2702, 0.0
      %v3415 = vmax.f32 %v2707, 0.0
      %v3416 = vmax.f32 %v2710, 0.0
      %v3417 = vmax.f32 %v2715, 0.0
      %v3418 = vmax.f32 %v2718, 0.0
      %v3419 = vmax.f32 %v2723, 0.0
      %v3420 = vmax.f32 %v2726, 0.0
      %v3421 = vmax.f32 %v2731, 0.0
      %v3422 = vmax.f32 %v2734, 0.0
      %v3423 = vmax.f32 %v2739, 0.0
      %v3424 = vmax.f32 %v2742, 0.0
      %v3425 = vmax.f32 %v2747, 0.0
      %v3426 = vmax.f32 %v2750, 0.0
      %v3427 = vmax.f32 %v2755, 0.0
      %v3428 = vmax.f32 %v2758, 0.0
      %v3429 = vmax.f32 %v2763, 0.0
      %v3430 = vmax.f32 %v2766, 0.0
      %v3431 = vmax.f32 %v2771, 0.0
      %v3432 = vmax.f32 %v2774, 0.0
      %v3433 = vmax.f32 %v2779, 0.0
      %v3434 = vmax.f32 %v2782, 0.0
      %v3435 = vmax.f32 %v2787, 0.0
      %v3436 = vmax.f32 %v2790, 0.0
      %v3437 = vmax.f32 %v2795, 0.0
      %v3438 = vmax.f32 %v2798, 0.0
      %v3439 = vmax.f32 %v2803, 0.0
      %v3440 = vmax.f32 %v2806, 0.0
      %v3441 = vmax.f32 %v2811, 0.0
      %v3442 = vmax.f32 %v2814, 0.0
      %v3443 = vmax.f32 %v2819, 0.0
      %v3444 = vmax.f32 %v2822, 0.0
      %v3445 = vmax.f32 %v2827, 0.0
      %v3446 = vmax.f32 %v2830, 0.0
      %v3447 = vmax.f32 %v2835, 0.0
      %v3448 = vmax.f32 %v2838, 0.0
      %v3449 = vmax.f32 %v2843, 0.0
      %v3450 = vmax.f32 %v2846, 0.0
      %v3451 = vmax.f32 %v2851, 0.0
      %v3452 = vmax.f32 %v2854, 0.0
      %v3453 = vmax.f32 %v2859, 0.0
      %v3454 = vmax.f32 %v2862, 0.0
      %v3455 = vmax.f32 %v2867, 0.0
      %v3456 = vmax.f32 %v2870, 0.0
      %v3457 = vmax.f32 %v2875, 0.0
      %v3458 = vmax.f32 %v2878, 0.0
      %v3459 = vmax.f32 %v2883, 0.0
      %v3460 = vmax.f32 %v2886, 0.0
      %v3461 = vmax.f32 %v2891, 0.0
      %v3462 = vmax.f32 %v2894, 0.0
      %v3463 = vmax.f32 %v2899, 0.0
      %v3464 = vmax.f32 %v2902, 0.0
      %v3465 = vmax.f32 %v2907, 0.0
      %v3466 = vmax.f32 %v2910, 0.0
      %v3467 = vmax.f32 %v2915, 0.0
      %v3468 = vmax.f32 %v2918, 0.0
      %v3469 = vmax.f32 %v2923, 0.0
      %v3470 = vmax.f32 %v2926, 0.0
      %v3471 = vmax.f32 %v2931, 0.0
      %v3472 = vmax.f32 %v2934, 0.0
      %v3473 = vmax.f32 %v2939, 0.0
      %v3474 = vmax.f32 %v2942, 0.0
      %v3475 = vmax.f32 %v2947, 0.0
      %v3476 = vmax.f32 %v2950, 0.0
      %v3477 = vmax.f32 %v2955, 0.0
      %v3478 = vmax.f32 %v2958, 0.0
      %v3479 = vmax.f32 %v2963, 0.0
      %v3480 = vmax.f32 %v2966, 0.0
      %v3481 = vmax.f32 %v2971, 0.0
      %v3482 = vmax.f32 %v2974, 0.0
      %v3483 = vmax.f32 %v2979, 0.0
      %v3484 = vmax.f32 %v2982, 0.0
      %v3485 = vmax.f32 %v2987, 0.0
      %v3486 = vmax.f32 %v2990, 0.0
      %v3487 = vmax.f32 %v2995, 0.0
      %v3488 = vmax.f32 %v2998, 0.0
      %v3489 = vmax.f32 %v3003, 0.0
      %v3490 = vmax.f32 %v3006, 0.0
      %v3491 = vmax.f32 %v3011, 0.0
      %v3492 = vmax.f32 %v3014, 0.0
      %v3493 = vmax.f32 %v3019, 0.0
      %v3494 = vmax.f32 %v3022, 0.0
      %v3495 = vmax.f32 %v3027, 0.0
      %v3496 = vmax.f32 %v3030, 0.0
      %v3497 = vmax.f32 %v3035, 0.0
      %v3498 = vmax.f32 %v3038, 0.0
      %v3499 = vmax.f32 %v3043, 0.0
      %v3500 = vmax.f32 %v3046, 0.0
      %v3501 = vmax.f32 %v3051, 0.0
      %v3502 = vmax.f32 %v3054, 0.0
      %v3503 = vmax.f32 %v3059, 0.0
      %v3504 = vmax.f32 %v3062, 0.0
      %v3505 = vmax.f32 %v3067, 0.0
      %v3506 = vmax.f32 %v3070, 0.0
      %v3507 = vmax.f32 %v3075, 0.0
      %v3508 = vmax.f32 %v3078, 0.0
      %v3509 = vmax.f32 %v3083, 0.0
      %v3510 = vmax.f32 %v3086, 0.0
      %v3511 = vmax.f32 %v3091, 0.0
      %v3512 = vmax.f32 %v3094, 0.0
      %v3513 = vmax.f32 %v3099, 0.0
      %v3514 = vmax.f32 %v3102, 0.0
      %v3515 = vmax.f32 %v3107, 0.0
      %v3516 = vmax.f32 %v3110, 0.0
      %v3517 = vmax.f32 %v3115, 0.0
      %v3518 = vmax.f32 %v3118, 0.0
      %v3519 = vmax.f32 %v3123, 0.0
      %v3520 = vmax.f32 %v3126, 0.0
      %v3521 = vmax.f32 %v3131, 0.0
      %v3522 = vmax.f32 %v3134, 0.0
      %v3523 = vmax.f32 %v3139, 0.0
      %v3524 = vmax.f32 %v3142, 0.0
      %v3525 = vmax.f32 %v3147, 0.0
      %v3526 = vmax.f32 %v3150, 0.0
      %v3527 = vmax.f32 %v3155, 0.0
      %v3528 = vmax.f32 %v3158, 0.0
      %v3529 = vmax.f32 %v3163, 0.0
      %v3530 = vmax.f32 %v3166, 0.0
      %v3531 = vmax.f32 %v3171, 0.0
      %v3532 = vmax.f32 %v3174, 0.0
      %v3533 = vmax.f32 %v3179, 0.0
      %v3534 = vmax.f32 %v3182, 0.0
      %v3535 = vmax.f32 %v3187, 0.0
      %v3536 = vmax.f32 %v3190, 0.0
      %v3537 = vmax.f32 %v3195, 0.0
      %v3538 = vmax.f32 %v3198, 0.0
      %v3539 = vmax.f32 %v3203, 0.0
      %v3540 = vmax.f32 %v3206, 0.0
      %v3541 = vmax.f32 %v3211, 0.0
      %v3542 = vmax.f32 %v3214, 0.0
      %v3543 = vmax.f32 %v3219, 0.0
      %v3544 = vmax.f32 %v3222, 0.0
      %v3545 = vadd.f32 %v3225, %v3226
      %v3546 = vadd.f32 %v3545, %v3227
      %v3547 = vadd.f32 %v3546, %v3228
      %v3548 = vadd.f32 %v3547, %v3229
      %v3549 = vadd.f32 %v3548, %v3230
      %v3550 = vadd.f32 %v3549, %v3231
      %v3551 = vadd.f32 %v3550, %v3232
      %v3552 = vadd.f32 %v3551, %v3233
      %v3553 = vadd.f32 %v3552, %v3234
      %v3554 = vadd.f32 %v3553, %v3235
      %v3555 = vadd.f32 %v3554, %v3236
      %v3556 = vadd.f32 %v3555, %v3237
      %v3557 = vadd.f32 %v3556, %v3238
      %v3558 = vadd.f32 %v3557, %v3239
      %v3559 = vadd.f32 %v3558, %v3240
      %v3560 = vadd.f32 %v3559, %v3241
      %v3561 = vadd.f32 %v3560, %v3242
      %v3562 = vadd.f32 %v3561, %v3243
      %v3563 = vadd.f32 %v3562, %v3244
      %v3564 = vadd.f32 %v3563, %v3245
      %v3565 = vadd.f32 %v3564, %v3246
      %v3566 = vadd.f32 %v3565, %v3247
      %v3567 = vadd.f32 %v3566, %v3248
      %v3568 = vadd.f32 %v3567, %v3249
      %v3569 = vadd.f32 %v3568, %v3250
      %v3570 = vadd.f32 %v3569, %v3251
      %v3571 = vadd.f32 %v3570, %v3252
      %v3572 = vadd.f32 %v3571, %v3253
      %v3573 = vadd.f32 %v3572, %v3254
      %v3574 = vadd.f32 %v3573, %v3255
      %v3575 = vadd.f32 %v3574, %v3256
      %v3576 = vrot.slane %v3575, 4
      %v3577 = vadd.f32 %v3575, %v3576
      %v3578 = vrot.slane %v3577, 2
      %v3579 = vadd.f32 %v3577, %v3578
      %v3580 = vrot.slane %v3579, 1
      %v3581 = vadd.f32 %v3579, %v3580
      %v3582 = vadd.f32 %v3257, %v3258
      %v3583 = vadd.f32 %v3582, %v3259
      %v3584 = vadd.f32 %v3583, %v3260
      %v3585 = vadd.f32 %v3584, %v3261
      %v3586 = vadd.f32 %v3585, %v3262
      %v3587 = vadd.f32 %v3586, %v3263
      %v3588 = vadd.f32 %v3587, %v3264
      %v3589 = vadd.f32 %v3588, %v3265
      %v3590 = vadd.f32 %v3589, %v3266
      %v3591 = vadd.f32 %v3590, %v3267
      %v3592 = vadd.f32 %v3591, %v3268
      %v3593 = vadd.f32 %v3592, %v3269
      %v3594 = vadd.f32 %v3593, %v3270
      %v3595 = vadd.f32 %v3594, %v3271
      %v3596 = vadd.f32 %v3595, %v3272
      %v3597 = vadd.f32 %v3596, %v3273
      %v3598 = vadd.f32 %v3597, %v3274
      %v3599 = vadd.f32 %v3598, %v3275
      %v3600 = vadd.f32 %v3599, %v3276
      %v3601 = vadd.f32 %v3600, %v3277
      %v3602 = vadd.f32 %v3601, %v3278
      %v3603 = vadd.f32 %v3602, %v3279
      %v3604 = vadd.f32 %v3603, %v3280
      %v3605 = vadd.f32 %v3604, %v3281
      %v3606 = vadd.f32 %v3605, %v3282
      %v3607 = vadd.f32 %v3606, %v3283
      %v3608 = vadd.f32 %v3607, %v3284
      %v3609 = vadd.f32 %v3608, %v3285
      %v3610 = vadd.f32 %v3609, %v3286
      %v3611 = vadd.f32 %v3610, %v3287
      %v3612 = vadd.f32 %v3611, %v3288
      %v3613 = vrot.slane %v3612, 4
      %v3614 = vadd.f32 %v3612, %v3613
      %v3615 = vrot.slane %v3614, 2
      %v3616 = vadd.f32 %v3614, %v3615
      %v3617 = vrot.slane %v3616, 1
      %v3618 = vadd.f32 %v3616, %v3617
      %v3619 = vadd.f32 %v3289, %v3290
      %v3620 = vadd.f32 %v3619, %v3291
      %v3621 = vadd.f32 %v3620, %v3292
      %v3622 = vadd.f32 %v3621, %v3293
      %v3623 = vadd.f32 %v3622, %v3294
      %v3624 = vadd.f32 %v3623, %v3295
      %v3625 = vadd.f32 %v3624, %v3296
      %v3626 = vadd.f32 %v3625, %v3297
      %v3627 = vadd.f32 %v3626, %v3298
      %v3628 = vadd.f32 %v3627, %v3299
      %v3629 = vadd.f32 %v3628, %v3300
      %v3630 = vadd.f32 %v3629, %v3301
      %v3631 = vadd.f32 %v3630, %v3302
      %v3632 = vadd.f32 %v3631, %v3303
      %v3633 = vadd.f32 %v3632, %v3304
      %v3634 = vadd.f32 %v3633, %v3305
      %v3635 = vadd.f32 %v3634, %v3306
      %v3636 = vadd.f32 %v3635, %v3307
      %v3637 = vadd.f32 %v3636, %v3308
      %v3638 = vadd.f32 %v3637, %v3309
      %v3639 = vadd.f32 %v3638, %v3310
      %v3640 = vadd.f32 %v3639, %v3311
      %v3641 = vadd.f32 %v3640, %v3312
      %v3642 = vadd.f32 %v3641, %v3313
      %v3643 = vadd.f32 %v3642, %v3314
      %v3644 = vadd.f32 %v3643, %v3315
      %v3645 = vadd.f32 %v3644, %v3316
      %v3646 = vadd.f32 %v3645, %v3317
      %v3647 = vadd.f32 %v3646, %v3318
      %v3648 = vadd.f32 %v3647, %v3319
      %v3649 = vadd.f32 %v3648, %v3320
      %v3650 = vrot.slane %v3649, 4
      %v3651 = vadd.f32 %v3649, %v3650
      %v3652 = vrot.slane %v3651, 2
      %v3653 = vadd.f32 %v3651, %v3652
      %v3654 = vrot.slane %v3653, 1
      %v3655 = vadd.f32 %v3653, %v3654
      %v3656 = vadd.f32 %v3321, %v3322
      %v3657 = vadd.f32 %v3656, %v3323
      %v3658 = vadd.f32 %v3657, %v3324
      %v3659 = vadd.f32 %v3658, %v3325
      %v3660 = vadd.f32 %v3659, %v3326
      %v3661 = vadd.f32 %v3660, %v3327
      %v3662 = vadd.f32 %v3661, %v3328
      %v3663 = vadd.f32 %v3662, %v3329
      %v3664 = vadd.f32 %v3663, %v3330
      %v3665 = vadd.f32 %v3664, %v3331
      %v3666 = vadd.f32 %v3665, %v3332
      %v3667 = vadd.f32 %v3666, %v3333
      %v3668 = vadd.f32 %v3667, %v3334
      %v3669 = vadd.f32 %v3668, %v3335
      %v3670 = vadd.f32 %v3669, %v3336
      %v3671 = vadd.f32 %v3670, %v3337
      %v3672 = vadd.f32 %v3671, %v3338
      %v3673 = vadd.f32 %v3672, %v3339
      %v3674 = vadd.f32 %v3673, %v3340
      %v3675 = vadd.f32 %v3674, %v3341
      %v3676 = vadd.f32 %v3675, %v3342
      %v3677 = vadd.f32 %v3676, %v3343
      %v3678 = vadd.f32 %v3677, %v3344
      %v3679 = vadd.f32 %v3678, %v3345
      %v3680 = vadd.f32 %v3679, %v3346
      %v3681 = vadd.f32 %v3680, %v3347
      %v3682 = vadd.f32 %v3681, %v3348
      %v3683 = vadd.f32 %v3682, %v3349
      %v3684 = vadd.f32 %v3683, %v3350
      %v3685 = vadd.f32 %v3684, %v3351
      %v3686 = vadd.f32 %v3685, %v3352
      %v3687 = vrot.slane %v3686, 4
      %v3688 = vadd.f32 %v3686, %v3687
      %v3689 = vrot.slane %v3688, 2
      %v3690 = vadd.f32 %v3688, %v3689
      %v3691 = vrot.slane %v3690, 1
      %v3692 = vadd.f32 %v3690, %v3691
      %v3693 = vadd.f32 %v3353, %v3354
      %v3694 = vadd.f32 %v3693, %v3355
      %v3695 = vadd.f32 %v3694, %v3356
      %v3696 = vadd.f32 %v3695, %v3357
      %v3697 = vadd.f32 %v3696, %v3358
      %v3698 = vadd.f32 %v3697, %v3359
      %v3699 = vadd.f32 %v3698, %v3360
      %v3700 = vadd.f32 %v3699, %v3361
      %v3701 = vadd.f32 %v3700, %v3362
      %v3702 = vadd.f32 %v3701, %v3363
      %v3703 = vadd.f32 %v3702, %v3364
      %v3704 = vadd.f32 %v3703, %v3365
      %v3705 = vadd.f32 %v3704, %v3366
      %v3706 = vadd.f32 %v3705, %v3367
      %v3707 = vadd.f32 %v3706, %v3368
      %v3708 = vadd.f32 %v3707, %v3369
      %v3709 = vadd.f32 %v3708, %v3370
      %v3710 = vadd.f32 %v3709, %v3371
      %v3711 = vadd.f32 %v3710, %v3372
      %v3712 = vadd.f32 %v3711, %v3373
      %v3713 = vadd.f32 %v3712, %v3374
      %v3714 = vadd.f32 %v3713, %v3375
      %v3715 = vadd.f32 %v3714, %v3376
      %v3716 = vadd.f32 %v3715, %v3377
      %v3717 = vadd.f32 %v3716, %v3378
      %v3718 = vadd.f32 %v3717, %v3379
      %v3719 = vadd.f32 %v3718, %v3380
      %v3720 = vadd.f32 %v3719, %v3381
      %v3721 = vadd.f32 %v3720, %v3382
      %v3722 = vadd.f32 %v3721, %v3383
      %v3723 = vadd.f32 %v3722, %v3384
      %v3724 = vrot.slane %v3723, 4
      %v3725 = vadd.f32 %v3723, %v3724
      %v3726 = vrot.slane %v3725, 2
      %v3727 = vadd.f32 %v3725, %v3726
      %v3728 = vrot.slane %v3727, 1
      %v3729 = vadd.f32 %v3727, %v3728
      %v3730 = vadd.f32 %v3385, %v3386
      %v3731 = vadd.f32 %v3730, %v3387
      %v3732 = vadd.f32 %v3731, %v3388
      %v3733 = vadd.f32 %v3732, %v3389
      %v3734 = vadd.f32 %v3733, %v3390
      %v3735 = vadd.f32 %v3734, %v3391
      %v3736 = vadd.f32 %v3735, %v3392
      %v3737 = vadd.f32 %v3736, %v3393
      %v3738 = vadd.f32 %v3737, %v3394
      %v3739 = vadd.f32 %v3738, %v3395
      %v3740 = vadd.f32 %v3739, %v3396
      %v3741 = vadd.f32 %v3740, %v3397
      %v3742 = vadd.f32 %v3741, %v3398
      %v3743 = vadd.f32 %v3742, %v3399
      %v3744 = vadd.f32 %v3743, %v3400
      %v3745 = vadd.f32 %v3744, %v3401
      %v3746 = vadd.f32 %v3745, %v3402
      %v3747 = vadd.f32 %v3746, %v3403
      %v3748 = vadd.f32 %v3747, %v3404
      %v3749 = vadd.f32 %v3748, %v3405
      %v3750 = vadd.f32 %v3749, %v3406
      %v3751 = vadd.f32 %v3750, %v3407
      %v3752 = vadd.f32 %v3751, %v3408
      %v3753 = vadd.f32 %v3752, %v3409
      %v3754 = vadd.f32 %v3753, %v3410
      %v3755 = vadd.f32 %v3754, %v3411
      %v3756 = vadd.f32 %v3755, %v3412
      %v3757 = vadd.f32 %v3756, %v3413
      %v3758 = vadd.f32 %v3757, %v3414
      %v3759 = vadd.f32 %v3758, %v3415
      %v3760 = vadd.f32 %v3759, %v3416
      %v3761 = vrot.slane %v3760, 4
      %v3762 = vadd.f32 %v3760, %v3761
      %v3763 = vrot.slane %v3762, 2
      %v3764 = vadd.f32 %v3762, %v3763
      %v3765 = vrot.slane %v3764, 1
      %v3766 = vadd.f32 %v3764, %v3765
      %v3767 = vadd.f32 %v3417, %v3418
      %v3768 = vadd.f32 %v3767, %v3419
      %v3769 = vadd.f32 %v3768, %v3420
      %v3770 = vadd.f32 %v3769, %v3421
      %v3771 = vadd.f32 %v3770, %v3422
      %v3772 = vadd.f32 %v3771, %v3423
      %v3773 = vadd.f32 %v3772, %v3424
      %v3774 = vadd.f32 %v3773, %v3425
      %v3775 = vadd.f32 %v3774, %v3426
      %v3776 = vadd.f32 %v3775, %v3427
      %v3777 = vadd.f32 %v3776, %v3428
      %v3778 = vadd.f32 %v3777, %v3429
      %v3779 = vadd.f32 %v3778, %v3430
      %v3780 = vadd.f32 %v3779, %v3431
      %v3781 = vadd.f32 %v3780, %v3432
      %v3782 = vadd.f32 %v3781, %v3433
      %v3783 = vadd.f32 %v3782, %v3434
      %v3784 = vadd.f32 %v3783, %v3435
      %v3785 = vadd.f32 %v3784, %v3436
      %v3786 = vadd.f32 %v3785, %v3437
      %v3787 = vadd.f32 %v3786, %v3438
      %v3788 = vadd.f32 %v3787, %v3439
      %v3789 = vadd.f32 %v3788, %v3440
      %v3790 = vadd.f32 %v3789, %v3441
      %v3791 = vadd.f32 %v3790, %v3442
      %v3792 = vadd.f32 %v3791, %v3443
      %v3793 = vadd.f32 %v3792, %v3444
      %v3794 = vadd.f32 %v3793, %v3445
      %v3795 = vadd.f32 %v3794, %v3446
      %v3796 = vadd.f32 %v3795, %v3447
      %v3797 = vadd.f32 %v3796, %v3448
      %v3798 = vrot.slane %v3797, 4
      %v3799 = vadd.f32 %v3797, %v3798
      %v3800 = vrot.slane %v3799, 2
      %v3801 = vadd.f32 %v3799, %v3800
      %v3802 = vrot.slane %v3801, 1
      %v3803 = vadd.f32 %v3801, %v3802
      %v3804 = vadd.f32 %v3449, %v3450
      %v3805 = vadd.f32 %v3804, %v3451
      %v3806 = vadd.f32 %v3805, %v3452
      %v3807 = vadd.f32 %v3806, %v3453
      %v3808 = vadd.f32 %v3807, %v3454
      %v3809 = vadd.f32 %v3808, %v3455
      %v3810 = vadd.f32 %v3809, %v3456
      %v3811 = vadd.f32 %v3810, %v3457
      %v3812 = vadd.f32 %v3811, %v3458
      %v3813 = vadd.f32 %v3812, %v3459
      %v3814 = vadd.f32 %v3813, %v3460
      %v3815 = vadd.f32 %v3814, %v3461
      %v3816 = vadd.f32 %v3815, %v3462
      %v3817 = vadd.f32 %v3816, %v3463
      %v3818 = vadd.f32 %v3817, %v3464
      %v3819 = vadd.f32 %v3818, %v3465
      %v3820 = vadd.f32 %v3819, %v3466
      %v3821 = vadd.f32 %v3820, %v3467
      %v3822 = vadd.f32 %v3821, %v3468
      %v3823 = vadd.f32 %v3822, %v3469
      %v3824 = vadd.f32 %v3823, %v3470
      %v3825 = vadd.f32 %v3824, %v3471
      %v3826 = vadd.f32 %v3825, %v3472
      %v3827 = vadd.f32 %v3826, %v3473
      %v3828 = vadd.f32 %v3827, %v3474
      %v3829 = vadd.f32 %v3828, %v3475
      %v3830 = vadd.f32 %v3829, %v3476
      %v3831 = vadd.f32 %v3830, %v3477
      %v3832 = vadd.f32 %v3831, %v3478
      %v3833 = vadd.f32 %v3832, %v3479
      %v3834 = vadd.f32 %v3833, %v3480
      %v3835 = vrot.slane %v3834, 4
      %v3836 = vadd.f32 %v3834, %v3835
      %v3837 = vrot.slane %v3836, 2
      %v3838 = vadd.f32 %v3836, %v3837
      %v3839 = vrot.slane %v3838, 1
      %v3840 = vadd.f32 %v3838, %v3839
      %v3841 = vadd.f32 %v3481, %v3482
      %v3842 = vadd.f32 %v3841, %v3483
      %v3843 = vadd.f32 %v3842, %v3484
      %v3844 = vadd.f32 %v3843, %v3485
      %v3845 = vadd.f32 %v3844, %v3486
      %v3846 = vadd.f32 %v3845, %v3487
      %v3847 = vadd.f32 %v3846, %v3488
      %v3848 = vadd.f32 %v3847, %v3489
      %v3849 = vadd.f32 %v3848, %v3490
      %v3850 = vadd.f32 %v3849, %v3491
      %v3851 = vadd.f32 %v3850, %v3492
      %v3852 = vadd.f32 %v3851, %v3493
      %v3853 = vadd.f32 %v3852, %v3494
      %v3854 = vadd.f32 %v3853, %v3495
      %v3855 = vadd.f32 %v3854, %v3496
      %v3856 = vadd.f32 %v3855, %v3497
      %v3857 = vadd.f32 %v3856, %v3498
      %v3858 = vadd.f32 %v3857, %v3499
      %v3859 = vadd.f32 %v3858, %v3500
      %v3860 = vadd.f32 %v3859, %v3501
      %v3861 = vadd.f32 %v3860, %v3502
      %v3862 = vadd.f32 %v3861, %v3503
      %v3863 = vadd.f32 %v3862, %v3504
      %v3864 = vadd.f32 %v3863, %v3505
      %v3865 = vadd.f32 %v3864, %v3506
      %v3866 = vadd.f32 %v3865, %v3507
      %v3867 = vadd.f32 %v3866, %v3508
      %v3868 = vadd.f32 %v3867, %v3509
      %v3869 = vadd.f32 %v3868, %v3510
      %v3870 = vadd.f32 %v3869, %v3511
      %v3871 = vadd.f32 %v3870, %v3512
      %v3872 = vrot.slane %v3871, 4
      %v3873 = vadd.f32 %v3871, %v3872
      %v3874 = vrot.slane %v3873, 2
      %v3875 = vadd.f32 %v3873, %v3874
      %v3876 = vrot.slane %v3875, 1
      %v3877 = vadd.f32 %v3875, %v3876
      %v3878 = vadd.f32 %v3513, %v3514
      %v3879 = vadd.f32 %v3878, %v3515
      %v3880 = vadd.f32 %v3879, %v3516
      %v3881 = vadd.f32 %v3880, %v3517
      %v3882 = vadd.f32 %v3881, %v3518
      %v3883 = vadd.f32 %v3882, %v3519
      %v3884 = vadd.f32 %v3883, %v3520
      %v3885 = vadd.f32 %v3884, %v3521
      %v3886 = vadd.f32 %v3885, %v3522
      %v3887 = vadd.f32 %v3886, %v3523
      %v3888 = vadd.f32 %v3887, %v3524
      %v3889 = vadd.f32 %v3888, %v3525
      %v3890 = vadd.f32 %v3889, %v3526
      %v3891 = vadd.f32 %v3890, %v3527
      %v3892 = vadd.f32 %v3891, %v3528
      %v3893 = vadd.f32 %v3892, %v3529
      %v3894 = vadd.f32 %v3893, %v3530
      %v3895 = vadd.f32 %v3894, %v3531
      %v3896 = vadd.f32 %v3895, %v3532
      %v3897 = vadd.f32 %v3896, %v3533
      %v3898 = vadd.f32 %v3897, %v3534
      %v3899 = vadd.f32 %v3898, %v3535
      %v3900 = vadd.f32 %v3899, %v3536
      %v3901 = vadd.f32 %v3900, %v3537
      %v3902 = vadd.f32 %v3901, %v3538
      %v3903 = vadd.f32 %v3902, %v3539
      %v3904 = vadd.f32 %v3903, %v3540
      %v3905 = vadd.f32 %v3904, %v3541
      %v3906 = vadd.f32 %v3905, %v3542
      %v3907 = vadd.f32 %v3906, %v3543
      %v3908 = vadd.f32 %v3907, %v3544
      %v3909 = vrot.slane %v3908, 4
      %v3910 = vadd.f32 %v3908, %v3909
      %v3911 = vrot.slane %v3910, 2
      %v3912 = vadd.f32 %v3910, %v3911
      %v3913 = vrot.slane %v3912, 1
      %v3914 = vadd.f32 %v3912, %v3913
      %v3915 = vrcp.pop 256.0
      %v3916 = vmul.f32 %v3581, %v3915
      %v3917 = vmul.f32 %v3618, %v3915
      %v3918 = vmul.f32 %v3655, %v3915
      %v3919 = vmul.f32 %v3692, %v3915
      %v3920 = vmul.f32 %v3729, %v3915
      %v3921 = vmul.f32 %v3766, %v3915
      %v3922 = vmul.f32 %v3803, %v3915
      %v3923 = vmul.f32 %v3840, %v3915
      %v3924 = vmul.f32 %v3877, %v3915
      %v3925 = vmul.f32 %v3914, %v3915
      %v3926 = vpack.c.bf16 %v3916, %v3916
      %v3927 = vpack.c.bf16 %v3917, %v3917
      %v3928 = vpack.c.bf16 %v3918, %v3918
      %v3929 = vpack.c.bf16 %v3919, %v3919
      %v3930 = vpack.c.bf16 %v3920, %v3920
      %v3931 = vpack.c.bf16 %v3921, %v3921
      %v3932 = vpack.c.bf16 %v3922, %v3922
      %v3933 = vpack.c.bf16 %v3923, %v3923
      %v3934 = vpack.c.bf16 %v3924, %v3924
      %v3935 = vpack.c.bf16 %v3925, %v3925
      %v3936 = vld [vmem:[%s3] sm:$0xff]
      %v3937 = vld [vmem:[%s3 + $0x8] sm:$0xff]
      %v3938 = vld [vmem:[%s3 + $0x10] sm:$0xff]
      %v3939 = vld [vmem:[%s3 + $0x18] sm:$0xff]
      %v3940 = vld [vmem:[%s3 + $0x20] sm:$0xff]
      %v3941 = vld [vmem:[%s3 + $0x28] sm:$0xff]
      %v3942 = vld [vmem:[%s3 + $0x30] sm:$0xff]
      %v3943 = vld [vmem:[%s3 + $0x38] sm:$0xff]
      %v3944 = vld [vmem:[%s3 + $0x40] sm:$0xff]
      %v3945 = vld [vmem:[%s3 + $0x48] sm:$0xff]
      %v3946 = vld [vmem:[%s3 + $0x50] sm:$0xff]
      %v3947 = vld [vmem:[%s3 + $0x58] sm:$0xff]
      %v3948 = vld [vmem:[%s3 + $0x60] sm:$0xff]
      %v3949 = vld [vmem:[%s3 + $0x68] sm:$0xff]
      %v3950 = vld [vmem:[%s3 + $0x70] sm:$0xff]
      %v3951 = vld [vmem:[%s3 + $0x78] sm:$0xff]
      %v3952 = vld [vmem:[%s3 + $0x80] sm:$0xff]
      %v3953 = vld [vmem:[%s3 + $0x88] sm:$0xff]
      %v3954 = vld [vmem:[%s3 + $0x90] sm:$0xff]
      %v3955 = vld [vmem:[%s3 + $0x98] sm:$0xff]
      %v3956 = vld [vmem:[%s3 + $0xa0] sm:$0xff]
      %v3957 = vld [vmem:[%s3 + $0xa8] sm:$0xff]
      %v3958 = vld [vmem:[%s3 + $0xb0] sm:$0xff]
      %v3959 = vld [vmem:[%s3 + $0xb8] sm:$0xff]
      %v3960 = vld [vmem:[%s3 + $0xc0] sm:$0xff]
      %v3961 = vld [vmem:[%s3 + $0xc8] sm:$0xff]
      %v3962 = vld [vmem:[%s3 + $0xd0] sm:$0xff]
      %v3963 = vld [vmem:[%s3 + $0xd8] sm:$0xff]
      %v3964 = vld [vmem:[%s3 + $0xe0] sm:$0xff]
      %v3965 = vld [vmem:[%s3 + $0xe8] sm:$0xff]
      %v3966 = vld [vmem:[%s3 + $0xf0] sm:$0xff]
      %v3967 = vld [vmem:[%s3 + $0xf8] sm:$0xff]
      %v3968 = vld [vmem:[%s4] sm:$0xf]
      %v3970 = vlaneseq
      %v3971 = vshrl.u32 %v3970, 7
      %v3972 = vsub.s32 0, %v3971
      %v3973 = vrot.slane %v3968, %v3972
      %v3974 = vlaneseq
      %v3975 = vshrl.u32 %v3974, 7
      %v3976 = vsub.s32 1, %v3975
      %v3977 = vrot.slane %v3968, %v3976
      %v3978 = vlaneseq
      %v3979 = vshrl.u32 %v3978, 7
      %v3980 = vsub.s32 2, %v3979
      %v3981 = vrot.slane %v3968, %v3980
      %v3982 = vlaneseq
      %v3983 = vshrl.u32 %v3982, 7
      %v3984 = vsub.s32 3, %v3983
      %v3985 = vrot.slane %v3968, %v3984
      %v4000 = vunpack.c.l.b16 %v3926
      %v4001 = vunpack.c.l.b16 %v3927
      %v4002 = vunpack.c.l.b16 %v3928
      %v4003 = vunpack.c.l.b16 %v3929
      %v4004 = vunpack.c.l.b16 %v3930
      %v4005 = vunpack.c.l.b16 %v3931
      %v4006 = vunpack.c.l.b16 %v3932
      %v4007 = vunpack.c.l.b16 %v3933
      %v4008 = vunpack.c.l.b16 %v3934
      %v4009 = vunpack.c.l.b16 %v3935
      %vm4010 = vcmask 1041409
      %v4011 = vsel %vm4010, %v4001, %v4000
      %vm4012 = vcmask 1042434
      %v4013 = vsel %vm4012, %v4002, %v4011
      %vm4014 = vcmask 1043459
      %v4015 = vsel %vm4014, %v4003, %v4013
      %vm4016 = vcmask 1044484
      %v4017 = vsel %vm4016, %v4004, %v4015
      %vm4018 = vcmask 1045509
      %v4019 = vsel %vm4018, %v4005, %v4017
      %vm4020 = vcmask 1046534
      %v4021 = vsel %vm4020, %v4006, %v4019
      %vm4022 = vcmask 1047559
      %v4023 = vsel %vm4022, %v4007, %v4021
      %v4024 = vsel %vm4010, %v4009, %v4008
      %v4025 = vpack.c.b16 %v4024, %v4023
      %v4059 = vunpack.c.l.b16 %v3936
      %v4060 = vunpack.c.h.b16 %v3936
      %v4061 = vunpack.c.l.b16 %v3937
      %v4062 = vunpack.c.h.b16 %v3937
      %v4063 = vunpack.c.l.b16 %v3938
      %v4064 = vunpack.c.h.b16 %v3938
      %v4065 = vunpack.c.l.b16 %v3939
      %v4066 = vunpack.c.h.b16 %v3939
      %v4067 = vunpack.c.l.b16 %v3940
      %v4068 = vunpack.c.h.b16 %v3940
      %v4069 = vunpack.c.l.b16 %v3941
      %v4070 = vunpack.c.h.b16 %v3941
      %v4071 = vunpack.c.l.b16 %v3942
      %v4072 = vunpack.c.h.b16 %v3942
      %v4073 = vunpack.c.l.b16 %v3943
      %v4074 = vunpack.c.h.b16 %v3943
      %v4075 = vunpack.c.l.b16 %v3944
      %v4076 = vunpack.c.h.b16 %v3944
      %v4077 = vunpack.c.l.b16 %v3945
      %v4078 = vunpack.c.h.b16 %v3945
      %v4079 = vunpack.c.l.b16 %v3946
      %v4080 = vunpack.c.h.b16 %v3946
      %v4081 = vunpack.c.l.b16 %v3947
      %v4082 = vunpack.c.h.b16 %v3947
      %v4083 = vunpack.c.l.b16 %v3948
      %v4084 = vunpack.c.h.b16 %v3948
      %v4085 = vunpack.c.l.b16 %v3949
      %v4086 = vunpack.c.h.b16 %v3949
      %v4087 = vunpack.c.l.b16 %v3950
      %v4088 = vunpack.c.h.b16 %v3950
      %v4089 = vunpack.c.l.b16 %v3951
      %v4090 = vunpack.c.h.b16 %v3951
      %v4091 = vunpack.c.l.b16 %v3952
      %v4092 = vunpack.c.h.b16 %v3952
      %v4093 = vunpack.c.l.b16 %v3953
      %v4094 = vunpack.c.h.b16 %v3953
      %v4095 = vunpack.c.l.b16 %v3954
      %v4096 = vunpack.c.h.b16 %v3954
      %v4097 = vunpack.c.l.b16 %v3955
      %v4098 = vunpack.c.h.b16 %v3955
      %v4099 = vunpack.c.l.b16 %v3956
      %v4100 = vunpack.c.h.b16 %v3956
      %v4101 = vunpack.c.l.b16 %v3957
      %v4102 = vunpack.c.h.b16 %v3957
      %v4103 = vunpack.c.l.b16 %v3958
      %v4104 = vunpack.c.h.b16 %v3958
      %v4105 = vunpack.c.l.b16 %v3959
      %v4106 = vunpack.c.h.b16 %v3959
      %v4107 = vunpack.c.l.b16 %v3960
      %v4108 = vunpack.c.h.b16 %v3960
      %v4109 = vunpack.c.l.b16 %v3961
      %v4110 = vunpack.c.h.b16 %v3961
      %v4111 = vunpack.c.l.b16 %v3962
      %v4112 = vunpack.c.h.b16 %v3962
      %v4113 = vunpack.c.l.b16 %v3963
      %v4114 = vunpack.c.h.b16 %v3963
      %v4115 = vunpack.c.l.b16 %v3964
      %v4116 = vunpack.c.h.b16 %v3964
      %v4117 = vunpack.c.l.b16 %v3965
      %v4118 = vunpack.c.h.b16 %v3965
      %v4119 = vunpack.c.l.b16 %v3966
      %v4120 = vunpack.c.h.b16 %v3966
      %v4121 = vunpack.c.l.b16 %v3967
      %v4122 = vunpack.c.h.b16 %v3967
      %v4123 = vpack.c.b16 %v4063, %v4059
      %v4124 = vpack.c.b16 %v4064, %v4060
      %v4125 = vpack.c.b16 %v4065, %v4061
      %v4126 = vpack.c.b16 %v4066, %v4062
      %v4127 = vpack.c.b16 %v4071, %v4067
      %v4128 = vpack.c.b16 %v4072, %v4068
      %v4129 = vpack.c.b16 %v4073, %v4069
      %v4130 = vpack.c.b16 %v4074, %v4070
      %v4131 = vpack.c.b16 %v4079, %v4075
      %v4132 = vpack.c.b16 %v4080, %v4076
      %v4133 = vpack.c.b16 %v4081, %v4077
      %v4134 = vpack.c.b16 %v4082, %v4078
      %v4135 = vpack.c.b16 %v4087, %v4083
      %v4136 = vpack.c.b16 %v4088, %v4084
      %v4137 = vpack.c.b16 %v4089, %v4085
      %v4138 = vpack.c.b16 %v4090, %v4086
      %v4139 = vpack.c.b16 %v4095, %v4091
      %v4140 = vpack.c.b16 %v4096, %v4092
      %v4141 = vpack.c.b16 %v4097, %v4093
      %v4142 = vpack.c.b16 %v4098, %v4094
      %v4143 = vpack.c.b16 %v4103, %v4099
      %v4144 = vpack.c.b16 %v4104, %v4100
      %v4145 = vpack.c.b16 %v4105, %v4101
      %v4146 = vpack.c.b16 %v4106, %v4102
      %v4147 = vpack.c.b16 %v4111, %v4107
      %v4148 = vpack.c.b16 %v4112, %v4108
      %v4149 = vpack.c.b16 %v4113, %v4109
      %v4150 = vpack.c.b16 %v4114, %v4110
      %v4151 = vpack.c.b16 %v4119, %v4115
      %v4152 = vpack.c.b16 %v4120, %v4116
      %v4153 = vpack.c.b16 %v4121, %v4117
      %v4154 = vpack.c.b16 %v4122, %v4118
      %4187 = vmatprep.subr.bf16.mxu0 %v4124
      %4188 = vmatpush1.bf16.msra.mxu0 %v4123
      %4189 = vmatprep.subr.bf16.mxu0 %v4128
      %4190 = vmatpush1.bf16.msra.mxu0 %v4127
      %4191 = vmatprep.subr.bf16.mxu0 %v4132
      %4192 = vmatpush1.bf16.msra.mxu0 %v4131
      %4193 = vmatprep.subr.bf16.mxu0 %v4136
      %4194 = vmatpush1.bf16.msra.mxu0 %v4135
      %4195 = vmatprep.subr.bf16.mxu0 %v4140
      %4196 = vmatpush1.bf16.msra.mxu0 %v4139
      %4197 = vmatprep.subr.bf16.mxu0 %v4144
      %4198 = vmatpush1.bf16.msra.mxu0 %v4143
      %4199 = vmatprep.subr.bf16.mxu0 %v4148
      %4200 = vmatpush1.bf16.msra.mxu0 %v4147
      %4201 = vmatprep.subr.bf16.mxu0 %v4152
      %4202 = vmatpush1.bf16.msra.mxu0 %v4151
      %4203 = vmatprep.subr.bf16.mxu0 0
      %4204 = vmatpush1.bf16.msra.mxu0 0
      %4205 = vmatprep.subr.bf16.mxu0 0
      %4206 = vmatpush1.bf16.msra.mxu0 0
      %4207 = vmatprep.subr.bf16.mxu0 0
      %4208 = vmatpush1.bf16.msra.mxu0 0
      %4209 = vmatprep.subr.bf16.mxu0 0
      %4210 = vmatpush1.bf16.msra.mxu0 0
      %4211 = vmatprep.subr.bf16.mxu0 0
      %4212 = vmatpush1.bf16.msra.mxu0 0
      %4213 = vmatprep.subr.bf16.mxu0 0
      %4214 = vmatpush1.bf16.msra.mxu0 0
      %4215 = vmatprep.subr.bf16.mxu0 0
      %4216 = vmatpush1.bf16.msra.mxu0 0
      %4217 = vmatprep.subr.bf16.mxu0 0
      %4218 = vmatpush1.bf16.msra.mxu0 0
      %4219 = vmatprep.mubr.bf16.mxu0 0
      %4220 = vmatmul.mubr.bf16.gmra.mrb[0].mxu0 %v4025
      %v4221 = vpop.f32.mrb[0].mxu0
      %v4222 = vadd.f32 %v3973, %v4221
      %v4223 = vpop.f32.mrb[0].mxu0
      %v4224 = vadd.f32 %v3977, %v4223
      %v4225 = vpop.f32.mrb[0].mxu0
      %v4226 = vadd.f32 %v3973, %v4225
      %v4227 = vpop.f32.mrb[0].mxu0
      %v4228 = vadd.f32 %v3977, %v4227
      %4229 = vdwg.mxu0
      %4230 = vmatprep.subr.bf16.mxu0 %v4126
      %4231 = vmatpush1.bf16.msra.mxu0 %v4125
      %4232 = vmatprep.subr.bf16.mxu0 %v4130
      %4233 = vmatpush1.bf16.msra.mxu0 %v4129
      %4234 = vmatprep.subr.bf16.mxu0 %v4134
      %4235 = vmatpush1.bf16.msra.mxu0 %v4133
      %4236 = vmatprep.subr.bf16.mxu0 %v4138
      %4237 = vmatpush1.bf16.msra.mxu0 %v4137
      %4238 = vmatprep.subr.bf16.mxu0 %v4142
      %4239 = vmatpush1.bf16.msra.mxu0 %v4141
      %4240 = vmatprep.subr.bf16.mxu0 %v4146
      %4241 = vmatpush1.bf16.msra.mxu0 %v4145
      %4242 = vmatprep.subr.bf16.mxu0 %v4150
      %4243 = vmatpush1.bf16.msra.mxu0 %v4149
      %4244 = vmatprep.subr.bf16.mxu0 %v4154
      %4245 = vmatpush1.bf16.msra.mxu0 %v4153
      %4246 = vmatprep.subr.bf16.mxu0 0
      %4247 = vmatpush1.bf16.msra.mxu0 0
      %4248 = vmatprep.subr.bf16.mxu0 0
      %4249 = vmatpush1.bf16.msra.mxu0 0
      %4250 = vmatprep.subr.bf16.mxu0 0
      %4251 = vmatpush1.bf16.msra.mxu0 0
      %4252 = vmatprep.subr.bf16.mxu0 0
      %4253 = vmatpush1.bf16.msra.mxu0 0
      %4254 = vmatprep.subr.bf16.mxu0 0
      %4255 = vmatpush1.bf16.msra.mxu0 0
      %4256 = vmatprep.subr.bf16.mxu0 0
      %4257 = vmatpush1.bf16.msra.mxu0 0
      %4258 = vmatprep.subr.bf16.mxu0 0
      %4259 = vmatpush1.bf16.msra.mxu0 0
      %4260 = vmatprep.subr.bf16.mxu0 0
      %4261 = vmatpush1.bf16.msra.mxu0 0
      %4262 = vmatprep.mubr.bf16.mxu0 0
      %4263 = vmatmul.mubr.bf16.gmra.mrb[0].mxu0 %v4025
      %v4264 = vpop.f32.mrb[0].mxu0
      %v4265 = vadd.f32 %v3981, %v4264
      %v4266 = vpop.f32.mrb[0].mxu0
      %v4267 = vadd.f32 %v3985, %v4266
      %v4268 = vpop.f32.mrb[0].mxu0
      %v4269 = vadd.f32 %v3981, %v4268
      %v4270 = vpop.f32.mrb[0].mxu0
      %v4271 = vadd.f32 %v3985, %v4270
      %4272 = vdwg.mxu0
      %vm4273 = vcmp.gt.f32.partialorder %v4222, 0.0
      %vm4274 = vcmp.gt.f32.partialorder %v4224, 0.0
      %vm4275 = vcmp.gt.f32.partialorder %v4265, 0.0
      %vm4276 = vcmp.gt.f32.partialorder %v4267, 0.0
      %vm4277 = vcmp.gt.f32.partialorder %v4226, 0.0
      %vm4278 = vcmp.gt.f32.partialorder %v4228, 0.0
      %vm4279 = vcmp.gt.f32.partialorder %v4269, 0.0
      %vm4280 = vcmp.gt.f32.partialorder %v4271, 0.0
      %v4281 = vmul.f32 %v4222, 0.01
      %v4282 = vmul.f32 %v4224, 0.01
      %v4283 = vmul.f32 %v4265, 0.01
      %v4284 = vmul.f32 %v4267, 0.01
      %v4285 = vmul.f32 %v4226, 0.01
      %v4286 = vmul.f32 %v4228, 0.01
      %v4287 = vmul.f32 %v4269, 0.01
      %v4288 = vmul.f32 %v4271, 0.01
      %v4289 = vsel %vm4273, %v4222, %v4281
      %v4290 = vsel %vm4274, %v4224, %v4282
      %v4291 = vsel %vm4275, %v4265, %v4283
      %v4292 = vsel %vm4276, %v4267, %v4284
      %v4293 = vsel %vm4277, %v4226, %v4285
      %v4294 = vsel %vm4278, %v4228, %v4286
      %v4295 = vsel %vm4279, %v4269, %v4287
      %v4296 = vsel %vm4280, %v4271, %v4288
      %v4297 = vpack.c.bf16 %v4293, %v4289
      %v4298 = vpack.c.bf16 %v4294, %v4290
      %v4299 = vpack.c.bf16 %v4295, %v4291
      %v4300 = vpack.c.bf16 %v4296, %v4292
      %v4301 = vld [vmem:[%s5] sm:$0xf]
      %v4302 = vld [vmem:[%s5 + $0x4] sm:$0xf]
      %v4303 = vld [vmem:[%s5 + $0x8] sm:$0xf]
      %v4304 = vld [vmem:[%s5 + $0xc] sm:$0xf]
      %v4305 = vld [vmem:[%s5 + $0x10] sm:$0xf]
      %v4306 = vld [vmem:[%s5 + $0x14] sm:$0xf]
      %v4307 = vld [vmem:[%s5 + $0x18] sm:$0xf]
      %v4308 = vld [vmem:[%s5 + $0x1c] sm:$0xf]
      %v4309 = vld [vmem:[%s5 + $0x20] sm:$0xf]
      %v4310 = vld [vmem:[%s5 + $0x24] sm:$0xf]
      %v4311 = vld [vmem:[%s5 + $0x28] sm:$0xf]
      %v4312 = vld [vmem:[%s5 + $0x2c] sm:$0xf]
      %v4313 = vld [vmem:[%s5 + $0x30] sm:$0xf]
      %v4314 = vld [vmem:[%s5 + $0x34] sm:$0xf]
      %v4315 = vld [vmem:[%s5 + $0x38] sm:$0xf]
      %v4316 = vld [vmem:[%s5 + $0x3c] sm:$0xf]
      %v4317 = vld [vmem:[%s5 + $0x40] sm:$0xf]
      %v4318 = vld [vmem:[%s5 + $0x44] sm:$0xf]
      %v4319 = vld [vmem:[%s5 + $0x48] sm:$0xf]
      %v4320 = vld [vmem:[%s5 + $0x4c] sm:$0xf]
      %v4321 = vld [vmem:[%s5 + $0x50] sm:$0xf]
      %v4322 = vld [vmem:[%s5 + $0x54] sm:$0xf]
      %v4323 = vld [vmem:[%s5 + $0x58] sm:$0xf]
      %v4324 = vld [vmem:[%s5 + $0x5c] sm:$0xf]
      %v4325 = vld [vmem:[%s5 + $0x60] sm:$0xf]
      %v4326 = vld [vmem:[%s5 + $0x64] sm:$0xf]
      %v4327 = vld [vmem:[%s5 + $0x68] sm:$0xf]
      %v4328 = vld [vmem:[%s5 + $0x6c] sm:$0xf]
      %v4329 = vld [vmem:[%s5 + $0x70] sm:$0xf]
      %v4330 = vld [vmem:[%s5 + $0x74] sm:$0xf]
      %v4331 = vld [vmem:[%s5 + $0x78] sm:$0xf]
      %v4332 = vld [vmem:[%s5 + $0x7c] sm:$0xf]
      %v4333 = vld [vmem:[%s5 + $0x80] sm:$0xf]
      %v4334 = vld [vmem:[%s5 + $0x84] sm:$0xf]
      %v4335 = vld [vmem:[%s5 + $0x88] sm:$0xf]
      %v4336 = vld [vmem:[%s5 + $0x8c] sm:$0xf]
      %v4337 = vld [vmem:[%s5 + $0x90] sm:$0xf]
      %v4338 = vld [vmem:[%s5 + $0x94] sm:$0xf]
      %v4339 = vld [vmem:[%s5 + $0x98] sm:$0xf]
      %v4340 = vld [vmem:[%s5 + $0x9c] sm:$0xf]
      %v4341 = vld [vmem:[%s5 + $0xa0] sm:$0xf]
      %v4342 = vld [vmem:[%s5 + $0xa4] sm:$0xf]
      %v4343 = vld [vmem:[%s5 + $0xa8] sm:$0xf]
      %v4344 = vld [vmem:[%s5 + $0xac] sm:$0xf]
      %v4345 = vld [vmem:[%s5 + $0xb0] sm:$0xf]
      %v4346 = vld [vmem:[%s5 + $0xb4] sm:$0xf]
      %v4347 = vld [vmem:[%s5 + $0xb8] sm:$0xf]
      %v4348 = vld [vmem:[%s5 + $0xbc] sm:$0xf]
      %v4349 = vld [vmem:[%s5 + $0xc0] sm:$0xf]
      %v4350 = vld [vmem:[%s5 + $0xc4] sm:$0xf]
      %v4351 = vld [vmem:[%s5 + $0xc8] sm:$0xf]
      %v4352 = vld [vmem:[%s5 + $0xcc] sm:$0xf]
      %v4353 = vld [vmem:[%s5 + $0xd0] sm:$0xf]
      %v4354 = vld [vmem:[%s5 + $0xd4] sm:$0xf]
      %v4355 = vld [vmem:[%s5 + $0xd8] sm:$0xf]
      %v4356 = vld [vmem:[%s5 + $0xdc] sm:$0xf]
      %v4357 = vld [vmem:[%s5 + $0xe0] sm:$0xf]
      %v4358 = vld [vmem:[%s5 + $0xe4] sm:$0xf]
      %v4359 = vld [vmem:[%s5 + $0xe8] sm:$0xf]
      %v4360 = vld [vmem:[%s5 + $0xec] sm:$0xf]
      %v4361 = vld [vmem:[%s5 + $0xf0] sm:$0xf]
      %v4362 = vld [vmem:[%s5 + $0xf4] sm:$0xf]
      %v4363 = vld [vmem:[%s5 + $0xf8] sm:$0xf]
      %v4364 = vld [vmem:[%s5 + $0xfc] sm:$0xf]
      %v4365 = vld [vmem:[%s6] sm:$0x1]
      %v4367 = vlaneseq
      %v4368 = vshrl.u32 %v4367, 7
      %v4369 = vsub.s32 0, %v4368
      %v4370 = vrot.slane %v4365, %v4369
      %v4436 = vunpack.c.l.b16 %v4301
      %v4437 = vunpack.c.l.b16 %v4302
      %v4438 = vunpack.c.l.b16 %v4303
      %v4439 = vunpack.c.l.b16 %v4304
      %v4440 = vunpack.c.l.b16 %v4305
      %v4441 = vunpack.c.l.b16 %v4306
      %v4442 = vunpack.c.l.b16 %v4307
      %v4443 = vunpack.c.l.b16 %v4308
      %v4444 = vunpack.c.l.b16 %v4309
      %v4445 = vunpack.c.l.b16 %v4310
      %v4446 = vunpack.c.l.b16 %v4311
      %v4447 = vunpack.c.l.b16 %v4312
      %v4448 = vunpack.c.l.b16 %v4313
      %v4449 = vunpack.c.l.b16 %v4314
      %v4450 = vunpack.c.l.b16 %v4315
      %v4451 = vunpack.c.l.b16 %v4316
      %v4452 = vunpack.c.l.b16 %v4317
      %v4453 = vunpack.c.l.b16 %v4318
      %v4454 = vunpack.c.l.b16 %v4319
      %v4455 = vunpack.c.l.b16 %v4320
      %v4456 = vunpack.c.l.b16 %v4321
      %v4457 = vunpack.c.l.b16 %v4322
      %v4458 = vunpack.c.l.b16 %v4323
      %v4459 = vunpack.c.l.b16 %v4324
      %v4460 = vunpack.c.l.b16 %v4325
      %v4461 = vunpack.c.l.b16 %v4326
      %v4462 = vunpack.c.l.b16 %v4327
      %v4463 = vunpack.c.l.b16 %v4328
      %v4464 = vunpack.c.l.b16 %v4329
      %v4465 = vunpack.c.l.b16 %v4330
      %v4466 = vunpack.c.l.b16 %v4331
      %v4467 = vunpack.c.l.b16 %v4332
      %v4468 = vunpack.c.l.b16 %v4333
      %v4469 = vunpack.c.l.b16 %v4334
      %v4470 = vunpack.c.l.b16 %v4335
      %v4471 = vunpack.c.l.b16 %v4336
      %v4472 = vunpack.c.l.b16 %v4337
      %v4473 = vunpack.c.l.b16 %v4338
      %v4474 = vunpack.c.l.b16 %v4339
      %v4475 = vunpack.c.l.b16 %v4340
      %v4476 = vunpack.c.l.b16 %v4341
      %v4477 = vunpack.c.l.b16 %v4342
      %v4478 = vunpack.c.l.b16 %v4343
      %v4479 = vunpack.c.l.b16 %v4344
      %v4480 = vunpack.c.l.b16 %v4345
      %v4481 = vunpack.c.l.b16 %v4346
      %v4482 = vunpack.c.l.b16 %v4347
      %v4483 = vunpack.c.l.b16 %v4348
      %v4484 = vunpack.c.l.b16 %v4349
      %v4485 = vunpack.c.l.b16 %v4350
      %v4486 = vunpack.c.l.b16 %v4351
      %v4487 = vunpack.c.l.b16 %v4352
      %v4488 = vunpack.c.l.b16 %v4353
      %v4489 = vunpack.c.l.b16 %v4354
      %v4490 = vunpack.c.l.b16 %v4355
      %v4491 = vunpack.c.l.b16 %v4356
      %v4492 = vunpack.c.l.b16 %v4357
      %v4493 = vunpack.c.l.b16 %v4358
      %v4494 = vunpack.c.l.b16 %v4359
      %v4495 = vunpack.c.l.b16 %v4360
      %v4496 = vunpack.c.l.b16 %v4361
      %v4497 = vunpack.c.l.b16 %v4362
      %v4498 = vunpack.c.l.b16 %v4363
      %v4499 = vunpack.c.l.b16 %v4364
      %v4500 = vpack.c.b16 %v4437, %v4436
      %v4501 = vpack.c.b16 %v4439, %v4438
      %v4502 = vpack.c.b16 %v4441, %v4440
      %v4503 = vpack.c.b16 %v4443, %v4442
      %v4504 = vpack.c.b16 %v4445, %v4444
      %v4505 = vpack.c.b16 %v4447, %v4446
      %v4506 = vpack.c.b16 %v4449, %v4448
      %v4507 = vpack.c.b16 %v4451, %v4450
      %v4508 = vpack.c.b16 %v4453, %v4452
      %v4509 = vpack.c.b16 %v4455, %v4454
      %v4510 = vpack.c.b16 %v4457, %v4456
      %v4511 = vpack.c.b16 %v4459, %v4458
      %v4512 = vpack.c.b16 %v4461, %v4460
      %v4513 = vpack.c.b16 %v4463, %v4462
      %v4514 = vpack.c.b16 %v4465, %v4464
      %v4515 = vpack.c.b16 %v4467, %v4466
      %v4516 = vpack.c.b16 %v4469, %v4468
      %v4517 = vpack.c.b16 %v4471, %v4470
      %v4518 = vpack.c.b16 %v4473, %v4472
      %v4519 = vpack.c.b16 %v4475, %v4474
      %v4520 = vpack.c.b16 %v4477, %v4476
      %v4521 = vpack.c.b16 %v4479, %v4478
      %v4522 = vpack.c.b16 %v4481, %v4480
      %v4523 = vpack.c.b16 %v4483, %v4482
      %v4524 = vpack.c.b16 %v4485, %v4484
      %v4525 = vpack.c.b16 %v4487, %v4486
      %v4526 = vpack.c.b16 %v4489, %v4488
      %v4527 = vpack.c.b16 %v4491, %v4490
      %v4528 = vpack.c.b16 %v4493, %v4492
      %v4529 = vpack.c.b16 %v4495, %v4494
      %v4530 = vpack.c.b16 %v4497, %v4496
      %v4531 = vpack.c.b16 %v4499, %v4498
      %4564 = vmatprep.subr.bf16.mxu0 0
      %4565 = vmatpush1.bf16.msra.mxu0 %v4500
      %4566 = vmatprep.subr.bf16.mxu0 0
      %4567 = vmatpush1.bf16.msra.mxu0 %v4501
      %4568 = vmatprep.subr.bf16.mxu0 0
      %4569 = vmatpush1.bf16.msra.mxu0 %v4502
      %4570 = vmatprep.subr.bf16.mxu0 0
      %4571 = vmatpush1.bf16.msra.mxu0 %v4503
      %4572 = vmatprep.subr.bf16.mxu0 0
      %4573 = vmatpush1.bf16.msra.mxu0 %v4504
      %4574 = vmatprep.subr.bf16.mxu0 0
      %4575 = vmatpush1.bf16.msra.mxu0 %v4505
      %4576 = vmatprep.subr.bf16.mxu0 0
      %4577 = vmatpush1.bf16.msra.mxu0 %v4506
      %4578 = vmatprep.subr.bf16.mxu0 0
      %4579 = vmatpush1.bf16.msra.mxu0 %v4507
      %4580 = vmatprep.subr.bf16.mxu0 0
      %4581 = vmatpush1.bf16.msra.mxu0 %v4508
      %4582 = vmatprep.subr.bf16.mxu0 0
      %4583 = vmatpush1.bf16.msra.mxu0 %v4509
      %4584 = vmatprep.subr.bf16.mxu0 0
      %4585 = vmatpush1.bf16.msra.mxu0 %v4510
      %4586 = vmatprep.subr.bf16.mxu0 0
      %4587 = vmatpush1.bf16.msra.mxu0 %v4511
      %4588 = vmatprep.subr.bf16.mxu0 0
      %4589 = vmatpush1.bf16.msra.mxu0 %v4512
      %4590 = vmatprep.subr.bf16.mxu0 0
      %4591 = vmatpush1.bf16.msra.mxu0 %v4513
      %4592 = vmatprep.subr.bf16.mxu0 0
      %4593 = vmatpush1.bf16.msra.mxu0 %v4514
      %4594 = vmatprep.subr.bf16.mxu0 0
      %4595 = vmatpush1.bf16.msra.mxu0 %v4515
      %4596 = vmatprep.mubr.bf16.mxu0 %v4298
      %4597 = vmatmul.mubr.bf16.gmra.mrb[0].mxu0 %v4297
      %v4598 = vpop.f32.mrb[0].mxu0
      %v4599 = vadd.f32 %v4370, %v4598
      %v4600 = vpop.f32.mrb[0].mxu0
      %v4601 = vpop.f32.mrb[0].mxu0
      %v4602 = vadd.f32 %v4370, %v4601
      %v4603 = vpop.f32.mrb[0].mxu0
      %4604 = vdwg.mxu0
      %4605 = vmatprep.subr.bf16.mxu0 0
      %4606 = vmatpush1.bf16.msra.mxu0 %v4516
      %4607 = vmatprep.subr.bf16.mxu0 0
      %4608 = vmatpush1.bf16.msra.mxu0 %v4517
      %4609 = vmatprep.subr.bf16.mxu0 0
      %4610 = vmatpush1.bf16.msra.mxu0 %v4518
      %4611 = vmatprep.subr.bf16.mxu0 0
      %4612 = vmatpush1.bf16.msra.mxu0 %v4519
      %4613 = vmatprep.subr.bf16.mxu0 0
      %4614 = vmatpush1.bf16.msra.mxu0 %v4520
      %4615 = vmatprep.subr.bf16.mxu0 0
      %4616 = vmatpush1.bf16.msra.mxu0 %v4521
      %4617 = vmatprep.subr.bf16.mxu0 0
      %4618 = vmatpush1.bf16.msra.mxu0 %v4522
      %4619 = vmatprep.subr.bf16.mxu0 0
      %4620 = vmatpush1.bf16.msra.mxu0 %v4523
      %4621 = vmatprep.subr.bf16.mxu0 0
      %4622 = vmatpush1.bf16.msra.mxu0 %v4524
      %4623 = vmatprep.subr.bf16.mxu0 0
      %4624 = vmatpush1.bf16.msra.mxu0 %v4525
      %4625 = vmatprep.subr.bf16.mxu0 0
      %4626 = vmatpush1.bf16.msra.mxu0 %v4526
      %4627 = vmatprep.subr.bf16.mxu0 0
      %4628 = vmatpush1.bf16.msra.mxu0 %v4527
      %4629 = vmatprep.subr.bf16.mxu0 0
      %4630 = vmatpush1.bf16.msra.mxu0 %v4528
      %4631 = vmatprep.subr.bf16.mxu0 0
      %4632 = vmatpush1.bf16.msra.mxu0 %v4529
      %4633 = vmatprep.subr.bf16.mxu0 0
      %4634 = vmatpush1.bf16.msra.mxu0 %v4530
      %4635 = vmatprep.subr.bf16.mxu0 0
      %4636 = vmatpush1.bf16.msra.mxu0 %v4531
      %4637 = vmatprep.mubr.bf16.mxu0 %v4300
      %4638 = vmatmul.mubr.bf16.gmra.mrb[0].mxu0 %v4299
      %v4639 = vpop.f32.mrb[0].mxu0
      %v4640 = vadd.f32 %v4599, %v4639
      %v4641 = vpop.f32.mrb[0].mxu0
      %v4642 = vpop.f32.mrb[0].mxu0
      %v4643 = vadd.f32 %v4602, %v4642
      %v4644 = vpop.f32.mrb[0].mxu0
      %4645 = vdwg.mxu0
      %vm4646 = vcmask 48128
      %4647 = vst.msk [vmem:[%s280] sm:$0xff] %vm4646, %v4640
      %vm4648 = vcmask 41984
      %4649 = vst.msk [vmem:[%s280 + $0x8] sm:$0x3] %vm4648, %v4643
      %p4650 = scmp.lt.s32.totalorder %s18, 1
      %s4651 = scalar_select %p4650, %s18, 1
      %s4652 = smul.addr %s4651, 2
      %s4653 = smul.addr %s4652, 8
      %s4654 = scalar_lea.vmem %s7, %s4653
      // Predicated region
      $region49: #{axial_model_25d_forward.1} parent=47 // pred_check
        %p4655 = pneg %p188
      $region50: #{axial_model_25d_forward.1} parent=47 // pred_check_branch
        %4657 = sbr.rel (%p4655) target = $region52
      $region51: #{axial_model_25d_forward.1} parent=47 // pred_region
        _
      $region52: #{axial_model_25d_forward.1} parent=47 // pred_fallthru
        _
    $region48: #{axial_model_25d_forward.1} parent=5 // pred_fallthru
      _
    %p4658 = scmp.le.s32.totalorder 2, %s13
    // Predicated region
    $region53: #{axial_model_25d_forward.1} parent=5 // pred_check
      %p4659 = pneg %p4658
    $region54: #{axial_model_25d_forward.1} parent=5 // pred_check_branch
      %4661 = sbr.rel (%p4659) target = $region56
    $region55: #{axial_model_25d_forward.1} parent=5 // pred_region
      %s4662 = ssub.s32 %s13, 2
      // Predicated region
      $region57: #{axial_model_25d_forward.1} parent=55 // pred_check
        %p4663 = pneg %p194
      $region58: #{axial_model_25d_forward.1} parent=55 // pred_check_branch
        %4665 = sbr.rel (%p4663) target = $region60
      $region59: #{axial_model_25d_forward.1} parent=55 // pred_region
        %p4666 = scmp.lt.s32.totalorder %s19, 1
        %s4667 = scalar_select %p4666, %s19, 1
        %s4668 = smul.addr %s4667, 2
        %s4669 = smul.addr %s4668, 8
        %s4670 = scalar_lea.vmem %s7, %s4669
      $region60: #{axial_model_25d_forward.1} parent=55 // pred_fallthru
        _
    $region56: #{axial_model_25d_forward.1} parent=5 // pred_fallthru
      _
  $region6: #{axial_model_25d_forward.1} parent=0 // loop_footer
    %s17 = sadd.s32 1, %s13
  $region7: #{axial_model_25d_forward.1} parent=0 // loop_footer_branch
    %12 = sbr.rel target = $region3
  $region8: #{axial_model_25d_forward.1} parent=0 // loop_exit
    _

</llo_original>
